<compile_context>
chip_gen: v6e
topology: v6e:2x2x1
jax: 0.10.0
libtpu: 0.0.40
codegen_flags: <defaults>
</compile_context>

<pallas_src>
import functools

import jax
import jax.numpy as jnp
from jax import lax
from jax.experimental import pallas as pl
from jax.experimental.pallas import tpu as pltpu


def _round_up(x, m):
  return (x + m - 1) // m * m


def _device_kind():
  try:
    return jax.devices()[0].device_kind.lower()
  except Exception:  # pragma: no cover
    return ""


def _pick_batch_tile(batch, seq_len, min_tile):
  """tb such that tb*L ~ MXU rows (256 on v6e/v7x, 128 on v5e); >=2 tiles if possible."""
  kind = _device_kind()
  target_rows = 128 if "v5" in kind else 256
  tb = max(min_tile, _round_up(max(1, target_rows // max(seq_len, 1)), min_tile))
  tb = min(tb, _round_up(batch, min_tile))
  # v7x has two TensorCores per chip; prefer >= 2 "parallel" grid tiles.
  while tb > min_tile and _round_up(batch, tb) // tb < 2:
    tb = _round_up(tb // 2, min_tile)
  return tb


def _listener_kernel(
    reps_ref, imgp_ref, mask_ref, sep_ref, hist_ref,
    pool_txt_ref, expand_txt_ref, lane_sel_ref, lane_selt_ref, pool_img_ref,
    w_e2h_ref, w_img_ref, w_mmt_ref, w_mmi_ref, w_a1_ref, w_a2_ref,
    w_sep_ref, w_hist_ref, bias_ref,
    out_ref,
    *, hidden, att_dim, n_img):
  f32 = jnp.float32
  H, A, NI = hidden, att_dim, n_img
  cdt = w_e2h_ref.dtype                       # MXU operand dtype (bf16 or f32)
  fast = cdt != jnp.float32                   # approx EUP recip only in bf16 mode
  relu = lambda x: jnp.maximum(x, 0.0)
  # MXU operands in `cdt`, accumulation in f32.
  dot = lambda a, b: jnp.dot(a.astype(cdt), b.astype(cdt),
                             preferred_element_type=f32)

  # Packed f32 biases: rows 0..3 -> (1,H), row 4 -> b_a1 (1,A), row 5 -> b_a2.
  b_e2h = bias_ref[0:1, 0:H]
  b_img = bias_ref[1:2, 0:H]
  b_mm = bias_ref[2:3, 0:H]
  b_sep = bias_ref[3:4, 0:H]
  b_a1 = bias_ref[4:5, 0:A]
  b_a2 = bias_ref[5:6, 0:1]

  pool_txt = pool_txt_ref[...]                # (tb, tb*L)  block-diag 0/1
  pool_img = pool_img_ref[...]                # (tb, tb*NI) block-diag 0/1

  # ---- text branch: relu(lin_emb2hid(reps)), relu(lin_img(img_pred)) --------
  txt = relu(dot(reps_ref[...], w_e2h_ref[...]) + b_e2h)          # (tb*L, H)
  img = relu(dot(imgp_ref[...], w_img_ref[...]) + b_img)          # (tb, H)
  # lin_mm(cat(txt, repeated_img)) == txt @ W_top + expand(img @ W_bot)
  mm = relu(dot(txt, w_mmt_ref[...])
            + dot(expand_txt_ref[...], dot(img, w_mmi_ref[...]))
            + b_mm)                                               # (tb*L, H)

  # ---- attention: att_linear_2(tanh(att_linear_1(mm))), masked softmax ------
  att_h = jnp.tanh(dot(mm, w_a1_ref[...]) + b_a1)                 # (tb*L, A)
  s_col = dot(att_h, w_a2_ref[...]) + b_a2                        # (tb*L, 1)
  # Relayout scores to lane-dense (tb, L) via a selection matmul.
  scores = dot(pool_txt, lane_sel_ref[...] * s_col)               # (tb, L)
  # NOTE: a fully-masked row gives all -inf -> NaN, matching the reference.
  scores = jnp.where(mask_ref[...] > 0.5, -jnp.inf, scores)
  m = jnp.max(scores, axis=-1, keepdims=True)
  e = jnp.exp(scores - m)
  denom = jnp.sum(e, axis=-1, keepdims=True)
  if fast:
    att_w = e * pl.reciprocal(denom, approx=True)                 # EUP
  else:
    att_w = e / denom                                             # exact f32 parity
  # attended[b,:] = sum_l att_w[b,l] * mm[b*L+l,:] as ONE block-diag matmul.
  att_mat = pool_txt * dot(att_w, lane_selt_ref[...])             # (tb, tb*L)
  attended = dot(att_mat, mm)                                     # (tb, H)

  # ---- separate images + history (gate folded into w_hist's extra row) ------
  sep = dot(sep_ref[...], w_sep_ref[...]) + b_sep                 # (tb*NI, H)
  hst = relu(dot(hist_ref[...], w_hist_ref[...]))                 # includes gate*b_hist
  sep = relu(sep + hst)
  ssq = jnp.sum(sep * sep, axis=-1, keepdims=True)
  sep_n = sep * lax.rsqrt(jnp.maximum(ssq, 1e-24))                # F.normalize, eps=1e-12
  sep_mean = dot(pool_img, sep_n) * (1.0 / NI)                    # mean over NI images

  out_ref[:, 0:H] = sep_mean
  out_ref[:, H:2 * H] = attended


def listener_forward(params, reps, img_pred, masks, separate_images,
                     prev_hist, prev_hist_len, labels=None,
                     batch_tile=None, compute_dtype=jnp.bfloat16,
                     single_buffer_weights=True):
  f32 = jnp.float32
  cdt = jnp.dtype(compute_dtype)
  B, L, E = reps.shape
  NIMG, D = separate_images.shape[1], separate_images.shape[2]
  MH = prev_hist.shape[2]
  H = params["w_e2h"].shape[1]
  A = params["w_a1"].shape[1]

  # Sub-32-bit dtypes pack 2x along sublanes -> keep tile rows 16-aligned.
  min_tile = 16 if cdt.itemsize < 4 else 8
  if batch_tile is None:
    tb = _pick_batch_tile(B, L, min_tile)
  else:
    tb = max(min_tile, _round_up(batch_tile, min_tile))
  b_pad = _round_up(B, tb)
  n_tiles = b_pad // tb
  TL, TI = tb * L, tb * NIMG

  # Eval mode: dropout = identity.  Pre-reduce the history over its padded MH
  # axis (explicitly zero-masking padded slots) so the dominant DMA shrinks
  # MH-fold; fold the "history exists" gate into an extra column of hist and an
  # extra row (= b_hist) of w_hist.
  hlen = prev_hist_len.astype(f32)
  valid = (jnp.arange(MH)[None, None, :, None]
           < prev_hist_len[:, :, None, None]).astype(f32)
  hist_avg = (jnp.sum(prev_hist.astype(f32) * valid, axis=2)
              / jnp.maximum(hlen, 1.0)[..., None])                # (B, NIMG, E)
  gate = (hlen > 0.0).astype(f32)[..., None]                      # (B, NIMG, 1)
  hist_ext = jnp.concatenate([hist_avg, gate], axis=-1).astype(cdt)

  repsf = reps.astype(cdt)
  imgp = img_pred.astype(cdt)
  maskf = masks.astype(f32)                                       # 1.0 = pad token
  sep_im = separate_images.astype(cdt)
  pad = b_pad - B
  if pad:
    pad0 = lambda x: jnp.pad(x, ((0, pad),) + ((0, 0),) * (x.ndim - 1))
    repsf, imgp, maskf, sep_im, hist_ext = map(
        pad0, (repsf, imgp, maskf, sep_im, hist_ext))

  reps_flat = repsf.reshape(b_pad * L, E)
  sep_flat = sep_im.reshape(b_pad * NIMG, D)
  hist_flat = hist_ext.reshape(b_pad * NIMG, E + 1)

  # Grid-invariant selection matrices, built ONCE on the host (hoisted out of
  # the kernel body).  Entries are exact in bf16 (0/1).
  rows_l = jnp.arange(TL)
  rows_i = jnp.arange(TI)
  bids = jnp.arange(tb)
  pool_txt = (rows_l[None, :] // L == bids[:, None]).astype(cdt)      # (tb, TL)
  expand_txt = pool_txt.T                                             # (TL, tb)
  lane_sel = (rows_l[:, None] % L == jnp.arange(L)[None, :]).astype(cdt)  # (TL, L)
  lane_sel_t = lane_sel.T                                             # (L, TL)
  pool_img = (rows_i[None, :] // NIMG == bids[:, None]).astype(cdt)   # (tb, TI)

  # Weights pre-transposed to (in, out); lin_mm split; gate row appended to
  # lin_emb2HIST.  MXU operands in `cdt`.
  w_e2h = params["w_e2h"].astype(cdt)
  w_img = params["w_img"].astype(cdt)
  w_mm_txt = params["w_mm"][:H].astype(cdt)
  w_mm_img = params["w_mm"][H:].astype(cdt)
  w_a1 = params["w_a1"].astype(cdt)
  w_a2 = params["w_a2"].astype(cdt)
  w_sep = params["w_sep"].astype(cdt)
  w_hist_ext = jnp.concatenate(
      [params["w_hist"], params["b_hist"].reshape(1, H)], axis=0).astype(cdt)

  wpack = max(H, A)
  bias_pack = jnp.zeros((6, wpack), f32)
  bias_pack = bias_pack.at[0, :H].set(params["b_e2h"].reshape(-1))
  bias_pack = bias_pack.at[1, :H].set(params["b_img"].reshape(-1))
  bias_pack = bias_pack.at[2, :H].set(params["b_mm"].reshape(-1))
  bias_pack = bias_pack.at[3, :H].set(params["b_sep"].reshape(-1))
  bias_pack = bias_pack.at[4, :A].set(params["b_a1"].reshape(-1))
  bias_pack = bias_pack.at[5, 0].set(params["b_a2"].reshape(-1)[0])

  kernel = functools.partial(_listener_kernel, hidden=H, att_dim=A, n_img=NIMG)

  csz = cdt.itemsize
  # Grid-invariant operand bytes are counted ONCE (constant index maps are
  # DMA'd a single time), not once per tile.
  w_bytes = (csz * (E * H + D * H + 2 * H * H + H * A + A + D * H + (E + 1) * H
                    + 2 * tb * TL + 2 * TL * L + tb * TI) + 4 * 6 * wpack)
  in_bytes = (csz * (b_pad * L * E + b_pad * D + b_pad * NIMG * D
                     + b_pad * NIMG * (E + 1)) + 4 * b_pad * L)
  out_bytes = 4 * b_pad * 2 * H
  flops = (2 * b_pad * (L * E * H + D * H + 2 * L * H * H + L * H * A + L * A
                        + NIMG * (D * H + (E + 1) * H))
           + 2 * n_tiles * (TL * tb * H + 2 * tb * TL * L + tb * TL * H
                            + tb * TI * H))
  cost = pl.CostEstimate(flops=int(flops),
                         transcendentals=int(b_pad * (L * A + L + NIMG + 1)),
                         bytes_accessed=int(in_bytes + w_bytes + out_bytes))

  kind = _device_kind()
  vmem_cap = (56 << 20) if "v7" in kind else (100 << 20)
  in_tile_bytes = csz * (TL * E + tb * D + TI * D + TI * (E + 1)) + 4 * tb * L
  out_tile_bytes = 4 * tb * 2 * H
  act_bytes = 4 * (TL * (2 * H + A + tb + 4) + tb * (TL + 6 * L + 4 * H)
                   + TI * (2 * H + 2))

  def dspec(r, c):                     # per-batch-tile block of a flattened array
    return pl.BlockSpec((r, c), lambda i: (i, 0))

  def _call(weight_mode):
    if weight_mode is None:
      wspec = lambda shape: pl.BlockSpec(shape, lambda i: (0, 0))
      w_buf = 2
    else:
      wspec = lambda shape: pl.BlockSpec(shape, lambda i: (0, 0),
                                         pipeline_mode=weight_mode)
      w_buf = 1
    vmem_need = w_buf * w_bytes + 2 * (in_tile_bytes + out_tile_bytes) + act_bytes
    vmem_limit = int(min(vmem_cap,
                         max(32 << 20, int(vmem_need * 1.5) + (2 << 20))))
    return pl.pallas_call(
        kernel,
        out_shape=jax.ShapeDtypeStruct((b_pad, 2 * H), f32),
        grid_spec=pltpu.PrefetchScalarGridSpec(
            num_scalar_prefetch=0,
            grid=(n_tiles,),
            in_specs=[
                dspec(TL, E),            # representations (flattened B*L)
                dspec(tb, D),            # img_pred
                dspec(tb, L),            # masks (lane-dense, 1.0 = pad)
                dspec(TI, D),            # separate_images (flattened B*NIMG)
                dspec(TI, E + 1),        # pre-averaged history + gate column
                wspec((tb, TL)),         # pool_txt
                wspec((TL, tb)),         # expand_txt
                wspec((TL, L)),          # lane_sel
                wspec((L, TL)),          # lane_sel^T
                wspec((tb, TI)),         # pool_img
                wspec((E, H)), wspec((D, H)),        # lin_emb2hid, lin_img
                wspec((H, H)), wspec((H, H)),        # lin_mm (split)
                wspec((H, A)), wspec((A, 1)),        # att_linear_1, att_linear_2
                wspec((D, H)), wspec((E + 1, H)),    # linear_separate, lin_emb2HIST+gate
                wspec((6, wpack)),                   # packed f32 biases
            ],
            out_specs=dspec(tb, 2 * H),
        ),
        compiler_params=pltpu.CompilerParams(
            dimension_semantics=("parallel",),
            vmem_limit_bytes=vmem_limit),
        cost_estimate=cost,
    )(reps_flat, imgp, maskf, sep_flat, hist_flat,
      pool_txt, expand_txt, lane_sel, lane_sel_t, pool_img,
      w_e2h, w_img, w_mm_txt, w_mm_img, w_a1, w_a2, w_sep, w_hist_ext,
      bias_pack)

  feats = None
  if single_buffer_weights and hasattr(pl, "Buffered"):
    try:
      feats = jax.block_until_ready(_call(pl.Buffered(1)))
    except Exception:
      feats = None                   # fall back to default double buffering
  if feats is None:
    feats = _call(None)

  feats = feats[:B]                  # (B, 2H) = [sep_mean | attended]

  # Tiny output head in plain JAX so the exact erf-based nn.GELU() is matched.
  h = jax.nn.gelu(feats @ params["w_f1"] + params["b_f1"], approximate=False)
  logits = h @ params["w_f2"] + params["b_f2"]

  loss = None
  if labels is not None:
    logp = jax.nn.log_softmax(logits, axis=-1)
    loss = -jnp.mean(jnp.take_along_axis(logp, labels.reshape(-1, 1), axis=1))
  return loss, logits


def reference_forward(params, reps, img_pred, masks, separate_images,
                      prev_hist, prev_hist_len, labels):
  """Plain-JAX mirror of the PyTorch forward (eval mode) for validation."""
  relu = lambda x: jnp.maximum(x, 0.0)
  input_reps = relu(reps @ params["w_e2h"] + params["b_e2h"])
  proj_img = relu(img_pred @ params["w_img"] + params["b_img"])
  rep_img = jnp.broadcast_to(proj_img[:, None, :], input_reps.shape)
  mm = relu(jnp.concatenate([input_reps, rep_img], axis=2) @ params["w_mm"]
            + params["b_mm"])
  scores = jnp.tanh(mm @ params["w_a1"] + params["b_a1"]) @ params["w_a2"] \
      + params["b_a2"]
  scores = jnp.where(masks[:, :, None] > 0.5, -jnp.inf, scores)
  att = jax.nn.softmax(scores, axis=1)
  attended = jnp.sum(mm * att, axis=1)

  sep = separate_images @ params["w_sep"] + params["b_sep"]
  hlen = prev_hist_len.astype(jnp.float32)[..., None]
  havg = jnp.sum(prev_hist, axis=2) / jnp.maximum(hlen, 1.0)
  hproj = relu(havg @ params["w_hist"] + params["b_hist"])
  sep = sep + jnp.where(hlen > 0, hproj, 0.0)
  sep = relu(sep)
  sep = sep / jnp.maximum(
      jnp.sqrt(jnp.sum(sep * sep, axis=2, keepdims=True)), 1e-12)
  sep = jnp.mean(sep, axis=1)

  feats = jnp.concatenate([sep, attended], axis=1)
  h = jax.nn.gelu(feats @ params["w_f1"] + params["b_f1"], approximate=False)
  logits = h @ params["w_f2"] + params["b_f2"]
  logp = jax.nn.log_softmax(logits, axis=-1)
  loss = -jnp.mean(jnp.take_along_axis(logp, labels.reshape(-1, 1), axis=1))
  return loss, logits


if __name__ == "__main__":
  # Small synthetic shapes consistent with the module.
  B, L, E, H, D, A, NIMG, MH = 2, 8, 32, 32, 32, 16, 6, 4

  key = jax.random.PRNGKey(0)
  keys = jax.random.split(key, 20)
  u = lambda k, shape: jax.random.uniform(k, shape, jnp.float32, -0.1, 0.1)

  # Weights ~ U(-0.1, 0.1) as in init_weights(); stored (in, out).  Biases are
  # given small random values (instead of the module's zeros) to exercise the
  # bias-packing / gate-folding paths — forward semantics must hold regardless.
  params = dict(
      w_e2h=u(keys[0], (E, H)),    b_e2h=u(keys[9], (1, H)),
      w_img=u(keys[1], (D, H)),    b_img=u(keys[10], (1, H)),
      w_mm=u(keys[2], (2 * H, H)), b_mm=u(keys[11], (1, H)),
      w_a1=u(keys[3], (H, A)),     b_a1=u(keys[12], (1, A)),
      w_a2=u(keys[4], (A, 1)),     b_a2=u(keys[13], (1, 1)),
      w_sep=u(keys[5], (D, H)),    b_sep=u(keys[14], (1, H)),
      w_hist=u(keys[6], (E, H)),   b_hist=u(keys[15], (1, H)),
      w_f1=u(keys[7], (2 * H, H)), b_f1=jnp.zeros((H,), jnp.float32),
      w_f2=u(keys[8], (H, 2)),     b_f2=jnp.zeros((2,), jnp.float32),
  )

  # Inputs (representations path: BERT reps supplied directly).
  reps = jax.random.normal(keys[16], (B, L, E), jnp.float32)
  img_pred = jax.random.normal(keys[17], (B, D), jnp.float32)
  separate_images = jax.random.normal(keys[18], (B, NIMG, D), jnp.float32)
  masks = jnp.zeros((B, L), jnp.float32).at[:, L - 2:].set(1.0)   # 1.0 = pad

  # Zero-padded history representations (B, NIMG, MH, E) + per-slot lengths.
  prev_hist_len = jnp.array([[2, 0, 1, 3, 0, 4],
                             [0, 1, 0, 2, 4, 0]], jnp.int32)
  raw_hist = jax.random.normal(keys[19], (B, NIMG, MH, E), jnp.float32)
  step_ids = jnp.arange(MH)[None, None, :, None]
  prev_hist = jnp.where(step_ids < prev_hist_len[:, :, None, None], raw_hist, 0.0)

  labels = jnp.array([0, 1], jnp.int32)

  # bf16 MXU operands, f32 accumulation (production default).
  loss_bf, logits_bf = listener_forward(
      params, reps, img_pred, masks, separate_images, prev_hist, prev_hist_len,
      labels, compute_dtype=jnp.bfloat16)
  # f32 mode: exact parity with the reference.
  loss_f32, logits_f32 = listener_forward(
      params, reps, img_pred, masks, separate_images, prev_hist, prev_hist_len,
      labels, compute_dtype=jnp.float32)
  jax.block_until_ready((loss_bf, logits_bf, loss_f32, logits_f32))

  ref_loss, ref_logits = reference_forward(params, reps, img_pred, masks,
                                           separate_images, prev_hist,
                                           prev_hist_len, labels)
  assert jnp.allclose(logits_f32, ref_logits, atol=1e-4), (logits_f32, ref_logits)
  assert jnp.allclose(loss_f32, ref_loss, atol=1e-4), (loss_f32, ref_loss)
  assert jnp.allclose(logits_bf, ref_logits, atol=5e-2), (logits_bf, ref_logits)
  assert jnp.allclose(loss_bf, ref_loss, atol=5e-2), (loss_bf, ref_loss)
  print("KERNEL_OK")
</pallas_src>

<mosaic_0001>
module attributes {stable_mosaic.version = 11 : i64} {
  func.func @_listener_kernel(%arg0: i32, %arg1: memref<128x32xbf16, #tpu.memory_space<vmem>>, %arg2: memref<16x32xbf16, #tpu.memory_space<vmem>>, %arg3: memref<16x8xf32, #tpu.memory_space<vmem>>, %arg4: memref<96x32xbf16, #tpu.memory_space<vmem>>, %arg5: memref<96x33xbf16, #tpu.memory_space<vmem>>, %arg6: memref<16x128xbf16, #tpu.memory_space<vmem>>, %arg7: memref<128x16xbf16, #tpu.memory_space<vmem>>, %arg8: memref<128x8xbf16, #tpu.memory_space<vmem>>, %arg9: memref<8x128xbf16, #tpu.memory_space<vmem>>, %arg10: memref<16x96xbf16, #tpu.memory_space<vmem>>, %arg11: memref<32x32xbf16, #tpu.memory_space<vmem>>, %arg12: memref<32x32xbf16, #tpu.memory_space<vmem>>, %arg13: memref<32x32xbf16, #tpu.memory_space<vmem>>, %arg14: memref<32x32xbf16, #tpu.memory_space<vmem>>, %arg15: memref<32x16xbf16, #tpu.memory_space<vmem>>, %arg16: memref<16x1xbf16, #tpu.memory_space<vmem>>, %arg17: memref<32x32xbf16, #tpu.memory_space<vmem>>, %arg18: memref<33x32xbf16, #tpu.memory_space<vmem>>, %arg19: memref<6x32xf32, #tpu.memory_space<vmem>>, %arg20: memref<16x64xf32, #tpu.memory_space<vmem>>) attributes {dimension_semantics = [#tpu.dimension_semantics<parallel>], iteration_bounds = array<i64: 1>, scalar_prefetch = 0 : i64, scratch_operands = 0 : i64, tpu.core_type = #tpu.core_type<tc>, window_params = [{transform_indices = @transform_0, window_bounds = array<i64: 128, 32>}, {transform_indices = @transform_1, window_bounds = array<i64: 16, 32>}, {transform_indices = @transform_2, window_bounds = array<i64: 16, 8>}, {transform_indices = @transform_3, window_bounds = array<i64: 96, 32>}, {transform_indices = @transform_4, window_bounds = array<i64: 96, 33>}, {pipeline_mode = #tpu.pipeline_mode<synchronous>, transform_indices = @transform_5, window_bounds = array<i64: 16, 128>}, {pipeline_mode = #tpu.pipeline_mode<synchronous>, transform_indices = @transform_6, window_bounds = array<i64: 128, 16>}, {pipeline_mode = #tpu.pipeline_mode<synchronous>, transform_indices = @transform_7, window_bounds = array<i64: 128, 8>}, {pipeline_mode = #tpu.pipeline_mode<synchronous>, transform_indices = @transform_8, window_bounds = array<i64: 8, 128>}, {pipeline_mode = #tpu.pipeline_mode<synchronous>, transform_indices = @transform_9, window_bounds = array<i64: 16, 96>}, {pipeline_mode = #tpu.pipeline_mode<synchronous>, transform_indices = @transform_10, window_bounds = array<i64: 32, 32>}, {pipeline_mode = #tpu.pipeline_mode<synchronous>, transform_indices = @transform_11, window_bounds = array<i64: 32, 32>}, {pipeline_mode = #tpu.pipeline_mode<synchronous>, transform_indices = @transform_12, window_bounds = array<i64: 32, 32>}, {pipeline_mode = #tpu.pipeline_mode<synchronous>, transform_indices = @transform_13, window_bounds = array<i64: 32, 32>}, {pipeline_mode = #tpu.pipeline_mode<synchronous>, transform_indices = @transform_14, window_bounds = array<i64: 32, 16>}, {pipeline_mode = #tpu.pipeline_mode<synchronous>, transform_indices = @transform_15, window_bounds = array<i64: 16, 1>}, {pipeline_mode = #tpu.pipeline_mode<synchronous>, transform_indices = @transform_16, window_bounds = array<i64: 32, 32>}, {pipeline_mode = #tpu.pipeline_mode<synchronous>, transform_indices = @transform_17, window_bounds = array<i64: 33, 32>}, {pipeline_mode = #tpu.pipeline_mode<synchronous>, transform_indices = @transform_18, window_bounds = array<i64: 6, 32>}, {transform_indices = @transform_19, window_bounds = array<i64: 16, 64>}]} {
    %c0 = arith.constant 0 : index
    %c0_0 = arith.constant 0 : index
    %0 = vector.load %arg19[%c0, %c0_0] : memref<6x32xf32, #tpu.memory_space<vmem>>, vector<1x32xf32>
    %c1 = arith.constant 1 : index
    %c0_1 = arith.constant 0 : index
    %1 = vector.load %arg19[%c1, %c0_1] : memref<6x32xf32, #tpu.memory_space<vmem>>, vector<1x32xf32>
    %c2 = arith.constant 2 : index
    %c0_2 = arith.constant 0 : index
    %2 = vector.load %arg19[%c2, %c0_2] : memref<6x32xf32, #tpu.memory_space<vmem>>, vector<1x32xf32>
    %c3 = arith.constant 3 : index
    %c0_3 = arith.constant 0 : index
    %3 = vector.load %arg19[%c3, %c0_3] : memref<6x32xf32, #tpu.memory_space<vmem>>, vector<1x32xf32>
    %c4 = arith.constant 4 : index
    %c0_4 = arith.constant 0 : index
    %4 = vector.load %arg19[%c4, %c0_4] : memref<6x32xf32, #tpu.memory_space<vmem>>, vector<1x16xf32>
    %c5 = arith.constant 5 : index
    %c0_5 = arith.constant 0 : index
    %5 = vector.load %arg19[%c5, %c0_5] : memref<6x32xf32, #tpu.memory_space<vmem>>, vector<1x1xf32>
    %c0_6 = arith.constant 0 : index
    %c0_7 = arith.constant 0 : index
    %6 = vector.load %arg6[%c0_6, %c0_7] : memref<16x128xbf16, #tpu.memory_space<vmem>>, vector<16x128xbf16>
    %c0_8 = arith.constant 0 : index
    %c0_9 = arith.constant 0 : index
    %7 = vector.load %arg10[%c0_8, %c0_9] : memref<16x96xbf16, #tpu.memory_space<vmem>>, vector<16x96xbf16>
    %c0_10 = arith.constant 0 : index
    %c0_11 = arith.constant 0 : index
    %8 = vector.load %arg1[%c0_10, %c0_11] : memref<128x32xbf16, #tpu.memory_space<vmem>>, vector<128x32xbf16>
    %c0_12 = arith.constant 0 : index
    %c0_13 = arith.constant 0 : index
    %9 = vector.load %arg11[%c0_12, %c0_13] : memref<32x32xbf16, #tpu.memory_space<vmem>>, vector<32x32xbf16>
    %cst = arith.constant dense<0.000000e+00> : vector<128x32xf32>
    %10 = tpu.matmul %8, %9, %cst {dimension_numbers = #tpu.dot_dimension_numbers<[1], [0], [0], [1], [0, 0, 1, 1], [], []>} : vector<128x32xbf16>, vector<32x32xbf16>, vector<128x32xf32> -> vector<128x32xf32>
    %11 = vector.broadcast %0 : vector<1x32xf32> to vector<128x32xf32>
    %12 = arith.addf %10, %11 : vector<128x32xf32>
    %cst_14 = arith.constant 0.000000e+00 : f32
    %13 = vector.broadcast %cst_14 : f32 to vector<128x32xf32>
    %14 = arith.maximumf %12, %13 : vector<128x32xf32>
    %c0_15 = arith.constant 0 : index
    %c0_16 = arith.constant 0 : index
    %15 = vector.load %arg2[%c0_15, %c0_16] : memref<16x32xbf16, #tpu.memory_space<vmem>>, vector<16x32xbf16>
    %c0_17 = arith.constant 0 : index
    %c0_18 = arith.constant 0 : index
    %16 = vector.load %arg12[%c0_17, %c0_18] : memref<32x32xbf16, #tpu.memory_space<vmem>>, vector<32x32xbf16>
    %cst_19 = arith.constant dense<0.000000e+00> : vector<16x32xf32>
    %17 = tpu.matmul %15, %16, %cst_19 {dimension_numbers = #tpu.dot_dimension_numbers<[1], [0], [0], [1], [0, 0, 1, 1], [], []>} : vector<16x32xbf16>, vector<32x32xbf16>, vector<16x32xf32> -> vector<16x32xf32>
    %18 = vector.broadcast %1 : vector<1x32xf32> to vector<16x32xf32>
    %19 = arith.addf %17, %18 : vector<16x32xf32>
    %cst_20 = arith.constant 0.000000e+00 : f32
    %20 = vector.broadcast %cst_20 : f32 to vector<16x32xf32>
    %21 = arith.maximumf %19, %20 : vector<16x32xf32>
    %c0_21 = arith.constant 0 : index
    %c0_22 = arith.constant 0 : index
    %22 = vector.load %arg13[%c0_21, %c0_22] : memref<32x32xbf16, #tpu.memory_space<vmem>>, vector<32x32xbf16>
    %23 = arith.truncf %14 : vector<128x32xf32> to vector<128x32xbf16>
    %cst_23 = arith.constant dense<0.000000e+00> : vector<128x32xf32>
    %24 = tpu.matmul %23, %22, %cst_23 {dimension_numbers = #tpu.dot_dimension_numbers<[1], [0], [0], [1], [0, 0, 1, 1], [], []>} : vector<128x32xbf16>, vector<32x32xbf16>, vector<128x32xf32> -> vector<128x32xf32>
    %c0_24 = arith.constant 0 : index
    %c0_25 = arith.constant 0 : index
    %25 = vector.load %arg7[%c0_24, %c0_25] : memref<128x16xbf16, #tpu.memory_space<vmem>>, vector<128x16xbf16>
    %c0_26 = arith.constant 0 : index
    %c0_27 = arith.constant 0 : index
    %26 = vector.load %arg14[%c0_26, %c0_27] : memref<32x32xbf16, #tpu.memory_space<vmem>>, vector<32x32xbf16>
    %27 = arith.truncf %21 : vector<16x32xf32> to vector<16x32xbf16>
    %cst_28 = arith.constant dense<0.000000e+00> : vector<16x32xf32>
    %28 = tpu.matmul %27, %26, %cst_28 {dimension_numbers = #tpu.dot_dimension_numbers<[1], [0], [0], [1], [0, 0, 1, 1], [], []>} : vector<16x32xbf16>, vector<32x32xbf16>, vector<16x32xf32> -> vector<16x32xf32>
    %29 = arith.truncf %28 : vector<16x32xf32> to vector<16x32xbf16>
    %cst_29 = arith.constant dense<0.000000e+00> : vector<128x32xf32>
    %30 = tpu.matmul %25, %29, %cst_29 {dimension_numbers = #tpu.dot_dimension_numbers<[1], [0], [0], [1], [0, 0, 1, 1], [], []>} : vector<128x16xbf16>, vector<16x32xbf16>, vector<128x32xf32> -> vector<128x32xf32>
    %31 = arith.addf %24, %30 : vector<128x32xf32>
    %32 = vector.broadcast %2 : vector<1x32xf32> to vector<128x32xf32>
    %33 = arith.addf %31, %32 : vector<128x32xf32>
    %cst_30 = arith.constant 0.000000e+00 : f32
    %34 = vector.broadcast %cst_30 : f32 to vector<128x32xf32>
    %35 = arith.maximumf %33, %34 : vector<128x32xf32>
    %c0_31 = arith.constant 0 : index
    %c0_32 = arith.constant 0 : index
    %36 = vector.load %arg15[%c0_31, %c0_32] : memref<32x16xbf16, #tpu.memory_space<vmem>>, vector<32x16xbf16>
    %37 = arith.truncf %35 : vector<128x32xf32> to vector<128x32xbf16>
    %cst_33 = arith.constant dense<0.000000e+00> : vector<128x16xf32>
    %38 = tpu.matmul %37, %36, %cst_33 {dimension_numbers = #tpu.dot_dimension_numbers<[1], [0], [0], [1], [0, 0, 1, 1], [], []>} : vector<128x32xbf16>, vector<32x16xbf16>, vector<128x16xf32> -> vector<128x16xf32>
    %39 = vector.broadcast %4 : vector<1x16xf32> to vector<128x16xf32>
    %40 = arith.addf %38, %39 : vector<128x16xf32>
    %41 = math.tanh %40 : vector<128x16xf32>
    %c0_34 = arith.constant 0 : index
    %c0_35 = arith.constant 0 : index
    %42 = vector.load %arg16[%c0_34, %c0_35] : memref<16x1xbf16, #tpu.memory_space<vmem>>, vector<16x1xbf16>
    %43 = arith.truncf %41 : vector<128x16xf32> to vector<128x16xbf16>
    %cst_36 = arith.constant dense<0.000000e+00> : vector<128x1xf32>
    %44 = tpu.matmul %43, %42, %cst_36 {dimension_numbers = #tpu.dot_dimension_numbers<[1], [0], [0], [1], [0, 0, 1, 1], [], []>} : vector<128x16xbf16>, vector<16x1xbf16>, vector<128x1xf32> -> vector<128x1xf32>
    %45 = vector.broadcast %5 : vector<1x1xf32> to vector<128x1xf32>
    %46 = arith.addf %44, %45 : vector<128x1xf32>
    %c0_37 = arith.constant 0 : index
    %c0_38 = arith.constant 0 : index
    %47 = vector.load %arg8[%c0_37, %c0_38] : memref<128x8xbf16, #tpu.memory_space<vmem>>, vector<128x8xbf16>
    %48 = arith.extf %47 : vector<128x8xbf16> to vector<128x8xf32>
    %49 = vector.broadcast %46 : vector<128x1xf32> to vector<128x8xf32>
    %50 = arith.mulf %48, %49 : vector<128x8xf32>
    %51 = arith.truncf %50 : vector<128x8xf32> to vector<128x8xbf16>
    %cst_39 = arith.constant dense<0.000000e+00> : vector<16x8xf32>
    %52 = tpu.matmul %6, %51, %cst_39 {dimension_numbers = #tpu.dot_dimension_numbers<[1], [0], [0], [1], [0, 0, 1, 1], [], []>} : vector<16x128xbf16>, vector<128x8xbf16>, vector<16x8xf32> -> vector<16x8xf32>
    %c0_40 = arith.constant 0 : index
    %c0_41 = arith.constant 0 : index
    %53 = vector.load %arg3[%c0_40, %c0_41] : memref<16x8xf32, #tpu.memory_space<vmem>>, vector<16x8xf32>
    %cst_42 = arith.constant 5.000000e-01 : f32
    %54 = vector.broadcast %cst_42 : f32 to vector<16x8xf32>
    %55 = arith.cmpf ogt, %53, %54 : vector<16x8xf32>
    %cst_43 = arith.constant 0xFF800000 : f32
    %56 = vector.broadcast %cst_43 : f32 to vector<16x8xf32>
    %57 = arith.select %55, %56, %52 : vector<16x8xi1>, vector<16x8xf32>
    %cst_44 = arith.constant dense<0xFF800000> : vector<16xf32>
    %58 = vector.multi_reduction <maximumf>, %57, %cst_44 [1] : vector<16x8xf32> to vector<16xf32>
    %59 = vector.shape_cast %58 : vector<16xf32> to vector<16x1xf32>
    %60 = vector.broadcast %59 : vector<16x1xf32> to vector<16x8xf32>
    %61 = arith.subf %57, %60 : vector<16x8xf32>
    %62 = math.exp %61 : vector<16x8xf32>
    %cst_45 = arith.constant dense<0.000000e+00> : vector<16xf32>
    %63 = vector.multi_reduction <add>, %62, %cst_45 [1] : vector<16x8xf32> to vector<16xf32>
    %64 = vector.shape_cast %63 : vector<16xf32> to vector<16x1xf32>
    %65 = tpu.reciprocal %64 {approx = true} : vector<16x1xf32> -> vector<16x1xf32>
    %66 = vector.broadcast %65 : vector<16x1xf32> to vector<16x8xf32>
    %67 = arith.mulf %62, %66 : vector<16x8xf32>
    %c0_46 = arith.constant 0 : index
    %c0_47 = arith.constant 0 : index
    %68 = vector.load %arg9[%c0_46, %c0_47] : memref<8x128xbf16, #tpu.memory_space<vmem>>, vector<8x128xbf16>
    %69 = arith.truncf %67 : vector<16x8xf32> to vector<16x8xbf16>
    %cst_48 = arith.constant dense<0.000000e+00> : vector<16x128xf32>
    %70 = tpu.matmul %69, %68, %cst_48 {dimension_numbers = #tpu.dot_dimension_numbers<[1], [0], [0], [1], [0, 0, 1, 1], [], []>} : vector<16x8xbf16>, vector<8x128xbf16>, vector<16x128xf32> -> vector<16x128xf32>
    %71 = arith.extf %6 : vector<16x128xbf16> to vector<16x128xf32>
    %72 = arith.mulf %71, %70 : vector<16x128xf32>
    %73 = arith.truncf %72 : vector<16x128xf32> to vector<16x128xbf16>
    %74 = arith.truncf %35 : vector<128x32xf32> to vector<128x32xbf16>
    %cst_49 = arith.constant dense<0.000000e+00> : vector<16x32xf32>
    %75 = tpu.matmul %73, %74, %cst_49 {dimension_numbers = #tpu.dot_dimension_numbers<[1], [0], [0], [1], [0, 0, 1, 1], [], []>} : vector<16x128xbf16>, vector<128x32xbf16>, vector<16x32xf32> -> vector<16x32xf32>
    %c0_50 = arith.constant 0 : index
    %c0_51 = arith.constant 0 : index
    %76 = vector.load %arg4[%c0_50, %c0_51] : memref<96x32xbf16, #tpu.memory_space<vmem>>, vector<96x32xbf16>
    %c0_52 = arith.constant 0 : index
    %c0_53 = arith.constant 0 : index
    %77 = vector.load %arg17[%c0_52, %c0_53] : memref<32x32xbf16, #tpu.memory_space<vmem>>, vector<32x32xbf16>
    %cst_54 = arith.constant dense<0.000000e+00> : vector<96x32xf32>
    %78 = tpu.matmul %76, %77, %cst_54 {dimension_numbers = #tpu.dot_dimension_numbers<[1], [0], [0], [1], [0, 0, 1, 1], [], []>} : vector<96x32xbf16>, vector<32x32xbf16>, vector<96x32xf32> -> vector<96x32xf32>
    %79 = vector.broadcast %3 : vector<1x32xf32> to vector<96x32xf32>
    %80 = arith.addf %78, %79 : vector<96x32xf32>
    %c0_55 = arith.constant 0 : index
    %c0_56 = arith.constant 0 : index
    %81 = vector.load %arg5[%c0_55, %c0_56] : memref<96x33xbf16, #tpu.memory_space<vmem>>, vector<96x33xbf16>
    %c0_57 = arith.constant 0 : index
    %c0_58 = arith.constant 0 : index
    %82 = vector.load %arg18[%c0_57, %c0_58] : memref<33x32xbf16, #tpu.memory_space<vmem>>, vector<33x32xbf16>
    %cst_59 = arith.constant dense<0.000000e+00> : vector<96x32xf32>
    %83 = tpu.matmul %81, %82, %cst_59 {dimension_numbers = #tpu.dot_dimension_numbers<[1], [0], [0], [1], [0, 0, 1, 1], [], []>} : vector<96x33xbf16>, vector<33x32xbf16>, vector<96x32xf32> -> vector<96x32xf32>
    %cst_60 = arith.constant 0.000000e+00 : f32
    %84 = vector.broadcast %cst_60 : f32 to vector<96x32xf32>
    %85 = arith.maximumf %83, %84 : vector<96x32xf32>
    %86 = arith.addf %80, %85 : vector<96x32xf32>
    %cst_61 = arith.constant 0.000000e+00 : f32
    %87 = vector.broadcast %cst_61 : f32 to vector<96x32xf32>
    %88 = arith.maximumf %86, %87 : vector<96x32xf32>
    %89 = arith.mulf %88, %88 : vector<96x32xf32>
    %cst_62 = arith.constant dense<0.000000e+00> : vector<96xf32>
    %90 = vector.multi_reduction <add>, %89, %cst_62 [1] : vector<96x32xf32> to vector<96xf32>
    %91 = vector.shape_cast %90 : vector<96xf32> to vector<96x1xf32>
    %cst_63 = arith.constant 1.000000e-24 : f32
    %92 = vector.broadcast %cst_63 : f32 to vector<96x1xf32>
    %93 = arith.maximumf %91, %92 : vector<96x1xf32>
    %94 = math.rsqrt %93 : vector<96x1xf32>
    %95 = vector.broadcast %94 : vector<96x1xf32> to vector<96x32xf32>
    %96 = arith.mulf %88, %95 : vector<96x32xf32>
    %97 = arith.truncf %96 : vector<96x32xf32> to vector<96x32xbf16>
    %cst_64 = arith.constant dense<0.000000e+00> : vector<16x32xf32>
    %98 = tpu.matmul %7, %97, %cst_64 {dimension_numbers = #tpu.dot_dimension_numbers<[1], [0], [0], [1], [0, 0, 1, 1], [], []>} : vector<16x96xbf16>, vector<96x32xbf16>, vector<16x32xf32> -> vector<16x32xf32>
    %cst_65 = arith.constant 0.166666672 : f32
    %99 = vector.broadcast %cst_65 : f32 to vector<16x32xf32>
    %100 = arith.mulf %98, %99 : vector<16x32xf32>
    %c0_66 = arith.constant 0 : index
    %c0_67 = arith.constant 0 : index
    %101 = vector.load %arg20[%c0_66, %c0_67] : memref<16x64xf32, #tpu.memory_space<vmem>>, vector<16x32xf32>
    tpu.vector_store %arg20[%c0_66, %c0_67], %100 {strides = array<i32>} : memref<16x64xf32, #tpu.memory_space<vmem>>, vector<16x32xf32>,
    %c0_68 = arith.constant 0 : index
    %c32 = arith.constant 32 : index
    %102 = vector.load %arg20[%c0_68, %c32] : memref<16x64xf32, #tpu.memory_space<vmem>>, vector<16x32xf32>
    tpu.vector_store %arg20[%c0_68, %c32], %75 {strides = array<i32>} : memref<16x64xf32, #tpu.memory_space<vmem>>, vector<16x32xf32>,
    return
  }
  func.func @transform_0(%arg0: i32) -> (i32, i32) {
    %c0_i32 = arith.constant 0 : i32
    %c0_i32_0 = arith.constant 0 : i32
    return %arg0, %c0_i32 : i32, i32
  }
  func.func @transform_1(%arg0: i32) -> (i32, i32) {
    %c0_i32 = arith.constant 0 : i32
    %c0_i32_0 = arith.constant 0 : i32
    return %arg0, %c0_i32 : i32, i32
  }
  func.func @transform_2(%arg0: i32) -> (i32, i32) {
    %c0_i32 = arith.constant 0 : i32
    %c0_i32_0 = arith.constant 0 : i32
    return %arg0, %c0_i32 : i32, i32
  }
  func.func @transform_3(%arg0: i32) -> (i32, i32) {
    %c0_i32 = arith.constant 0 : i32
    %c0_i32_0 = arith.constant 0 : i32
    return %arg0, %c0_i32 : i32, i32
  }
  func.func @transform_4(%arg0: i32) -> (i32, i32) {
    %c0_i32 = arith.constant 0 : i32
    %c0_i32_0 = arith.constant 0 : i32
    return %arg0, %c0_i32 : i32, i32
  }
  func.func @transform_5(%arg0: i32) -> (i32, i32) {
    %c0_i32 = arith.constant 0 : i32
    %c0_i32_0 = arith.constant 0 : i32
    %c0_i32_1 = arith.constant 0 : i32
    return %c0_i32, %c0_i32_0 : i32, i32
  }
  func.func @transform_6(%arg0: i32) -> (i32, i32) {
    %c0_i32 = arith.constant 0 : i32
    %c0_i32_0 = arith.constant 0 : i32
    %c0_i32_1 = arith.constant 0 : i32
    return %c0_i32, %c0_i32_0 : i32, i32
  }
  func.func @transform_7(%arg0: i32) -> (i32, i32) {
    %c0_i32 = arith.constant 0 : i32
    %c0_i32_0 = arith.constant 0 : i32
    %c0_i32_1 = arith.constant 0 : i32
    return %c0_i32, %c0_i32_0 : i32, i32
  }
  func.func @transform_8(%arg0: i32) -> (i32, i32) {
    %c0_i32 = arith.constant 0 : i32
    %c0_i32_0 = arith.constant 0 : i32
    %c0_i32_1 = arith.constant 0 : i32
    return %c0_i32, %c0_i32_0 : i32, i32
  }
  func.func @transform_9(%arg0: i32) -> (i32, i32) {
    %c0_i32 = arith.constant 0 : i32
    %c0_i32_0 = arith.constant 0 : i32
    %c0_i32_1 = arith.constant 0 : i32
    return %c0_i32, %c0_i32_0 : i32, i32
  }
  func.func @transform_10(%arg0: i32) -> (i32, i32) {
    %c0_i32 = arith.constant 0 : i32
    %c0_i32_0 = arith.constant 0 : i32
    %c0_i32_1 = arith.constant 0 : i32
    return %c0_i32, %c0_i32_0 : i32, i32
  }
  func.func @transform_11(%arg0: i32) -> (i32, i32) {
    %c0_i32 = arith.constant 0 : i32
    %c0_i32_0 = arith.constant 0 : i32
    %c0_i32_1 = arith.constant 0 : i32
    return %c0_i32, %c0_i32_0 : i32, i32
  }
  func.func @transform_12(%arg0: i32) -> (i32, i32) {
    %c0_i32 = arith.constant 0 : i32
    %c0_i32_0 = arith.constant 0 : i32
    %c0_i32_1 = arith.constant 0 : i32
    return %c0_i32, %c0_i32_0 : i32, i32
  }
  func.func @transform_13(%arg0: i32) -> (i32, i32) {
    %c0_i32 = arith.constant 0 : i32
    %c0_i32_0 = arith.constant 0 : i32
    %c0_i32_1 = arith.constant 0 : i32
    return %c0_i32, %c0_i32_0 : i32, i32
  }
  func.func @transform_14(%arg0: i32) -> (i32, i32) {
    %c0_i32 = arith.constant 0 : i32
    %c0_i32_0 = arith.constant 0 : i32
    %c0_i32_1 = arith.constant 0 : i32
    return %c0_i32, %c0_i32_0 : i32, i32
  }
  func.func @transform_15(%arg0: i32) -> (i32, i32) {
    %c0_i32 = arith.constant 0 : i32
    %c0_i32_0 = arith.constant 0 : i32
    %c0_i32_1 = arith.constant 0 : i32
    return %c0_i32, %c0_i32_0 : i32, i32
  }
  func.func @transform_16(%arg0: i32) -> (i32, i32) {
    %c0_i32 = arith.constant 0 : i32
    %c0_i32_0 = arith.constant 0 : i32
    %c0_i32_1 = arith.constant 0 : i32
    return %c0_i32, %c0_i32_0 : i32, i32
  }
  func.func @transform_17(%arg0: i32) -> (i32, i32) {
    %c0_i32 = arith.constant 0 : i32
    %c0_i32_0 = arith.constant 0 : i32
    %c0_i32_1 = arith.constant 0 : i32
    return %c0_i32, %c0_i32_0 : i32, i32
  }
  func.func @transform_18(%arg0: i32) -> (i32, i32) {
    %c0_i32 = arith.constant 0 : i32
    %c0_i32_0 = arith.constant 0 : i32
    %c0_i32_1 = arith.constant 0 : i32
    return %c0_i32, %c0_i32_0 : i32, i32
  }
  func.func @transform_19(%arg0: i32) -> (i32, i32) {
    %c0_i32 = arith.constant 0 : i32
    %c0_i32_0 = arith.constant 0 : i32
    return %arg0, %c0_i32 : i32, i32
  }
}

module attributes {stable_mosaic.version = 11 : i64} {
  func.func @_listener_kernel(%arg0: i32, %arg1: memref<128x32xbf16, #tpu.memory_space<vmem>>, %arg2: memref<16x32xbf16, #tpu.memory_space<vmem>>, %arg3: memref<16x8xf32, #tpu.memory_space<vmem>>, %arg4: memref<96x32xbf16, #tpu.memory_space<vmem>>, %arg5: memref<96x33xbf16, #tpu.memory_space<vmem>>, %arg6: memref<16x128xbf16, #tpu.memory_space<vmem>>, %arg7: memref<128x16xbf16, #tpu.memory_space<vmem>>, %arg8: memref<128x8xbf16, #tpu.memory_space<vmem>>, %arg9: memref<8x128xbf16, #tpu.memory_space<vmem>>, %arg10: memref<16x96xbf16, #tpu.memory_space<vmem>>, %arg11: memref<32x32xbf16, #tpu.memory_space<vmem>>, %arg12: memref<32x32xbf16, #tpu.memory_space<vmem>>, %arg13: memref<32x32xbf16, #tpu.memory_space<vmem>>, %arg14: memref<32x32xbf16, #tpu.memory_space<vmem>>, %arg15: memref<32x16xbf16, #tpu.memory_space<vmem>>, %arg16: memref<16x1xbf16, #tpu.memory_space<vmem>>, %arg17: memref<32x32xbf16, #tpu.memory_space<vmem>>, %arg18: memref<33x32xbf16, #tpu.memory_space<vmem>>, %arg19: memref<6x32xf32, #tpu.memory_space<vmem>>, %arg20: memref<16x64xf32, #tpu.memory_space<vmem>>) attributes {dimension_semantics = [#tpu.dimension_semantics<parallel>], iteration_bounds = array<i64: 1>, scalar_prefetch = 0 : i64, scratch_operands = 0 : i64, tpu.core_type = #tpu.core_type<tc>, window_params = [{transform_indices = @transform_0, window_bounds = array<i64: 128, 32>}, {transform_indices = @transform_1, window_bounds = array<i64: 16, 32>}, {transform_indices = @transform_2, window_bounds = array<i64: 16, 8>}, {transform_indices = @transform_3, window_bounds = array<i64: 96, 32>}, {transform_indices = @transform_4, window_bounds = array<i64: 96, 33>}, {pipeline_mode = #tpu.pipeline_mode<synchronous>, transform_indices = @transform_5, window_bounds = array<i64: 16, 128>}, {pipeline_mode = #tpu.pipeline_mode<synchronous>, transform_indices = @transform_6, window_bounds = array<i64: 128, 16>}, {pipeline_mode = #tpu.pipeline_mode<synchronous>, transform_indices = @transform_7, window_bounds = array<i64: 128, 8>}, {pipeline_mode = #tpu.pipeline_mode<synchronous>, transform_indices = @transform_8, window_bounds = array<i64: 8, 128>}, {pipeline_mode = #tpu.pipeline_mode<synchronous>, transform_indices = @transform_9, window_bounds = array<i64: 16, 96>}, {pipeline_mode = #tpu.pipeline_mode<synchronous>, transform_indices = @transform_10, window_bounds = array<i64: 32, 32>}, {pipeline_mode = #tpu.pipeline_mode<synchronous>, transform_indices = @transform_11, window_bounds = array<i64: 32, 32>}, {pipeline_mode = #tpu.pipeline_mode<synchronous>, transform_indices = @transform_12, window_bounds = array<i64: 32, 32>}, {pipeline_mode = #tpu.pipeline_mode<synchronous>, transform_indices = @transform_13, window_bounds = array<i64: 32, 32>}, {pipeline_mode = #tpu.pipeline_mode<synchronous>, transform_indices = @transform_14, window_bounds = array<i64: 32, 16>}, {pipeline_mode = #tpu.pipeline_mode<synchronous>, transform_indices = @transform_15, window_bounds = array<i64: 16, 1>}, {pipeline_mode = #tpu.pipeline_mode<synchronous>, transform_indices = @transform_16, window_bounds = array<i64: 32, 32>}, {pipeline_mode = #tpu.pipeline_mode<synchronous>, transform_indices = @transform_17, window_bounds = array<i64: 33, 32>}, {pipeline_mode = #tpu.pipeline_mode<synchronous>, transform_indices = @transform_18, window_bounds = array<i64: 6, 32>}, {transform_indices = @transform_19, window_bounds = array<i64: 16, 64>}]} {
    %c0 = arith.constant 0 : index
    %c0_0 = arith.constant 0 : index
    %0 = vector.load %arg19[%c0, %c0_0] : memref<6x32xf32, #tpu.memory_space<vmem>>, vector<1x32xf32>
    %c1 = arith.constant 1 : index
    %c0_1 = arith.constant 0 : index
    %1 = vector.load %arg19[%c1, %c0_1] : memref<6x32xf32, #tpu.memory_space<vmem>>, vector<1x32xf32>
    %c2 = arith.constant 2 : index
    %c0_2 = arith.constant 0 : index
    %2 = vector.load %arg19[%c2, %c0_2] : memref<6x32xf32, #tpu.memory_space<vmem>>, vector<1x32xf32>
    %c3 = arith.constant 3 : index
    %c0_3 = arith.constant 0 : index
    %3 = vector.load %arg19[%c3, %c0_3] : memref<6x32xf32, #tpu.memory_space<vmem>>, vector<1x32xf32>
    %c4 = arith.constant 4 : index
    %c0_4 = arith.constant 0 : index
    %4 = vector.load %arg19[%c4, %c0_4] : memref<6x32xf32, #tpu.memory_space<vmem>>, vector<1x16xf32>
    %c5 = arith.constant 5 : index
    %c0_5 = arith.constant 0 : index
    %5 = vector.load %arg19[%c5, %c0_5] : memref<6x32xf32, #tpu.memory_space<vmem>>, vector<1x1xf32>
    %c0_6 = arith.constant 0 : index
    %c0_7 = arith.constant 0 : index
    %6 = vector.load %arg6[%c0_6, %c0_7] : memref<16x128xbf16, #tpu.memory_space<vmem>>, vector<16x128xbf16>
    %c0_8 = arith.constant 0 : index
    %c0_9 = arith.constant 0 : index
    %7 = vector.load %arg10[%c0_8, %c0_9] : memref<16x96xbf16, #tpu.memory_space<vmem>>, vector<16x96xbf16>
    %c0_10 = arith.constant 0 : index
    %c0_11 = arith.constant 0 : index
    %8 = vector.load %arg1[%c0_10, %c0_11] : memref<128x32xbf16, #tpu.memory_space<vmem>>, vector<128x32xbf16>
    %c0_12 = arith.constant 0 : index
    %c0_13 = arith.constant 0 : index
    %9 = vector.load %arg11[%c0_12, %c0_13] : memref<32x32xbf16, #tpu.memory_space<vmem>>, vector<32x32xbf16>
    %cst = arith.constant dense<0.000000e+00> : vector<128x32xf32>
    %10 = tpu.matmul %8, %9, %cst {dimension_numbers = #tpu.dot_dimension_numbers<[1], [0], [0], [1], [0, 0, 1, 1], [], []>} : vector<128x32xbf16>, vector<32x32xbf16>, vector<128x32xf32> -> vector<128x32xf32>
    %11 = vector.broadcast %0 : vector<1x32xf32> to vector<128x32xf32>
    %12 = arith.addf %10, %11 : vector<128x32xf32>
    %cst_14 = arith.constant 0.000000e+00 : f32
    %13 = vector.broadcast %cst_14 : f32 to vector<128x32xf32>
    %14 = arith.maximumf %12, %13 : vector<128x32xf32>
    %c0_15 = arith.constant 0 : index
    %c0_16 = arith.constant 0 : index
    %15 = vector.load %arg2[%c0_15, %c0_16] : memref<16x32xbf16, #tpu.memory_space<vmem>>, vector<16x32xbf16>
    %c0_17 = arith.constant 0 : index
    %c0_18 = arith.constant 0 : index
    %16 = vector.load %arg12[%c0_17, %c0_18] : memref<32x32xbf16, #tpu.memory_space<vmem>>, vector<32x32xbf16>
    %cst_19 = arith.constant dense<0.000000e+00> : vector<16x32xf32>
    %17 = tpu.matmul %15, %16, %cst_19 {dimension_numbers = #tpu.dot_dimension_numbers<[1], [0], [0], [1], [0, 0, 1, 1], [], []>} : vector<16x32xbf16>, vector<32x32xbf16>, vector<16x32xf32> -> vector<16x32xf32>
    %18 = vector.broadcast %1 : vector<1x32xf32> to vector<16x32xf32>
    %19 = arith.addf %17, %18 : vector<16x32xf32>
    %cst_20 = arith.constant 0.000000e+00 : f32
    %20 = vector.broadcast %cst_20 : f32 to vector<16x32xf32>
    %21 = arith.maximumf %19, %20 : vector<16x32xf32>
    %c0_21 = arith.constant 0 : index
    %c0_22 = arith.constant 0 : index
    %22 = vector.load %arg13[%c0_21, %c0_22] : memref<32x32xbf16, #tpu.memory_space<vmem>>, vector<32x32xbf16>
    %23 = arith.truncf %14 : vector<128x32xf32> to vector<128x32xbf16>
    %cst_23 = arith.constant dense<0.000000e+00> : vector<128x32xf32>
    %24 = tpu.matmul %23, %22, %cst_23 {dimension_numbers = #tpu.dot_dimension_numbers<[1], [0], [0], [1], [0, 0, 1, 1], [], []>} : vector<128x32xbf16>, vector<32x32xbf16>, vector<128x32xf32> -> vector<128x32xf32>
    %c0_24 = arith.constant 0 : index
    %c0_25 = arith.constant 0 : index
    %25 = vector.load %arg7[%c0_24, %c0_25] : memref<128x16xbf16, #tpu.memory_space<vmem>>, vector<128x16xbf16>
    %c0_26 = arith.constant 0 : index
    %c0_27 = arith.constant 0 : index
    %26 = vector.load %arg14[%c0_26, %c0_27] : memref<32x32xbf16, #tpu.memory_space<vmem>>, vector<32x32xbf16>
    %27 = arith.truncf %21 : vector<16x32xf32> to vector<16x32xbf16>
    %cst_28 = arith.constant dense<0.000000e+00> : vector<16x32xf32>
    %28 = tpu.matmul %27, %26, %cst_28 {dimension_numbers = #tpu.dot_dimension_numbers<[1], [0], [0], [1], [0, 0, 1, 1], [], []>} : vector<16x32xbf16>, vector<32x32xbf16>, vector<16x32xf32> -> vector<16x32xf32>
    %29 = arith.truncf %28 : vector<16x32xf32> to vector<16x32xbf16>
    %cst_29 = arith.constant dense<0.000000e+00> : vector<128x32xf32>
    %30 = tpu.matmul %25, %29, %cst_29 {dimension_numbers = #tpu.dot_dimension_numbers<[1], [0], [0], [1], [0, 0, 1, 1], [], []>} : vector<128x16xbf16>, vector<16x32xbf16>, vector<128x32xf32> -> vector<128x32xf32>
    %31 = arith.addf %24, %30 : vector<128x32xf32>
    %32 = vector.broadcast %2 : vector<1x32xf32> to vector<128x32xf32>
    %33 = arith.addf %31, %32 : vector<128x32xf32>
    %cst_30 = arith.constant 0.000000e+00 : f32
    %34 = vector.broadcast %cst_30 : f32 to vector<128x32xf32>
    %35 = arith.maximumf %33, %34 : vector<128x32xf32>
    %c0_31 = arith.constant 0 : index
    %c0_32 = arith.constant 0 : index
    %36 = vector.load %arg15[%c0_31, %c0_32] : memref<32x16xbf16, #tpu.memory_space<vmem>>, vector<32x16xbf16>
    %37 = arith.truncf %35 : vector<128x32xf32> to vector<128x32xbf16>
    %cst_33 = arith.constant dense<0.000000e+00> : vector<128x16xf32>
    %38 = tpu.matmul %37, %36, %cst_33 {dimension_numbers = #tpu.dot_dimension_numbers<[1], [0], [0], [1], [0, 0, 1, 1], [], []>} : vector<128x32xbf16>, vector<32x16xbf16>, vector<128x16xf32> -> vector<128x16xf32>
    %39 = vector.broadcast %4 : vector<1x16xf32> to vector<128x16xf32>
    %40 = arith.addf %38, %39 : vector<128x16xf32>
    %41 = math.tanh %40 : vector<128x16xf32>
    %c0_34 = arith.constant 0 : index
    %c0_35 = arith.constant 0 : index
    %42 = vector.load %arg16[%c0_34, %c0_35] : memref<16x1xbf16, #tpu.memory_space<vmem>>, vector<16x1xbf16>
    %43 = arith.truncf %41 : vector<128x16xf32> to vector<128x16xbf16>
    %cst_36 = arith.constant dense<0.000000e+00> : vector<128x1xf32>
    %44 = tpu.matmul %43, %42, %cst_36 {dimension_numbers = #tpu.dot_dimension_numbers<[1], [0], [0], [1], [0, 0, 1, 1], [], []>} : vector<128x16xbf16>, vector<16x1xbf16>, vector<128x1xf32> -> vector<128x1xf32>
    %45 = vector.broadcast %5 : vector<1x1xf32> to vector<128x1xf32>
    %46 = arith.addf %44, %45 : vector<128x1xf32>
    %c0_37 = arith.constant 0 : index
    %c0_38 = arith.constant 0 : index
    %47 = vector.load %arg8[%c0_37, %c0_38] : memref<128x8xbf16, #tpu.memory_space<vmem>>, vector<128x8xbf16>
    %48 = arith.extf %47 : vector<128x8xbf16> to vector<128x8xf32>
    %49 = vector.broadcast %46 : vector<128x1xf32> to vector<128x8xf32>
    %50 = arith.mulf %48, %49 : vector<128x8xf32>
    %51 = arith.truncf %50 : vector<128x8xf32> to vector<128x8xbf16>
    %cst_39 = arith.constant dense<0.000000e+00> : vector<16x8xf32>
    %52 = tpu.matmul %6, %51, %cst_39 {dimension_numbers = #tpu.dot_dimension_numbers<[1], [0], [0], [1], [0, 0, 1, 1], [], []>} : vector<16x128xbf16>, vector<128x8xbf16>, vector<16x8xf32> -> vector<16x8xf32>
    %c0_40 = arith.constant 0 : index
    %c0_41 = arith.constant 0 : index
    %53 = vector.load %arg3[%c0_40, %c0_41] : memref<16x8xf32, #tpu.memory_space<vmem>>, vector<16x8xf32>
    %cst_42 = arith.constant 5.000000e-01 : f32
    %54 = vector.broadcast %cst_42 : f32 to vector<16x8xf32>
    %55 = arith.cmpf ogt, %53, %54 : vector<16x8xf32>
    %cst_43 = arith.constant 0xFF800000 : f32
    %56 = vector.broadcast %cst_43 : f32 to vector<16x8xf32>
    %57 = arith.select %55, %56, %52 : vector<16x8xi1>, vector<16x8xf32>
    %cst_44 = arith.constant dense<0xFF800000> : vector<16xf32>
    %58 = vector.multi_reduction <maximumf>, %57, %cst_44 [1] : vector<16x8xf32> to vector<16xf32>
    %59 = vector.shape_cast %58 : vector<16xf32> to vector<16x1xf32>
    %60 = vector.broadcast %59 : vector<16x1xf32> to vector<16x8xf32>
    %61 = arith.subf %57, %60 : vector<16x8xf32>
    %62 = math.exp %61 : vector<16x8xf32>
    %cst_45 = arith.constant dense<0.000000e+00> : vector<16xf32>
    %63 = vector.multi_reduction <add>, %62, %cst_45 [1] : vector<16x8xf32> to vector<16xf32>
    %64 = vector.shape_cast %63 : vector<16xf32> to vector<16x1xf32>
    %65 = tpu.reciprocal %64 {approx = true} : vector<16x1xf32> -> vector<16x1xf32>
    %66 = vector.broadcast %65 : vector<16x1xf32> to vector<16x8xf32>
    %67 = arith.mulf %62, %66 : vector<16x8xf32>
    %c0_46 = arith.constant 0 : index
    %c0_47 = arith.constant 0 : index
    %68 = vector.load %arg9[%c0_46, %c0_47] : memref<8x128xbf16, #tpu.memory_space<vmem>>, vector<8x128xbf16>
    %69 = arith.truncf %67 : vector<16x8xf32> to vector<16x8xbf16>
    %cst_48 = arith.constant dense<0.000000e+00> : vector<16x128xf32>
    %70 = tpu.matmul %69, %68, %cst_48 {dimension_numbers = #tpu.dot_dimension_numbers<[1], [0], [0], [1], [0, 0, 1, 1], [], []>} : vector<16x8xbf16>, vector<8x128xbf16>, vector<16x128xf32> -> vector<16x128xf32>
    %71 = arith.extf %6 : vector<16x128xbf16> to vector<16x128xf32>
    %72 = arith.mulf %71, %70 : vector<16x128xf32>
    %73 = arith.truncf %72 : vector<16x128xf32> to vector<16x128xbf16>
    %74 = arith.truncf %35 : vector<128x32xf32> to vector<128x32xbf16>
    %cst_49 = arith.constant dense<0.000000e+00> : vector<16x32xf32>
    %75 = tpu.matmul %73, %74, %cst_49 {dimension_numbers = #tpu.dot_dimension_numbers<[1], [0], [0], [1], [0, 0, 1, 1], [], []>} : vector<16x128xbf16>, vector<128x32xbf16>, vector<16x32xf32> -> vector<16x32xf32>
    %c0_50 = arith.constant 0 : index
    %c0_51 = arith.constant 0 : index
    %76 = vector.load %arg4[%c0_50, %c0_51] : memref<96x32xbf16, #tpu.memory_space<vmem>>, vector<96x32xbf16>
    %c0_52 = arith.constant 0 : index
    %c0_53 = arith.constant 0 : index
    %77 = vector.load %arg17[%c0_52, %c0_53] : memref<32x32xbf16, #tpu.memory_space<vmem>>, vector<32x32xbf16>
    %cst_54 = arith.constant dense<0.000000e+00> : vector<96x32xf32>
    %78 = tpu.matmul %76, %77, %cst_54 {dimension_numbers = #tpu.dot_dimension_numbers<[1], [0], [0], [1], [0, 0, 1, 1], [], []>} : vector<96x32xbf16>, vector<32x32xbf16>, vector<96x32xf32> -> vector<96x32xf32>
    %79 = vector.broadcast %3 : vector<1x32xf32> to vector<96x32xf32>
    %80 = arith.addf %78, %79 : vector<96x32xf32>
    %c0_55 = arith.constant 0 : index
    %c0_56 = arith.constant 0 : index
    %81 = vector.load %arg5[%c0_55, %c0_56] : memref<96x33xbf16, #tpu.memory_space<vmem>>, vector<96x33xbf16>
    %c0_57 = arith.constant 0 : index
    %c0_58 = arith.constant 0 : index
    %82 = vector.load %arg18[%c0_57, %c0_58] : memref<33x32xbf16, #tpu.memory_space<vmem>>, vector<33x32xbf16>
    %cst_59 = arith.constant dense<0.000000e+00> : vector<96x32xf32>
    %83 = tpu.matmul %81, %82, %cst_59 {dimension_numbers = #tpu.dot_dimension_numbers<[1], [0], [0], [1], [0, 0, 1, 1], [], []>} : vector<96x33xbf16>, vector<33x32xbf16>, vector<96x32xf32> -> vector<96x32xf32>
    %cst_60 = arith.constant 0.000000e+00 : f32
    %84 = vector.broadcast %cst_60 : f32 to vector<96x32xf32>
    %85 = arith.maximumf %83, %84 : vector<96x32xf32>
    %86 = arith.addf %80, %85 : vector<96x32xf32>
    %cst_61 = arith.constant 0.000000e+00 : f32
    %87 = vector.broadcast %cst_61 : f32 to vector<96x32xf32>
    %88 = arith.maximumf %86, %87 : vector<96x32xf32>
    %89 = arith.mulf %88, %88 : vector<96x32xf32>
    %cst_62 = arith.constant dense<0.000000e+00> : vector<96xf32>
    %90 = vector.multi_reduction <add>, %89, %cst_62 [1] : vector<96x32xf32> to vector<96xf32>
    %91 = vector.shape_cast %90 : vector<96xf32> to vector<96x1xf32>
    %cst_63 = arith.constant 1.000000e-24 : f32
    %92 = vector.broadcast %cst_63 : f32 to vector<96x1xf32>
    %93 = arith.maximumf %91, %92 : vector<96x1xf32>
    %94 = math.rsqrt %93 : vector<96x1xf32>
    %95 = vector.broadcast %94 : vector<96x1xf32> to vector<96x32xf32>
    %96 = arith.mulf %88, %95 : vector<96x32xf32>
    %97 = arith.truncf %96 : vector<96x32xf32> to vector<96x32xbf16>
    %cst_64 = arith.constant dense<0.000000e+00> : vector<16x32xf32>
    %98 = tpu.matmul %7, %97, %cst_64 {dimension_numbers = #tpu.dot_dimension_numbers<[1], [0], [0], [1], [0, 0, 1, 1], [], []>} : vector<16x96xbf16>, vector<96x32xbf16>, vector<16x32xf32> -> vector<16x32xf32>
    %cst_65 = arith.constant 0.166666672 : f32
    %99 = vector.broadcast %cst_65 : f32 to vector<16x32xf32>
    %100 = arith.mulf %98, %99 : vector<16x32xf32>
    %c0_66 = arith.constant 0 : index
    %c0_67 = arith.constant 0 : index
    %101 = vector.load %arg20[%c0_66, %c0_67] : memref<16x64xf32, #tpu.memory_space<vmem>>, vector<16x32xf32>
    tpu.vector_store %arg20[%c0_66, %c0_67], %100 {strides = array<i32>} : memref<16x64xf32, #tpu.memory_space<vmem>>, vector<16x32xf32>,
    %c0_68 = arith.constant 0 : index
    %c32 = arith.constant 32 : index
    %102 = vector.load %arg20[%c0_68, %c32] : memref<16x64xf32, #tpu.memory_space<vmem>>, vector<16x32xf32>
    tpu.vector_store %arg20[%c0_68, %c32], %75 {strides = array<i32>} : memref<16x64xf32, #tpu.memory_space<vmem>>, vector<16x32xf32>,
    return
  }
  func.func @transform_0(%arg0: i32) -> (i32, i32) {
    %c0_i32 = arith.constant 0 : i32
    %c0_i32_0 = arith.constant 0 : i32
    return %arg0, %c0_i32 : i32, i32
  }
  func.func @transform_1(%arg0: i32) -> (i32, i32) {
    %c0_i32 = arith.constant 0 : i32
    %c0_i32_0 = arith.constant 0 : i32
    return %arg0, %c0_i32 : i32, i32
  }
  func.func @transform_2(%arg0: i32) -> (i32, i32) {
    %c0_i32 = arith.constant 0 : i32
    %c0_i32_0 = arith.constant 0 : i32
    return %arg0, %c0_i32 : i32, i32
  }
  func.func @transform_3(%arg0: i32) -> (i32, i32) {
    %c0_i32 = arith.constant 0 : i32
    %c0_i32_0 = arith.constant 0 : i32
    return %arg0, %c0_i32 : i32, i32
  }
  func.func @transform_4(%arg0: i32) -> (i32, i32) {
    %c0_i32 = arith.constant 0 : i32
    %c0_i32_0 = arith.constant 0 : i32
    return %arg0, %c0_i32 : i32, i32
  }
  func.func @transform_5(%arg0: i32) -> (i32, i32) {
    %c0_i32 = arith.constant 0 : i32
    %c0_i32_0 = arith.constant 0 : i32
    %c0_i32_1 = arith.constant 0 : i32
    return %c0_i32, %c0_i32_0 : i32, i32
  }
  func.func @transform_6(%arg0: i32) -> (i32, i32) {
    %c0_i32 = arith.constant 0 : i32
    %c0_i32_0 = arith.constant 0 : i32
    %c0_i32_1 = arith.constant 0 : i32
    return %c0_i32, %c0_i32_0 : i32, i32
  }
  func.func @transform_7(%arg0: i32) -> (i32, i32) {
    %c0_i32 = arith.constant 0 : i32
    %c0_i32_0 = arith.constant 0 : i32
    %c0_i32_1 = arith.constant 0 : i32
    return %c0_i32, %c0_i32_0 : i32, i32
  }
  func.func @transform_8(%arg0: i32) -> (i32, i32) {
    %c0_i32 = arith.constant 0 : i32
    %c0_i32_0 = arith.constant 0 : i32
    %c0_i32_1 = arith.constant 0 : i32
    return %c0_i32, %c0_i32_0 : i32, i32
  }
  func.func @transform_9(%arg0: i32) -> (i32, i32) {
    %c0_i32 = arith.constant 0 : i32
    %c0_i32_0 = arith.constant 0 : i32
    %c0_i32_1 = arith.constant 0 : i32
    return %c0_i32, %c0_i32_0 : i32, i32
  }
  func.func @transform_10(%arg0: i32) -> (i32, i32) {
    %c0_i32 = arith.constant 0 : i32
    %c0_i32_0 = arith.constant 0 : i32
    %c0_i32_1 = arith.constant 0 : i32
    return %c0_i32, %c0_i32_0 : i32, i32
  }
  func.func @transform_11(%arg0: i32) -> (i32, i32) {
    %c0_i32 = arith.constant 0 : i32
    %c0_i32_0 = arith.constant 0 : i32
    %c0_i32_1 = arith.constant 0 : i32
    return %c0_i32, %c0_i32_0 : i32, i32
  }
  func.func @transform_12(%arg0: i32) -> (i32, i32) {
    %c0_i32 = arith.constant 0 : i32
    %c0_i32_0 = arith.constant 0 : i32
    %c0_i32_1 = arith.constant 0 : i32
    return %c0_i32, %c0_i32_0 : i32, i32
  }
  func.func @transform_13(%arg0: i32) -> (i32, i32) {
    %c0_i32 = arith.constant 0 : i32
    %c0_i32_0 = arith.constant 0 : i32
    %c0_i32_1 = arith.constant 0 : i32
    return %c0_i32, %c0_i32_0 : i32, i32
  }
  func.func @transform_14(%arg0: i32) -> (i32, i32) {
    %c0_i32 = arith.constant 0 : i32
    %c0_i32_0 = arith.constant 0 : i32
    %c0_i32_1 = arith.constant 0 : i32
    return %c0_i32, %c0_i32_0 : i32, i32
  }
  func.func @transform_15(%arg0: i32) -> (i32, i32) {
    %c0_i32 = arith.constant 0 : i32
    %c0_i32_0 = arith.constant 0 : i32
    %c0_i32_1 = arith.constant 0 : i32
    return %c0_i32, %c0_i32_0 : i32, i32
  }
  func.func @transform_16(%arg0: i32) -> (i32, i32) {
    %c0_i32 = arith.constant 0 : i32
    %c0_i32_0 = arith.constant 0 : i32
    %c0_i32_1 = arith.constant 0 : i32
    return %c0_i32, %c0_i32_0 : i32, i32
  }
  func.func @transform_17(%arg0: i32) -> (i32, i32) {
    %c0_i32 = arith.constant 0 : i32
    %c0_i32_0 = arith.constant 0 : i32
    %c0_i32_1 = arith.constant 0 : i32
    return %c0_i32, %c0_i32_0 : i32, i32
  }
  func.func @transform_18(%arg0: i32) -> (i32, i32) {
    %c0_i32 = arith.constant 0 : i32
    %c0_i32_0 = arith.constant 0 : i32
    %c0_i32_1 = arith.constant 0 : i32
    return %c0_i32, %c0_i32_0 : i32, i32
  }
  func.func @transform_19(%arg0: i32) -> (i32, i32) {
    %c0_i32 = arith.constant 0 : i32
    %c0_i32_0 = arith.constant 0 : i32
    return %arg0, %c0_i32 : i32, i32
  }
}

</mosaic_0001>

<llo_original>
// kernel: tpu_custom_call.1
$region0: #{tpu_custom_call.1}
  #allocation0 [shape = 'u32[]', space=smem, size = 0x4, offset = 0x4, fixed_abs, tag = 'smem constant byte address 0x4 - core index']
  #allocation1 [shape = 'u32[144,128]{1,0:T(1,128)}', space=vmem, size = 0x12000, scoped, tag = 'internal scratch']
  %s0 = inlined_call_operand.vmem [shape: bf16[128,32], index: 0, kind: input, shape index: {}]
  %s1 = inlined_call_operand.vmem [shape: bf16[16,32], index: 1, kind: input, shape index: {}]
  %s2 = inlined_call_operand.vmem [shape: f32[16,8], index: 2, kind: input, shape index: {}]
  %s3 = inlined_call_operand.vmem [shape: bf16[96,32], index: 3, kind: input, shape index: {}]
  %s4 = inlined_call_operand.vmem [shape: bf16[96,33], index: 4, kind: input, shape index: {}]
  %s5 = inlined_call_operand.vmem [shape: bf16[16,128], index: 5, kind: input, shape index: {}]
  %s6 = inlined_call_operand.vmem [shape: bf16[128,16], index: 6, kind: input, shape index: {}]
  %s7 = inlined_call_operand.vmem [shape: bf16[128,8], index: 7, kind: input, shape index: {}]
  %s8 = inlined_call_operand.vmem [shape: bf16[8,128], index: 8, kind: input, shape index: {}]
  %s9 = inlined_call_operand.vmem [shape: bf16[16,96], index: 9, kind: input, shape index: {}]
  %s10 = inlined_call_operand.vmem [shape: bf16[32,32], index: 10, kind: input, shape index: {}]
  %s11 = inlined_call_operand.vmem [shape: bf16[32,32], index: 11, kind: input, shape index: {}]
  %s12 = inlined_call_operand.vmem [shape: bf16[32,32], index: 12, kind: input, shape index: {}]
  %s13 = inlined_call_operand.vmem [shape: bf16[32,32], index: 13, kind: input, shape index: {}]
  %s14 = inlined_call_operand.vmem [shape: bf16[32,16], index: 14, kind: input, shape index: {}]
  %s15 = inlined_call_operand.vmem [shape: bf16[16,1], index: 15, kind: input, shape index: {}]
  %s16 = inlined_call_operand.vmem [shape: bf16[32,32], index: 16, kind: input, shape index: {}]
  %s17 = inlined_call_operand.vmem [shape: bf16[33,32], index: 17, kind: input, shape index: {}]
  %s18 = inlined_call_operand.vmem [shape: f32[6,32], index: 18, kind: input, shape index: {}]
  %s19 = inlined_call_operand.hbm [shape: f32[16,64], index: 19, kind: output, shape index: {}]
  %s20 = sld [smem:[#allocation0]]
  $region86: #{tpu_custom_call.1} parent=0
    _
  %s22 = ssub.s32 1, %s20
  %s23 = scalar_select 0, %s22, %s20
  $region1: #{tpu_custom_call.1} parent=0
    #allocation2 [shape = 'u8[8192]{0}', space=vmem, size = 0x2000, scoped, tag = 'output window, operand 0, single buffered']
    #allocation3 [shape = 's32[1]{0}', space=sflag, size = 0x4, scoped, tag = 'scoped memory for tpu_custom_call.1']
    %24 = vsyncpa [#allocation3], 0
    // Predicated region
    $region2: #{tpu_custom_call.1} parent=1 // pred_check
      _
    $region3: #{tpu_custom_call.1} parent=1 // pred_check_branch
      %26 = sbr.rel (0) target = $region5
    $region4: #{tpu_custom_call.1} parent=1 // pred_region
      _
    $region5: #{tpu_custom_call.1} parent=1 // pred_fallthru
      _
    // Predicated region
    $region6: #{tpu_custom_call.1} parent=1 // pred_check
      _
    $region7: #{tpu_custom_call.1} parent=1 // pred_check_branch
      %28 = sbr.rel (0) target = $region9
    $region8: #{tpu_custom_call.1} parent=1 // pred_region
      _
    $region9: #{tpu_custom_call.1} parent=1 // pred_fallthru
      _
    // Predicated region
    $region10: #{tpu_custom_call.1} parent=1 // pred_check
      _
    $region11: #{tpu_custom_call.1} parent=1 // pred_check_branch
      %30 = sbr.rel (0) target = $region13
    $region12: #{tpu_custom_call.1} parent=1 // pred_region
      _
    $region13: #{tpu_custom_call.1} parent=1 // pred_fallthru
      _
    // Predicated region
    $region14: #{tpu_custom_call.1} parent=1 // pred_check
      _
    $region15: #{tpu_custom_call.1} parent=1 // pred_check_branch
      %32 = sbr.rel (0) target = $region17
    $region16: #{tpu_custom_call.1} parent=1 // pred_region
      _
    $region17: #{tpu_custom_call.1} parent=1 // pred_fallthru
      _
    // Predicated region
    $region18: #{tpu_custom_call.1} parent=1 // pred_check
      _
    $region19: #{tpu_custom_call.1} parent=1 // pred_check_branch
      %34 = sbr.rel (0) target = $region21
    $region20: #{tpu_custom_call.1} parent=1 // pred_region
      _
    $region21: #{tpu_custom_call.1} parent=1 // pred_fallthru
      _
    // Predicated region
    $region22: #{tpu_custom_call.1} parent=1 // pred_check
      _
    $region23: #{tpu_custom_call.1} parent=1 // pred_check_branch
      %36 = sbr.rel (0) target = $region25
    $region24: #{tpu_custom_call.1} parent=1 // pred_region
      _
    $region25: #{tpu_custom_call.1} parent=1 // pred_fallthru
      _
    // Predicated region
    $region26: #{tpu_custom_call.1} parent=1 // pred_check
      _
    $region27: #{tpu_custom_call.1} parent=1 // pred_check_branch
      %38 = sbr.rel (0) target = $region29
    $region28: #{tpu_custom_call.1} parent=1 // pred_region
      _
    $region29: #{tpu_custom_call.1} parent=1 // pred_fallthru
      _
    // Predicated region
    $region30: #{tpu_custom_call.1} parent=1 // pred_check
      _
    $region31: #{tpu_custom_call.1} parent=1 // pred_check_branch
      %40 = sbr.rel (0) target = $region33
    $region32: #{tpu_custom_call.1} parent=1 // pred_region
      _
    $region33: #{tpu_custom_call.1} parent=1 // pred_fallthru
      _
    // Predicated region
    $region34: #{tpu_custom_call.1} parent=1 // pred_check
      _
    $region35: #{tpu_custom_call.1} parent=1 // pred_check_branch
      %42 = sbr.rel (0) target = $region37
    $region36: #{tpu_custom_call.1} parent=1 // pred_region
      _
    $region37: #{tpu_custom_call.1} parent=1 // pred_fallthru
      _
    // Predicated region
    $region38: #{tpu_custom_call.1} parent=1 // pred_check
      _
    $region39: #{tpu_custom_call.1} parent=1 // pred_check_branch
      %44 = sbr.rel (0) target = $region41
    $region40: #{tpu_custom_call.1} parent=1 // pred_region
      _
    $region41: #{tpu_custom_call.1} parent=1 // pred_fallthru
      _
    // Predicated region
    $region42: #{tpu_custom_call.1} parent=1 // pred_check
      _
    $region43: #{tpu_custom_call.1} parent=1 // pred_check_branch
      %46 = sbr.rel (0) target = $region45
    $region44: #{tpu_custom_call.1} parent=1 // pred_region
      _
    $region45: #{tpu_custom_call.1} parent=1 // pred_fallthru
      _
    // Predicated region
    $region46: #{tpu_custom_call.1} parent=1 // pred_check
      _
    $region47: #{tpu_custom_call.1} parent=1 // pred_check_branch
      %48 = sbr.rel (0) target = $region49
    $region48: #{tpu_custom_call.1} parent=1 // pred_region
      _
    $region49: #{tpu_custom_call.1} parent=1 // pred_fallthru
      _
    // Predicated region
    $region50: #{tpu_custom_call.1} parent=1 // pred_check
      _
    $region51: #{tpu_custom_call.1} parent=1 // pred_check_branch
      %50 = sbr.rel (0) target = $region53
    $region52: #{tpu_custom_call.1} parent=1 // pred_region
      _
    $region53: #{tpu_custom_call.1} parent=1 // pred_fallthru
      _
    // Predicated region
    $region54: #{tpu_custom_call.1} parent=1 // pred_check
      _
    $region55: #{tpu_custom_call.1} parent=1 // pred_check_branch
      %52 = sbr.rel (0) target = $region57
    $region56: #{tpu_custom_call.1} parent=1 // pred_region
      _
    $region57: #{tpu_custom_call.1} parent=1 // pred_fallthru
      _
    // Predicated region
    $region58: #{tpu_custom_call.1} parent=1 // pred_check
      _
    $region59: #{tpu_custom_call.1} parent=1 // pred_check_branch
      %54 = sbr.rel (0) target = $region61
    $region60: #{tpu_custom_call.1} parent=1 // pred_region
      _
    $region61: #{tpu_custom_call.1} parent=1 // pred_fallthru
      _
    // Predicated region
    $region62: #{tpu_custom_call.1} parent=1 // pred_check
      _
    $region63: #{tpu_custom_call.1} parent=1 // pred_check_branch
      %56 = sbr.rel (0) target = $region65
    $region64: #{tpu_custom_call.1} parent=1 // pred_region
      _
    $region65: #{tpu_custom_call.1} parent=1 // pred_fallthru
      _
    // Predicated region
    $region66: #{tpu_custom_call.1} parent=1 // pred_check
      _
    $region67: #{tpu_custom_call.1} parent=1 // pred_check_branch
      %58 = sbr.rel (0) target = $region69
    $region68: #{tpu_custom_call.1} parent=1 // pred_region
      _
    $region69: #{tpu_custom_call.1} parent=1 // pred_fallthru
      _
    // Predicated region
    $region70: #{tpu_custom_call.1} parent=1 // pred_check
      _
    $region71: #{tpu_custom_call.1} parent=1 // pred_check_branch
      %60 = sbr.rel (0) target = $region73
    $region72: #{tpu_custom_call.1} parent=1 // pred_region
      _
    $region73: #{tpu_custom_call.1} parent=1 // pred_fallthru
      _
    // Predicated region
    $region74: #{tpu_custom_call.1} parent=1 // pred_check
      _
    $region75: #{tpu_custom_call.1} parent=1 // pred_check_branch
      %62 = sbr.rel (0) target = $region77
    $region76: #{tpu_custom_call.1} parent=1 // pred_region
      _
    $region77: #{tpu_custom_call.1} parent=1 // pred_fallthru
      _
    %v64 = vld [vmem:[%s18] sm:$0x1]
    %v65 = vld [vmem:[%s18 + $0x1] sm:$0x1]
    %v66 = vld [vmem:[%s18 + $0x2] sm:$0x1]
    %v67 = vld [vmem:[%s18 + $0x3] sm:$0x1]
    %v68 = vld [vmem:[%s18 + $0x4] sm:$0x1]
    %v69 = vld [vmem:[%s18 + $0x5] sm:$0x1]
    %v70 = vld [vmem:[%s5] sm:$0xf]
    %v71 = vld [vmem:[%s5 + $0x4] sm:$0xf]
    %v72 = vld [vmem:[%s9] sm:$0xf]
    %v73 = vld [vmem:[%s9 + $0x4] sm:$0xf]
    %v74 = vld [vmem:[%s0] sm:$0xf]
    %v75 = vld [vmem:[%s0 + $0x4] sm:$0xf]
    %v76 = vld [vmem:[%s0 + $0x8] sm:$0xf]
    %v77 = vld [vmem:[%s0 + $0xc] sm:$0xf]
    %v78 = vld [vmem:[%s0 + $0x10] sm:$0xf]
    %v79 = vld [vmem:[%s0 + $0x14] sm:$0xf]
    %v80 = vld [vmem:[%s0 + $0x18] sm:$0xf]
    %v81 = vld [vmem:[%s0 + $0x1c] sm:$0xf]
    %v82 = vld [vmem:[%s0 + $0x20] sm:$0xf]
    %v83 = vld [vmem:[%s0 + $0x24] sm:$0xf]
    %v84 = vld [vmem:[%s0 + $0x28] sm:$0xf]
    %v85 = vld [vmem:[%s0 + $0x2c] sm:$0xf]
    %v86 = vld [vmem:[%s0 + $0x30] sm:$0xf]
    %v87 = vld [vmem:[%s0 + $0x34] sm:$0xf]
    %v88 = vld [vmem:[%s0 + $0x38] sm:$0xf]
    %v89 = vld [vmem:[%s0 + $0x3c] sm:$0xf]
    %v90 = vld [vmem:[%s10] sm:$0xf]
    %v91 = vld [vmem:[%s10 + $0x4] sm:$0xf]
    %v92 = vld [vmem:[%s10 + $0x8] sm:$0xf]
    %v93 = vld [vmem:[%s10 + $0xc] sm:$0xf]
    %v94 = vlaneseq
    %v95 = vshrl.u32 %v94, 7
    %v96 = vsub.s32 0, %v95
    %v97 = vrot.slane %v64, %v96
    %v114 = vunpack.c.l.b16 %v74
    %v115 = vunpack.c.l.b16 %v75
    %v116 = vunpack.c.l.b16 %v76
    %v117 = vunpack.c.l.b16 %v77
    %v118 = vunpack.c.l.b16 %v78
    %v119 = vunpack.c.l.b16 %v79
    %v120 = vunpack.c.l.b16 %v80
    %v121 = vunpack.c.l.b16 %v81
    %v122 = vunpack.c.l.b16 %v82
    %v123 = vunpack.c.l.b16 %v83
    %v124 = vunpack.c.l.b16 %v84
    %v125 = vunpack.c.l.b16 %v85
    %v126 = vunpack.c.l.b16 %v86
    %v127 = vunpack.c.l.b16 %v87
    %v128 = vunpack.c.l.b16 %v88
    %v129 = vunpack.c.l.b16 %v89
    %v130 = vpack.c.b16 %v115, %v114
    %v131 = vpack.c.b16 %v117, %v116
    %v132 = vpack.c.b16 %v119, %v118
    %v133 = vpack.c.b16 %v121, %v120
    %v134 = vpack.c.b16 %v123, %v122
    %v135 = vpack.c.b16 %v125, %v124
    %v136 = vpack.c.b16 %v127, %v126
    %v137 = vpack.c.b16 %v129, %v128
    %v142 = vunpack.c.l.b16 %v90
    %v143 = vunpack.c.l.b16 %v91
    %v144 = vunpack.c.l.b16 %v92
    %v145 = vunpack.c.l.b16 %v93
    %v146 = vpack.c.b16 %v143, %v142
    %v147 = vpack.c.b16 %v145, %v144
    %vm150 = vcmask 261120
    %v152 = vsel %vm150, %v130, 0
    %v155 = vsel %vm150, %v131, 0
    %v158 = vsel %vm150, %v132, 0
    %v161 = vsel %vm150, %v133, 0
    %v164 = vsel %vm150, %v134, 0
    %v167 = vsel %vm150, %v135, 0
    %v170 = vsel %vm150, %v136, 0
    %v173 = vsel %vm150, %v137, 0
    %175 = vmatprep.subr.bf16.mxu0 0
    %176 = vmatpush1.bf16.msra.mxu0 0
    %177 = vmatprep.subr.bf16.mxu0 0
    %178 = vmatpush1.bf16.msra.mxu0 0
    %179 = vmatprep.subr.bf16.mxu0 0
    %180 = vmatpush1.bf16.msra.mxu0 0
    %181 = vmatprep.subr.bf16.mxu0 0
    %182 = vmatpush1.bf16.msra.mxu0 0
    %183 = vmatprep.subr.bf16.mxu0 0
    %184 = vmatpush1.bf16.msra.mxu0 0
    %185 = vmatprep.subr.bf16.mxu0 0
    %186 = vmatpush1.bf16.msra.mxu0 0
    %187 = vmatprep.subr.bf16.mxu0 0
    %188 = vmatpush1.bf16.msra.mxu0 %v147
    %189 = vmatprep.subr.bf16.mxu0 0
    %190 = vmatpush1.bf16.msra.mxu0 %v146
    %191 = vmatprep.subr.bf16.mxu0 0
    %192 = vmatpush2.bf16.msra.mxu0 0
    %193 = vmatprep.subr.bf16.mxu0 0
    %194 = vmatpush2.bf16.msra.mxu0 0
    %195 = vmatprep.subr.bf16.mxu0 0
    %196 = vmatpush2.bf16.msra.mxu0 0
    %197 = vmatprep.subr.bf16.mxu0 0
    %198 = vmatpush2.bf16.msra.mxu0 0
    %199 = vmatprep.subr.bf16.mxu0 0
    %200 = vmatpush2.bf16.msra.mxu0 0
    %201 = vmatprep.subr.bf16.mxu0 0
    %202 = vmatpush2.bf16.msra.mxu0 0
    %203 = vmatprep.subr.bf16.mxu0 0
    %204 = vmatpush2.bf16.msra.mxu0 0
    %205 = vmatprep.subr.bf16.mxu0 0
    %206 = vmatpush2.bf16.msra.mxu0 0
    %207 = vmatprep.mubr.bf16.mxu0 0
    %208 = vmatmul.mubr.bf16.gmra.mxu0 %v152
    %v209 = vpop.f32.mrf.mxu0
    %v210 = vadd.f32 %v97, %v209
    %v211 = vpop.f32.mrf.mxu0
    %v212 = vpop.f32.mrf.mxu0
    %v213 = vadd.f32 %v97, %v212
    %v214 = vpop.f32.mrf.mxu0
    %215 = vmatprep.mubr.bf16.mxu0 0
    %216 = vmatmul.mubr.bf16.gmra.mxu0 %v155
    %v217 = vpop.f32.mrf.mxu0
    %v218 = vadd.f32 %v97, %v217
    %v219 = vpop.f32.mrf.mxu0
    %v220 = vpop.f32.mrf.mxu0
    %v221 = vadd.f32 %v97, %v220
    %v222 = vpop.f32.mrf.mxu0
    %223 = vmatprep.mubr.bf16.mxu0 0
    %224 = vmatmul.mubr.bf16.gmra.mxu0 %v158
    %v225 = vpop.f32.mrf.mxu0
    %v226 = vadd.f32 %v97, %v225
    %v227 = vpop.f32.mrf.mxu0
    %v228 = vpop.f32.mrf.mxu0
    %v229 = vadd.f32 %v97, %v228
    %v230 = vpop.f32.mrf.mxu0
    %231 = vmatprep.mubr.bf16.mxu0 0
    %232 = vmatmul.mubr.bf16.gmra.mxu0 %v161
    %v233 = vpop.f32.mrf.mxu0
    %v234 = vadd.f32 %v97, %v233
    %v235 = vpop.f32.mrf.mxu0
    %v236 = vpop.f32.mrf.mxu0
    %v237 = vadd.f32 %v97, %v236
    %v238 = vpop.f32.mrf.mxu0
    %239 = vmatprep.mubr.bf16.mxu0 0
    %240 = vmatmul.mubr.bf16.gmra.mxu0 %v164
    %v241 = vpop.f32.mrf.mxu0
    %v242 = vadd.f32 %v97, %v241
    %v243 = vpop.f32.mrf.mxu0
    %v244 = vpop.f32.mrf.mxu0
    %v245 = vadd.f32 %v97, %v244
    %v246 = vpop.f32.mrf.mxu0
    %247 = vmatprep.mubr.bf16.mxu0 0
    %248 = vmatmul.mubr.bf16.gmra.mxu0 %v167
    %v249 = vpop.f32.mrf.mxu0
    %v250 = vadd.f32 %v97, %v249
    %v251 = vpop.f32.mrf.mxu0
    %v252 = vpop.f32.mrf.mxu0
    %v253 = vadd.f32 %v97, %v252
    %v254 = vpop.f32.mrf.mxu0
    %255 = vmatprep.mubr.bf16.mxu0 0
    %256 = vmatmul.mubr.bf16.gmra.mxu0 %v170
    %v257 = vpop.f32.mrf.mxu0
    %v258 = vadd.f32 %v97, %v257
    %v259 = vpop.f32.mrf.mxu0
    %v260 = vpop.f32.mrf.mxu0
    %v261 = vadd.f32 %v97, %v260
    %v262 = vpop.f32.mrf.mxu0
    %263 = vmatprep.mubr.bf16.mxu0 0
    %264 = vmatmul.mubr.bf16.gmra.mxu0 %v173
    %v265 = vpop.f32.mrf.mxu0
    %v266 = vadd.f32 %v97, %v265
    %v267 = vpop.f32.mrf.mxu0
    %v268 = vpop.f32.mrf.mxu0
    %v269 = vadd.f32 %v97, %v268
    %v270 = vpop.f32.mrf.mxu0
    %271 = vdwg.mxu0
    %v272 = vmax.f32 %v210, 0.0
    %v273 = vmax.f32 %v213, 0.0
    %v274 = vmax.f32 %v218, 0.0
    %v275 = vmax.f32 %v221, 0.0
    %v276 = vmax.f32 %v226, 0.0
    %v277 = vmax.f32 %v229, 0.0
    %v278 = vmax.f32 %v234, 0.0
    %v279 = vmax.f32 %v237, 0.0
    %v280 = vmax.f32 %v242, 0.0
    %v281 = vmax.f32 %v245, 0.0
    %v282 = vmax.f32 %v250, 0.0
    %v283 = vmax.f32 %v253, 0.0
    %v284 = vmax.f32 %v258, 0.0
    %v285 = vmax.f32 %v261, 0.0
    %v286 = vmax.f32 %v266, 0.0
    %v287 = vmax.f32 %v269, 0.0
    %v288 = vld [vmem:[%s1] sm:$0xf]
    %v289 = vld [vmem:[%s1 + $0x4] sm:$0xf]
    %v290 = vld [vmem:[%s11] sm:$0xf]
    %v291 = vld [vmem:[%s11 + $0x4] sm:$0xf]
    %v292 = vld [vmem:[%s11 + $0x8] sm:$0xf]
    %v293 = vld [vmem:[%s11 + $0xc] sm:$0xf]
    %v294 = vlaneseq
    %v295 = vshrl.u32 %v294, 7
    %v296 = vsub.s32 0, %v295
    %v297 = vrot.slane %v65, %v296
    %v300 = vunpack.c.l.b16 %v288
    %v301 = vunpack.c.l.b16 %v289
    %v302 = vpack.c.b16 %v301, %v300
    %v307 = vunpack.c.l.b16 %v290
    %v308 = vunpack.c.l.b16 %v291
    %v309 = vunpack.c.l.b16 %v292
    %v310 = vunpack.c.l.b16 %v293
    %v311 = vpack.c.b16 %v308, %v307
    %v312 = vpack.c.b16 %v310, %v309
    %v316 = vsel %vm150, %v302, 0
    %318 = vmatprep.subr.bf16.mxu0 0
    %319 = vmatpush1.bf16.msra.mxu0 0
    %320 = vmatprep.subr.bf16.mxu0 0
    %321 = vmatpush1.bf16.msra.mxu0 0
    %322 = vmatprep.subr.bf16.mxu0 0
    %323 = vmatpush1.bf16.msra.mxu0 0
    %324 = vmatprep.subr.bf16.mxu0 0
    %325 = vmatpush1.bf16.msra.mxu0 0
    %326 = vmatprep.subr.bf16.mxu0 0
    %327 = vmatpush1.bf16.msra.mxu0 0
    %328 = vmatprep.subr.bf16.mxu0 0
    %329 = vmatpush1.bf16.msra.mxu0 0
    %330 = vmatprep.subr.bf16.mxu0 0
    %331 = vmatpush1.bf16.msra.mxu0 %v312
    %332 = vmatprep.subr.bf16.mxu0 0
    %333 = vmatpush1.bf16.msra.mxu0 %v311
    %334 = vmatprep.subr.bf16.mxu0 0
    %335 = vmatpush2.bf16.msra.mxu0 0
    %336 = vmatprep.subr.bf16.mxu0 0
    %337 = vmatpush2.bf16.msra.mxu0 0
    %338 = vmatprep.subr.bf16.mxu0 0
    %339 = vmatpush2.bf16.msra.mxu0 0
    %340 = vmatprep.subr.bf16.mxu0 0
    %341 = vmatpush2.bf16.msra.mxu0 0
    %342 = vmatprep.subr.bf16.mxu0 0
    %343 = vmatpush2.bf16.msra.mxu0 0
    %344 = vmatprep.subr.bf16.mxu0 0
    %345 = vmatpush2.bf16.msra.mxu0 0
    %346 = vmatprep.subr.bf16.mxu0 0
    %347 = vmatpush2.bf16.msra.mxu0 0
    %348 = vmatprep.subr.bf16.mxu0 0
    %349 = vmatpush2.bf16.msra.mxu0 0
    %350 = vmatprep.mubr.bf16.mxu0 0
    %351 = vmatmul.mubr.bf16.gmra.mxu0 %v316
    %v352 = vpop.f32.mrf.mxu0
    %v353 = vadd.f32 %v297, %v352
    %v354 = vpop.f32.mrf.mxu0
    %v355 = vpop.f32.mrf.mxu0
    %v356 = vadd.f32 %v297, %v355
    %v357 = vpop.f32.mrf.mxu0
    %358 = vdwg.mxu0
    %v359 = vmax.f32 %v353, 0.0
    %v360 = vmax.f32 %v356, 0.0
    %v361 = vld [vmem:[%s12] sm:$0xf]
    %v362 = vld [vmem:[%s12 + $0x4] sm:$0xf]
    %v363 = vld [vmem:[%s12 + $0x8] sm:$0xf]
    %v364 = vld [vmem:[%s12 + $0xc] sm:$0xf]
    %v365 = vpack.c.bf16 %v273, %v272
    %v366 = vpack.c.bf16 %v275, %v274
    %v367 = vpack.c.bf16 %v277, %v276
    %v368 = vpack.c.bf16 %v279, %v278
    %v369 = vpack.c.bf16 %v281, %v280
    %v370 = vpack.c.bf16 %v283, %v282
    %v371 = vpack.c.bf16 %v285, %v284
    %v372 = vpack.c.bf16 %v287, %v286
    %v373 = vld [vmem:[%s6] sm:$0xf]
    %v374 = vld [vmem:[%s6 + $0x4] sm:$0xf]
    %v375 = vld [vmem:[%s6 + $0x8] sm:$0xf]
    %v376 = vld [vmem:[%s6 + $0xc] sm:$0xf]
    %v377 = vld [vmem:[%s6 + $0x10] sm:$0xf]
    %v378 = vld [vmem:[%s6 + $0x14] sm:$0xf]
    %v379 = vld [vmem:[%s6 + $0x18] sm:$0xf]
    %v380 = vld [vmem:[%s6 + $0x1c] sm:$0xf]
    %v381 = vld [vmem:[%s6 + $0x20] sm:$0xf]
    %v382 = vld [vmem:[%s6 + $0x24] sm:$0xf]
    %v383 = vld [vmem:[%s6 + $0x28] sm:$0xf]
    %v384 = vld [vmem:[%s6 + $0x2c] sm:$0xf]
    %v385 = vld [vmem:[%s6 + $0x30] sm:$0xf]
    %v386 = vld [vmem:[%s6 + $0x34] sm:$0xf]
    %v387 = vld [vmem:[%s6 + $0x38] sm:$0xf]
    %v388 = vld [vmem:[%s6 + $0x3c] sm:$0xf]
    %v389 = vld [vmem:[%s13] sm:$0xf]
    %v390 = vld [vmem:[%s13 + $0x4] sm:$0xf]
    %v391 = vld [vmem:[%s13 + $0x8] sm:$0xf]
    %v392 = vld [vmem:[%s13 + $0xc] sm:$0xf]
    %v393 = vpack.c.bf16 %v360, %v359
    %v398 = vunpack.c.l.b16 %v389
    %v399 = vunpack.c.l.b16 %v390
    %v400 = vunpack.c.l.b16 %v391
    %v401 = vunpack.c.l.b16 %v392
    %v402 = vpack.c.b16 %v399, %v398
    %v403 = vpack.c.b16 %v401, %v400
    %v407 = vsel %vm150, %v393, 0
    %409 = vmatprep.subr.bf16.mxu0 0
    %410 = vmatpush1.bf16.msra.mxu0 0
    %411 = vmatprep.subr.bf16.mxu0 0
    %412 = vmatpush1.bf16.msra.mxu0 0
    %413 = vmatprep.subr.bf16.mxu0 0
    %414 = vmatpush1.bf16.msra.mxu0 0
    %415 = vmatprep.subr.bf16.mxu0 0
    %416 = vmatpush1.bf16.msra.mxu0 0
    %417 = vmatprep.subr.bf16.mxu0 0
    %418 = vmatpush1.bf16.msra.mxu0 0
    %419 = vmatprep.subr.bf16.mxu0 0
    %420 = vmatpush1.bf16.msra.mxu0 0
    %421 = vmatprep.subr.bf16.mxu0 0
    %422 = vmatpush1.bf16.msra.mxu0 %v403
    %423 = vmatprep.subr.bf16.mxu0 0
    %424 = vmatpush1.bf16.msra.mxu0 %v402
    %425 = vmatprep.subr.bf16.mxu0 0
    %426 = vmatpush2.bf16.msra.mxu0 0
    %427 = vmatprep.subr.bf16.mxu0 0
    %428 = vmatpush2.bf16.msra.mxu0 0
    %429 = vmatprep.subr.bf16.mxu0 0
    %430 = vmatpush2.bf16.msra.mxu0 0
    %431 = vmatprep.subr.bf16.mxu0 0
    %432 = vmatpush2.bf16.msra.mxu0 0
    %433 = vmatprep.subr.bf16.mxu0 0
    %434 = vmatpush2.bf16.msra.mxu0 0
    %435 = vmatprep.subr.bf16.mxu0 0
    %436 = vmatpush2.bf16.msra.mxu0 0
    %437 = vmatprep.subr.bf16.mxu0 0
    %438 = vmatpush2.bf16.msra.mxu0 0
    %439 = vmatprep.subr.bf16.mxu0 0
    %440 = vmatpush2.bf16.msra.mxu0 0
    %441 = vmatprep.mubr.bf16.mxu0 0
    %442 = vmatmul.mubr.bf16.gmra.mxu0 %v407
    %v443 = vpop.f32.mrf.mxu0
    %v444 = vadd.f32 0.0, %v443
    %v445 = vpop.f32.mrf.mxu0
    %v446 = vpop.f32.mrf.mxu0
    %v447 = vadd.f32 0.0, %v446
    %v448 = vpop.f32.mrf.mxu0
    %449 = vdwg.mxu0
    %v450 = vpack.c.bf16 %v447, %v444
    %v467 = vunpack.c.l.b16 %v373
    %v468 = vunpack.c.l.b16 %v374
    %v469 = vunpack.c.l.b16 %v375
    %v470 = vunpack.c.l.b16 %v376
    %v471 = vunpack.c.l.b16 %v377
    %v472 = vunpack.c.l.b16 %v378
    %v473 = vunpack.c.l.b16 %v379
    %v474 = vunpack.c.l.b16 %v380
    %v475 = vunpack.c.l.b16 %v381
    %v476 = vunpack.c.l.b16 %v382
    %v477 = vunpack.c.l.b16 %v383
    %v478 = vunpack.c.l.b16 %v384
    %v479 = vunpack.c.l.b16 %v385
    %v480 = vunpack.c.l.b16 %v386
    %v481 = vunpack.c.l.b16 %v387
    %v482 = vunpack.c.l.b16 %v388
    %v483 = vpack.c.b16 %v468, %v467
    %v484 = vpack.c.b16 %v470, %v469
    %v485 = vpack.c.b16 %v472, %v471
    %v486 = vpack.c.b16 %v474, %v473
    %v487 = vpack.c.b16 %v476, %v475
    %v488 = vpack.c.b16 %v478, %v477
    %v489 = vpack.c.b16 %v480, %v479
    %v490 = vpack.c.b16 %v482, %v481
    %vm491 = vcmask 130048
    %v493 = vsel %vm491, %v483, 0
    %v496 = vsel %vm491, %v484, 0
    %v499 = vsel %vm491, %v485, 0
    %v502 = vsel %vm491, %v486, 0
    %v505 = vsel %vm491, %v487, 0
    %v508 = vsel %vm491, %v488, 0
    %v511 = vsel %vm491, %v489, 0
    %v514 = vsel %vm491, %v490, 0
    %516 = vmatprep.subr.bf16.mxu0 0
    %517 = vmatpush1.bf16.msra.mxu0 0
    %518 = vmatprep.subr.bf16.mxu0 0
    %519 = vmatpush1.bf16.msra.mxu0 0
    %520 = vmatprep.subr.bf16.mxu0 0
    %521 = vmatpush1.bf16.msra.mxu0 0
    %522 = vmatprep.subr.bf16.mxu0 0
    %523 = vmatpush1.bf16.msra.mxu0 0
    %524 = vmatprep.subr.bf16.mxu0 0
    %525 = vmatpush1.bf16.msra.mxu0 0
    %526 = vmatprep.subr.bf16.mxu0 0
    %527 = vmatpush1.bf16.msra.mxu0 0
    %528 = vmatprep.subr.bf16.mxu0 0
    %529 = vmatpush1.bf16.msra.mxu0 0
    %530 = vmatprep.subr.bf16.mxu0 0
    %531 = vmatpush1.bf16.msra.mxu0 %v450
    %532 = vmatprep.subr.bf16.mxu0 0
    %533 = vmatpush2.bf16.msra.mxu0 0
    %534 = vmatprep.subr.bf16.mxu0 0
    %535 = vmatpush2.bf16.msra.mxu0 0
    %536 = vmatprep.subr.bf16.mxu0 0
    %537 = vmatpush2.bf16.msra.mxu0 0
    %538 = vmatprep.subr.bf16.mxu0 0
    %539 = vmatpush2.bf16.msra.mxu0 0
    %540 = vmatprep.subr.bf16.mxu0 0
    %541 = vmatpush2.bf16.msra.mxu0 0
    %542 = vmatprep.subr.bf16.mxu0 0
    %543 = vmatpush2.bf16.msra.mxu0 0
    %544 = vmatprep.subr.bf16.mxu0 0
    %545 = vmatpush2.bf16.msra.mxu0 0
    %546 = vmatprep.subr.bf16.mxu0 0
    %547 = vmatpush2.bf16.msra.mxu0 0
    %548 = vmatprep.mubr.bf16.mxu0 0
    %549 = vmatmul.mubr.bf16.gmra.mxu0 %v493
    %v550 = vpop.f32.mrf.mxu0
    %v551 = vadd.f32 0.0, %v550
    %v552 = vpop.f32.mrf.mxu0
    %v553 = vpop.f32.mrf.mxu0
    %v554 = vadd.f32 0.0, %v553
    %v555 = vpop.f32.mrf.mxu0
    %556 = vmatprep.mubr.bf16.mxu0 0
    %557 = vmatmul.mubr.bf16.gmra.mxu0 %v496
    %v558 = vpop.f32.mrf.mxu0
    %v559 = vadd.f32 0.0, %v558
    %v560 = vpop.f32.mrf.mxu0
    %v561 = vpop.f32.mrf.mxu0
    %v562 = vadd.f32 0.0, %v561
    %v563 = vpop.f32.mrf.mxu0
    %564 = vmatprep.mubr.bf16.mxu0 0
    %565 = vmatmul.mubr.bf16.gmra.mxu0 %v499
    %v566 = vpop.f32.mrf.mxu0
    %v567 = vadd.f32 0.0, %v566
    %v568 = vpop.f32.mrf.mxu0
    %v569 = vpop.f32.mrf.mxu0
    %v570 = vadd.f32 0.0, %v569
    %v571 = vpop.f32.mrf.mxu0
    %572 = vmatprep.mubr.bf16.mxu0 0
    %573 = vmatmul.mubr.bf16.gmra.mxu0 %v502
    %v574 = vpop.f32.mrf.mxu0
    %v575 = vadd.f32 0.0, %v574
    %v576 = vpop.f32.mrf.mxu0
    %v577 = vpop.f32.mrf.mxu0
    %v578 = vadd.f32 0.0, %v577
    %v579 = vpop.f32.mrf.mxu0
    %580 = vmatprep.mubr.bf16.mxu0 0
    %581 = vmatmul.mubr.bf16.gmra.mxu0 %v505
    %v582 = vpop.f32.mrf.mxu0
    %v583 = vadd.f32 0.0, %v582
    %v584 = vpop.f32.mrf.mxu0
    %v585 = vpop.f32.mrf.mxu0
    %v586 = vadd.f32 0.0, %v585
    %v587 = vpop.f32.mrf.mxu0
    %588 = vmatprep.mubr.bf16.mxu0 0
    %589 = vmatmul.mubr.bf16.gmra.mxu0 %v508
    %v590 = vpop.f32.mrf.mxu0
    %v591 = vadd.f32 0.0, %v590
    %v592 = vpop.f32.mrf.mxu0
    %v593 = vpop.f32.mrf.mxu0
    %v594 = vadd.f32 0.0, %v593
    %v595 = vpop.f32.mrf.mxu0
    %596 = vmatprep.mubr.bf16.mxu0 0
    %597 = vmatmul.mubr.bf16.gmra.mxu0 %v511
    %v598 = vpop.f32.mrf.mxu0
    %v599 = vadd.f32 0.0, %v598
    %v600 = vpop.f32.mrf.mxu0
    %v601 = vpop.f32.mrf.mxu0
    %v602 = vadd.f32 0.0, %v601
    %v603 = vpop.f32.mrf.mxu0
    %604 = vmatprep.mubr.bf16.mxu0 0
    %605 = vmatmul.mubr.bf16.gmra.mxu0 %v514
    %v606 = vpop.f32.mrf.mxu0
    %v607 = vadd.f32 0.0, %v606
    %v608 = vpop.f32.mrf.mxu0
    %v609 = vpop.f32.mrf.mxu0
    %v610 = vadd.f32 0.0, %v609
    %v611 = vpop.f32.mrf.mxu0
    %612 = vdwg.mxu0
    %v617 = vunpack.c.l.b16 %v361
    %v618 = vunpack.c.l.b16 %v362
    %v619 = vunpack.c.l.b16 %v363
    %v620 = vunpack.c.l.b16 %v364
    %v621 = vpack.c.b16 %v618, %v617
    %v622 = vpack.c.b16 %v620, %v619
    %v626 = vsel %vm150, %v365, 0
    %v629 = vsel %vm150, %v366, 0
    %v632 = vsel %vm150, %v367, 0
    %v635 = vsel %vm150, %v368, 0
    %v638 = vsel %vm150, %v369, 0
    %v641 = vsel %vm150, %v370, 0
    %v644 = vsel %vm150, %v371, 0
    %v647 = vsel %vm150, %v372, 0
    %649 = vmatprep.subr.bf16.mxu0 0
    %650 = vmatpush1.bf16.msra.mxu0 0
    %651 = vmatprep.subr.bf16.mxu0 0
    %652 = vmatpush1.bf16.msra.mxu0 0
    %653 = vmatprep.subr.bf16.mxu0 0
    %654 = vmatpush1.bf16.msra.mxu0 0
    %655 = vmatprep.subr.bf16.mxu0 0
    %656 = vmatpush1.bf16.msra.mxu0 0
    %657 = vmatprep.subr.bf16.mxu0 0
    %658 = vmatpush1.bf16.msra.mxu0 0
    %659 = vmatprep.subr.bf16.mxu0 0
    %660 = vmatpush1.bf16.msra.mxu0 0
    %661 = vmatprep.subr.bf16.mxu0 0
    %662 = vmatpush1.bf16.msra.mxu0 %v622
    %663 = vmatprep.subr.bf16.mxu0 0
    %664 = vmatpush1.bf16.msra.mxu0 %v621
    %665 = vmatprep.subr.bf16.mxu0 0
    %666 = vmatpush2.bf16.msra.mxu0 0
    %667 = vmatprep.subr.bf16.mxu0 0
    %668 = vmatpush2.bf16.msra.mxu0 0
    %669 = vmatprep.subr.bf16.mxu0 0
    %670 = vmatpush2.bf16.msra.mxu0 0
    %671 = vmatprep.subr.bf16.mxu0 0
    %672 = vmatpush2.bf16.msra.mxu0 0
    %673 = vmatprep.subr.bf16.mxu0 0
    %674 = vmatpush2.bf16.msra.mxu0 0
    %675 = vmatprep.subr.bf16.mxu0 0
    %676 = vmatpush2.bf16.msra.mxu0 0
    %677 = vmatprep.subr.bf16.mxu0 0
    %678 = vmatpush2.bf16.msra.mxu0 0
    %679 = vmatprep.subr.bf16.mxu0 0
    %680 = vmatpush2.bf16.msra.mxu0 0
    %681 = vmatprep.mubr.bf16.mxu0 0
    %682 = vmatmul.mubr.bf16.gmra.mxu0 %v626
    %v683 = vpop.f32.mrf.mxu0
    %v684 = vadd.f32 %v551, %v683
    %v685 = vpop.f32.mrf.mxu0
    %v686 = vpop.f32.mrf.mxu0
    %v687 = vadd.f32 %v554, %v686
    %v688 = vpop.f32.mrf.mxu0
    %689 = vmatprep.mubr.bf16.mxu0 0
    %690 = vmatmul.mubr.bf16.gmra.mxu0 %v629
    %v691 = vpop.f32.mrf.mxu0
    %v692 = vadd.f32 %v559, %v691
    %v693 = vpop.f32.mrf.mxu0
    %v694 = vpop.f32.mrf.mxu0
    %v695 = vadd.f32 %v562, %v694
    %v696 = vpop.f32.mrf.mxu0
    %697 = vmatprep.mubr.bf16.mxu0 0
    %698 = vmatmul.mubr.bf16.gmra.mxu0 %v632
    %v699 = vpop.f32.mrf.mxu0
    %v700 = vadd.f32 %v567, %v699
    %v701 = vpop.f32.mrf.mxu0
    %v702 = vpop.f32.mrf.mxu0
    %v703 = vadd.f32 %v570, %v702
    %v704 = vpop.f32.mrf.mxu0
    %705 = vmatprep.mubr.bf16.mxu0 0
    %706 = vmatmul.mubr.bf16.gmra.mxu0 %v635
    %v707 = vpop.f32.mrf.mxu0
    %v708 = vadd.f32 %v575, %v707
    %v709 = vpop.f32.mrf.mxu0
    %v710 = vpop.f32.mrf.mxu0
    %v711 = vadd.f32 %v578, %v710
    %v712 = vpop.f32.mrf.mxu0
    %713 = vmatprep.mubr.bf16.mxu0 0
    %714 = vmatmul.mubr.bf16.gmra.mxu0 %v638
    %v715 = vpop.f32.mrf.mxu0
    %v716 = vadd.f32 %v583, %v715
    %v717 = vpop.f32.mrf.mxu0
    %v718 = vpop.f32.mrf.mxu0
    %v719 = vadd.f32 %v586, %v718
    %v720 = vpop.f32.mrf.mxu0
    %721 = vmatprep.mubr.bf16.mxu0 0
    %722 = vmatmul.mubr.bf16.gmra.mxu0 %v641
    %v723 = vpop.f32.mrf.mxu0
    %v724 = vadd.f32 %v591, %v723
    %v725 = vpop.f32.mrf.mxu0
    %v726 = vpop.f32.mrf.mxu0
    %v727 = vadd.f32 %v594, %v726
    %v728 = vpop.f32.mrf.mxu0
    %729 = vmatprep.mubr.bf16.mxu0 0
    %730 = vmatmul.mubr.bf16.gmra.mxu0 %v644
    %v731 = vpop.f32.mrf.mxu0
    %v732 = vadd.f32 %v599, %v731
    %v733 = vpop.f32.mrf.mxu0
    %v734 = vpop.f32.mrf.mxu0
    %v735 = vadd.f32 %v602, %v734
    %v736 = vpop.f32.mrf.mxu0
    %737 = vmatprep.mubr.bf16.mxu0 0
    %738 = vmatmul.mubr.bf16.gmra.mxu0 %v647
    %v739 = vpop.f32.mrf.mxu0
    %v740 = vadd.f32 %v607, %v739
    %v741 = vpop.f32.mrf.mxu0
    %v742 = vpop.f32.mrf.mxu0
    %v743 = vadd.f32 %v610, %v742
    %v744 = vpop.f32.mrf.mxu0
    %745 = vdwg.mxu0
    %v746 = vlaneseq
    %v747 = vshrl.u32 %v746, 7
    %v748 = vsub.s32 0, %v747
    %v749 = vrot.slane %v66, %v748
    %v750 = vadd.f32 %v684, %v749
    %v751 = vadd.f32 %v687, %v749
    %v752 = vadd.f32 %v692, %v749
    %v753 = vadd.f32 %v695, %v749
    %v754 = vadd.f32 %v700, %v749
    %v755 = vadd.f32 %v703, %v749
    %v756 = vadd.f32 %v708, %v749
    %v757 = vadd.f32 %v711, %v749
    %v758 = vadd.f32 %v716, %v749
    %v759 = vadd.f32 %v719, %v749
    %v760 = vadd.f32 %v724, %v749
    %v761 = vadd.f32 %v727, %v749
    %v762 = vadd.f32 %v732, %v749
    %v763 = vadd.f32 %v735, %v749
    %v764 = vadd.f32 %v740, %v749
    %v765 = vadd.f32 %v743, %v749
    %v766 = vmax.f32 %v750, 0.0
    %v767 = vmax.f32 %v751, 0.0
    %v768 = vmax.f32 %v752, 0.0
    %v769 = vmax.f32 %v753, 0.0
    %v770 = vmax.f32 %v754, 0.0
    %v771 = vmax.f32 %v755, 0.0
    %v772 = vmax.f32 %v756, 0.0
    %v773 = vmax.f32 %v757, 0.0
    %v774 = vmax.f32 %v758, 0.0
    %v775 = vmax.f32 %v759, 0.0
    %v776 = vmax.f32 %v760, 0.0
    %v777 = vmax.f32 %v761, 0.0
    %v778 = vmax.f32 %v762, 0.0
    %v779 = vmax.f32 %v763, 0.0
    %v780 = vmax.f32 %v764, 0.0
    %v781 = vmax.f32 %v765, 0.0
    %v782 = vld [vmem:[%s14] sm:$0xf]
    %v783 = vld [vmem:[%s14 + $0x4] sm:$0xf]
    %v784 = vld [vmem:[%s14 + $0x8] sm:$0xf]
    %v785 = vld [vmem:[%s14 + $0xc] sm:$0xf]
    %v786 = vpack.c.bf16 %v767, %v766
    %v787 = vpack.c.bf16 %v769, %v768
    %v788 = vpack.c.bf16 %v771, %v770
    %v789 = vpack.c.bf16 %v773, %v772
    %v790 = vpack.c.bf16 %v775, %v774
    %v791 = vpack.c.bf16 %v777, %v776
    %v792 = vpack.c.bf16 %v779, %v778
    %v793 = vpack.c.bf16 %v781, %v780
    %v794 = vlaneseq
    %v795 = vshrl.u32 %v794, 7
    %v796 = vsub.s32 0, %v795
    %v797 = vrot.slane %v68, %v796
    %v802 = vunpack.c.l.b16 %v782
    %v803 = vunpack.c.l.b16 %v783
    %v804 = vunpack.c.l.b16 %v784
    %v805 = vunpack.c.l.b16 %v785
    %v806 = vpack.c.b16 %v803, %v802
    %v807 = vpack.c.b16 %v805, %v804
    %v811 = vsel %vm150, %v786, 0
    %v814 = vsel %vm150, %v787, 0
    %v817 = vsel %vm150, %v788, 0
    %v820 = vsel %vm150, %v789, 0
    %v823 = vsel %vm150, %v790, 0
    %v826 = vsel %vm150, %v791, 0
    %v829 = vsel %vm150, %v792, 0
    %v832 = vsel %vm150, %v793, 0
    %834 = vmatprep.subr.bf16.mxu0 0
    %835 = vmatpush1.bf16.msra.mxu0 0
    %836 = vmatprep.subr.bf16.mxu0 0
    %837 = vmatpush1.bf16.msra.mxu0 0
    %838 = vmatprep.subr.bf16.mxu0 0
    %839 = vmatpush1.bf16.msra.mxu0 0
    %840 = vmatprep.subr.bf16.mxu0 0
    %841 = vmatpush1.bf16.msra.mxu0 0
    %842 = vmatprep.subr.bf16.mxu0 0
    %843 = vmatpush1.bf16.msra.mxu0 0
    %844 = vmatprep.subr.bf16.mxu0 0
    %845 = vmatpush1.bf16.msra.mxu0 0
    %846 = vmatprep.subr.bf16.mxu0 0
    %847 = vmatpush1.bf16.msra.mxu0 %v807
    %848 = vmatprep.subr.bf16.mxu0 0
    %849 = vmatpush1.bf16.msra.mxu0 %v806
    %850 = vmatprep.subr.bf16.mxu0 0
    %851 = vmatpush2.bf16.msra.mxu0 0
    %852 = vmatprep.subr.bf16.mxu0 0
    %853 = vmatpush2.bf16.msra.mxu0 0
    %854 = vmatprep.subr.bf16.mxu0 0
    %855 = vmatpush2.bf16.msra.mxu0 0
    %856 = vmatprep.subr.bf16.mxu0 0
    %857 = vmatpush2.bf16.msra.mxu0 0
    %858 = vmatprep.subr.bf16.mxu0 0
    %859 = vmatpush2.bf16.msra.mxu0 0
    %860 = vmatprep.subr.bf16.mxu0 0
    %861 = vmatpush2.bf16.msra.mxu0 0
    %862 = vmatprep.subr.bf16.mxu0 0
    %863 = vmatpush2.bf16.msra.mxu0 0
    %864 = vmatprep.subr.bf16.mxu0 0
    %865 = vmatpush2.bf16.msra.mxu0 0
    %866 = vmatprep.mubr.bf16.mxu0 0
    %867 = vmatmul.mubr.bf16.gmra.mxu0 %v811
    %v868 = vpop.f32.mrf.mxu0
    %v869 = vadd.f32 %v797, %v868
    %v870 = vpop.f32.mrf.mxu0
    %v871 = vpop.f32.mrf.mxu0
    %v872 = vadd.f32 %v797, %v871
    %v873 = vpop.f32.mrf.mxu0
    %874 = vmatprep.mubr.bf16.mxu0 0
    %875 = vmatmul.mubr.bf16.gmra.mxu0 %v814
    %v876 = vpop.f32.mrf.mxu0
    %v877 = vadd.f32 %v797, %v876
    %v878 = vpop.f32.mrf.mxu0
    %v879 = vpop.f32.mrf.mxu0
    %v880 = vadd.f32 %v797, %v879
    %v881 = vpop.f32.mrf.mxu0
    %882 = vmatprep.mubr.bf16.mxu0 0
    %883 = vmatmul.mubr.bf16.gmra.mxu0 %v817
    %v884 = vpop.f32.mrf.mxu0
    %v885 = vadd.f32 %v797, %v884
    %v886 = vpop.f32.mrf.mxu0
    %v887 = vpop.f32.mrf.mxu0
    %v888 = vadd.f32 %v797, %v887
    %v889 = vpop.f32.mrf.mxu0
    %890 = vmatprep.mubr.bf16.mxu0 0
    %891 = vmatmul.mubr.bf16.gmra.mxu0 %v820
    %v892 = vpop.f32.mrf.mxu0
    %v893 = vadd.f32 %v797, %v892
    %v894 = vpop.f32.mrf.mxu0
    %v895 = vpop.f32.mrf.mxu0
    %v896 = vadd.f32 %v797, %v895
    %v897 = vpop.f32.mrf.mxu0
    %898 = vmatprep.mubr.bf16.mxu0 0
    %899 = vmatmul.mubr.bf16.gmra.mxu0 %v823
    %v900 = vpop.f32.mrf.mxu0
    %v901 = vadd.f32 %v797, %v900
    %v902 = vpop.f32.mrf.mxu0
    %v903 = vpop.f32.mrf.mxu0
    %v904 = vadd.f32 %v797, %v903
    %v905 = vpop.f32.mrf.mxu0
    %906 = vmatprep.mubr.bf16.mxu0 0
    %907 = vmatmul.mubr.bf16.gmra.mxu0 %v826
    %v908 = vpop.f32.mrf.mxu0
    %v909 = vadd.f32 %v797, %v908
    %v910 = vpop.f32.mrf.mxu0
    %v911 = vpop.f32.mrf.mxu0
    %v912 = vadd.f32 %v797, %v911
    %v913 = vpop.f32.mrf.mxu0
    %914 = vmatprep.mubr.bf16.mxu0 0
    %915 = vmatmul.mubr.bf16.gmra.mxu0 %v829
    %v916 = vpop.f32.mrf.mxu0
    %v917 = vadd.f32 %v797, %v916
    %v918 = vpop.f32.mrf.mxu0
    %v919 = vpop.f32.mrf.mxu0
    %v920 = vadd.f32 %v797, %v919
    %v921 = vpop.f32.mrf.mxu0
    %922 = vmatprep.mubr.bf16.mxu0 0
    %923 = vmatmul.mubr.bf16.gmra.mxu0 %v832
    %v924 = vpop.f32.mrf.mxu0
    %v925 = vadd.f32 %v797, %v924
    %v926 = vpop.f32.mrf.mxu0
    %v927 = vpop.f32.mrf.mxu0
    %v928 = vadd.f32 %v797, %v927
    %v929 = vpop.f32.mrf.mxu0
    %930 = vdwg.mxu0
    %v931 = vtanh.pop %v869
    %v932 = vtanh.pop %v872
    %v933 = vtanh.pop %v877
    %v934 = vtanh.pop %v880
    %v935 = vtanh.pop %v885
    %v936 = vtanh.pop %v888
    %v937 = vtanh.pop %v893
    %v938 = vtanh.pop %v896
    %v939 = vtanh.pop %v901
    %v940 = vtanh.pop %v904
    %v941 = vtanh.pop %v909
    %v942 = vtanh.pop %v912
    %v943 = vtanh.pop %v917
    %v944 = vtanh.pop %v920
    %v945 = vtanh.pop %v925
    %v946 = vtanh.pop %v928
    %v947 = vld [vmem:[%s15] sm:$0xf]
    %v948 = vld [vmem:[%s15 + $0x4] sm:$0xf]
    %v949 = vpack.c.bf16 %v932, %v931
    %v950 = vpack.c.bf16 %v934, %v933
    %v951 = vpack.c.bf16 %v936, %v935
    %v952 = vpack.c.bf16 %v938, %v937
    %v953 = vpack.c.bf16 %v940, %v939
    %v954 = vpack.c.bf16 %v942, %v941
    %v955 = vpack.c.bf16 %v944, %v943
    %v956 = vpack.c.bf16 %v946, %v945
    %v957 = vlaneseq
    %v958 = vshrl.u32 %v957, 7
    %v959 = vsub.s32 0, %v958
    %v960 = vrot.slane %v69, %v959
    %v963 = vunpack.c.l.b16 %v947
    %v964 = vunpack.c.l.b16 %v948
    %v965 = vpack.c.b16 %v964, %v963
    %v968 = vsel %vm491, %v949, 0
    %v971 = vsel %vm491, %v950, 0
    %v974 = vsel %vm491, %v951, 0
    %v977 = vsel %vm491, %v952, 0
    %v980 = vsel %vm491, %v953, 0
    %v983 = vsel %vm491, %v954, 0
    %v986 = vsel %vm491, %v955, 0
    %v989 = vsel %vm491, %v956, 0
    %991 = vmatprep.subr.bf16.mxu0 0
    %992 = vmatpush1.bf16.msra.mxu0 0
    %993 = vmatprep.subr.bf16.mxu0 0
    %994 = vmatpush1.bf16.msra.mxu0 0
    %995 = vmatprep.subr.bf16.mxu0 0
    %996 = vmatpush1.bf16.msra.mxu0 0
    %997 = vmatprep.subr.bf16.mxu0 0
    %998 = vmatpush1.bf16.msra.mxu0 0
    %999 = vmatprep.subr.bf16.mxu0 0
    %1000 = vmatpush1.bf16.msra.mxu0 0
    %1001 = vmatprep.subr.bf16.mxu0 0
    %1002 = vmatpush1.bf16.msra.mxu0 0
    %1003 = vmatprep.subr.bf16.mxu0 0
    %1004 = vmatpush1.bf16.msra.mxu0 0
    %1005 = vmatprep.subr.bf16.mxu0 0
    %1006 = vmatpush1.bf16.msra.mxu0 %v965
    %1007 = vmatprep.subr.bf16.mxu0 0
    %1008 = vmatpush2.bf16.msra.mxu0 0
    %1009 = vmatprep.subr.bf16.mxu0 0
    %1010 = vmatpush2.bf16.msra.mxu0 0
    %1011 = vmatprep.subr.bf16.mxu0 0
    %1012 = vmatpush2.bf16.msra.mxu0 0
    %1013 = vmatprep.subr.bf16.mxu0 0
    %1014 = vmatpush2.bf16.msra.mxu0 0
    %1015 = vmatprep.subr.bf16.mxu0 0
    %1016 = vmatpush2.bf16.msra.mxu0 0
    %1017 = vmatprep.subr.bf16.mxu0 0
    %1018 = vmatpush2.bf16.msra.mxu0 0
    %1019 = vmatprep.subr.bf16.mxu0 0
    %1020 = vmatpush2.bf16.msra.mxu0 0
    %1021 = vmatprep.subr.bf16.mxu0 0
    %1022 = vmatpush2.bf16.msra.mxu0 0
    %1023 = vmatprep.mubr.bf16.mxu0 0
    %1024 = vmatmul.mubr.bf16.gmra.mxu0 %v968
    %v1025 = vpop.f32.mrf.mxu0
    %v1026 = vadd.f32 %v960, %v1025
    %v1027 = vpop.f32.mrf.mxu0
    %v1028 = vpop.f32.mrf.mxu0
    %v1029 = vadd.f32 %v960, %v1028
    %v1030 = vpop.f32.mrf.mxu0
    %1031 = vmatprep.mubr.bf16.mxu0 0
    %1032 = vmatmul.mubr.bf16.gmra.mxu0 %v971
    %v1033 = vpop.f32.mrf.mxu0
    %v1034 = vadd.f32 %v960, %v1033
    %v1035 = vpop.f32.mrf.mxu0
    %v1036 = vpop.f32.mrf.mxu0
    %v1037 = vadd.f32 %v960, %v1036
    %v1038 = vpop.f32.mrf.mxu0
    %1039 = vmatprep.mubr.bf16.mxu0 0
    %1040 = vmatmul.mubr.bf16.gmra.mxu0 %v974
    %v1041 = vpop.f32.mrf.mxu0
    %v1042 = vadd.f32 %v960, %v1041
    %v1043 = vpop.f32.mrf.mxu0
    %v1044 = vpop.f32.mrf.mxu0
    %v1045 = vadd.f32 %v960, %v1044
    %v1046 = vpop.f32.mrf.mxu0
    %1047 = vmatprep.mubr.bf16.mxu0 0
    %1048 = vmatmul.mubr.bf16.gmra.mxu0 %v977
    %v1049 = vpop.f32.mrf.mxu0
    %v1050 = vadd.f32 %v960, %v1049
    %v1051 = vpop.f32.mrf.mxu0
    %v1052 = vpop.f32.mrf.mxu0
    %v1053 = vadd.f32 %v960, %v1052
    %v1054 = vpop.f32.mrf.mxu0
    %1055 = vmatprep.mubr.bf16.mxu0 0
    %1056 = vmatmul.mubr.bf16.gmra.mxu0 %v980
    %v1057 = vpop.f32.mrf.mxu0
    %v1058 = vadd.f32 %v960, %v1057
    %v1059 = vpop.f32.mrf.mxu0
    %v1060 = vpop.f32.mrf.mxu0
    %v1061 = vadd.f32 %v960, %v1060
    %v1062 = vpop.f32.mrf.mxu0
    %1063 = vmatprep.mubr.bf16.mxu0 0
    %1064 = vmatmul.mubr.bf16.gmra.mxu0 %v983
    %v1065 = vpop.f32.mrf.mxu0
    %v1066 = vadd.f32 %v960, %v1065
    %v1067 = vpop.f32.mrf.mxu0
    %v1068 = vpop.f32.mrf.mxu0
    %v1069 = vadd.f32 %v960, %v1068
    %v1070 = vpop.f32.mrf.mxu0
    %1071 = vmatprep.mubr.bf16.mxu0 0
    %1072 = vmatmul.mubr.bf16.gmra.mxu0 %v986
    %v1073 = vpop.f32.mrf.mxu0
    %v1074 = vadd.f32 %v960, %v1073
    %v1075 = vpop.f32.mrf.mxu0
    %v1076 = vpop.f32.mrf.mxu0
    %v1077 = vadd.f32 %v960, %v1076
    %v1078 = vpop.f32.mrf.mxu0
    %1079 = vmatprep.mubr.bf16.mxu0 0
    %1080 = vmatmul.mubr.bf16.gmra.mxu0 %v989
    %v1081 = vpop.f32.mrf.mxu0
    %v1082 = vadd.f32 %v960, %v1081
    %v1083 = vpop.f32.mrf.mxu0
    %v1084 = vpop.f32.mrf.mxu0
    %v1085 = vadd.f32 %v960, %v1084
    %v1086 = vpop.f32.mrf.mxu0
    %1087 = vdwg.mxu0
    %v1088 = vld [vmem:[%s7] sm:$0xf]
    %v1089 = vld [vmem:[%s7 + $0x4] sm:$0xf]
    %v1090 = vld [vmem:[%s7 + $0x8] sm:$0xf]
    %v1091 = vld [vmem:[%s7 + $0xc] sm:$0xf]
    %v1092 = vld [vmem:[%s7 + $0x10] sm:$0xf]
    %v1093 = vld [vmem:[%s7 + $0x14] sm:$0xf]
    %v1094 = vld [vmem:[%s7 + $0x18] sm:$0xf]
    %v1095 = vld [vmem:[%s7 + $0x1c] sm:$0xf]
    %v1096 = vld [vmem:[%s7 + $0x20] sm:$0xf]
    %v1097 = vld [vmem:[%s7 + $0x24] sm:$0xf]
    %v1098 = vld [vmem:[%s7 + $0x28] sm:$0xf]
    %v1099 = vld [vmem:[%s7 + $0x2c] sm:$0xf]
    %v1100 = vld [vmem:[%s7 + $0x30] sm:$0xf]
    %v1101 = vld [vmem:[%s7 + $0x34] sm:$0xf]
    %v1102 = vld [vmem:[%s7 + $0x38] sm:$0xf]
    %v1103 = vld [vmem:[%s7 + $0x3c] sm:$0xf]
    %v1104 = vunpack.c.l.bf16 %v1088
    %v1105 = vunpack.c.l.bf16 %v1089
    %v1106 = vunpack.c.l.bf16 %v1090
    %v1107 = vunpack.c.l.bf16 %v1091
    %v1108 = vunpack.c.l.bf16 %v1092
    %v1109 = vunpack.c.l.bf16 %v1093
    %v1110 = vunpack.c.l.bf16 %v1094
    %v1111 = vunpack.c.l.bf16 %v1095
    %v1112 = vunpack.c.l.bf16 %v1096
    %v1113 = vunpack.c.l.bf16 %v1097
    %v1114 = vunpack.c.l.bf16 %v1098
    %v1115 = vunpack.c.l.bf16 %v1099
    %v1116 = vunpack.c.l.bf16 %v1100
    %v1117 = vunpack.c.l.bf16 %v1101
    %v1118 = vunpack.c.l.bf16 %v1102
    %v1119 = vunpack.c.l.bf16 %v1103
    %1121 = vset.pattern.permute.xlu0 0
    %1122 = vperm.xlu0 %1121, %v1026
    %v1123 = vpop.permute.xlu0 %1122
    %1126 = vset.pattern.permute.xlu0 0
    %1127 = vperm.xlu0 %1126, %v1029
    %v1128 = vpop.permute.xlu0 %1127
    %1131 = vset.pattern.permute.xlu0 0
    %1132 = vperm.xlu0 %1131, %v1034
    %v1133 = vpop.permute.xlu0 %1132
    %1136 = vset.pattern.permute.xlu0 0
    %1137 = vperm.xlu0 %1136, %v1037
    %v1138 = vpop.permute.xlu0 %1137
    %1141 = vset.pattern.permute.xlu0 0
    %1142 = vperm.xlu0 %1141, %v1042
    %v1143 = vpop.permute.xlu0 %1142
    %1146 = vset.pattern.permute.xlu0 0
    %1147 = vperm.xlu0 %1146, %v1045
    %v1148 = vpop.permute.xlu0 %1147
    %1151 = vset.pattern.permute.xlu0 0
    %1152 = vperm.xlu0 %1151, %v1050
    %v1153 = vpop.permute.xlu0 %1152
    %1156 = vset.pattern.permute.xlu0 0
    %1157 = vperm.xlu0 %1156, %v1053
    %v1158 = vpop.permute.xlu0 %1157
    %1161 = vset.pattern.permute.xlu0 0
    %1162 = vperm.xlu0 %1161, %v1058
    %v1163 = vpop.permute.xlu0 %1162
    %1166 = vset.pattern.permute.xlu0 0
    %1167 = vperm.xlu0 %1166, %v1061
    %v1168 = vpop.permute.xlu0 %1167
    %1171 = vset.pattern.permute.xlu0 0
    %1172 = vperm.xlu0 %1171, %v1066
    %v1173 = vpop.permute.xlu0 %1172
    %1176 = vset.pattern.permute.xlu0 0
    %1177 = vperm.xlu0 %1176, %v1069
    %v1178 = vpop.permute.xlu0 %1177
    %1181 = vset.pattern.permute.xlu0 0
    %1182 = vperm.xlu0 %1181, %v1074
    %v1183 = vpop.permute.xlu0 %1182
    %1186 = vset.pattern.permute.xlu0 0
    %1187 = vperm.xlu0 %1186, %v1077
    %v1188 = vpop.permute.xlu0 %1187
    %1191 = vset.pattern.permute.xlu0 0
    %1192 = vperm.xlu0 %1191, %v1082
    %v1193 = vpop.permute.xlu0 %1192
    %1196 = vset.pattern.permute.xlu0 0
    %1197 = vperm.xlu0 %1196, %v1085
    %v1198 = vpop.permute.xlu0 %1197
    %v1200 = vmul.f32 %v1104, %v1123
    %v1201 = vmul.f32 %v1105, %v1128
    %v1202 = vmul.f32 %v1106, %v1133
    %v1203 = vmul.f32 %v1107, %v1138
    %v1204 = vmul.f32 %v1108, %v1143
    %v1205 = vmul.f32 %v1109, %v1148
    %v1206 = vmul.f32 %v1110, %v1153
    %v1207 = vmul.f32 %v1111, %v1158
    %v1208 = vmul.f32 %v1112, %v1163
    %v1209 = vmul.f32 %v1113, %v1168
    %v1210 = vmul.f32 %v1114, %v1173
    %v1211 = vmul.f32 %v1115, %v1178
    %v1212 = vmul.f32 %v1116, %v1183
    %v1213 = vmul.f32 %v1117, %v1188
    %v1214 = vmul.f32 %v1118, %v1193
    %v1215 = vmul.f32 %v1119, %v1198
    %v1216 = vpack.c.bf16 %v1201, %v1200
    %v1217 = vpack.c.bf16 %v1203, %v1202
    %v1218 = vpack.c.bf16 %v1205, %v1204
    %v1219 = vpack.c.bf16 %v1207, %v1206
    %v1220 = vpack.c.bf16 %v1209, %v1208
    %v1221 = vpack.c.bf16 %v1211, %v1210
    %v1222 = vpack.c.bf16 %v1213, %v1212
    %v1223 = vpack.c.bf16 %v1215, %v1214
    %v1226 = vunpack.c.l.b16 %v70
    %v1227 = vunpack.c.l.b16 %v71
    %v1228 = vpack.c.b16 %v1227, %v1226
    %1230 = vmatprep.subr.bf16.mxu0 0
    %1231 = vmatpush1.bf16.msra.mxu0 %v1223
    %1232 = vmatprep.subr.bf16.mxu0 0
    %1233 = vmatpush1.bf16.msra.mxu0 %v1222
    %1234 = vmatprep.subr.bf16.mxu0 0
    %1235 = vmatpush1.bf16.msra.mxu0 %v1221
    %1236 = vmatprep.subr.bf16.mxu0 0
    %1237 = vmatpush1.bf16.msra.mxu0 %v1220
    %1238 = vmatprep.subr.bf16.mxu0 0
    %1239 = vmatpush1.bf16.msra.mxu0 %v1219
    %1240 = vmatprep.subr.bf16.mxu0 0
    %1241 = vmatpush1.bf16.msra.mxu0 %v1218
    %1242 = vmatprep.subr.bf16.mxu0 0
    %1243 = vmatpush1.bf16.msra.mxu0 %v1217
    %1244 = vmatprep.subr.bf16.mxu0 0
    %1245 = vmatpush1.bf16.msra.mxu0 %v1216
    %1246 = vmatprep.subr.bf16.mxu0 0
    %1247 = vmatpush2.bf16.msra.mxu0 0
    %1248 = vmatprep.subr.bf16.mxu0 0
    %1249 = vmatpush2.bf16.msra.mxu0 0
    %1250 = vmatprep.subr.bf16.mxu0 0
    %1251 = vmatpush2.bf16.msra.mxu0 0
    %1252 = vmatprep.subr.bf16.mxu0 0
    %1253 = vmatpush2.bf16.msra.mxu0 0
    %1254 = vmatprep.subr.bf16.mxu0 0
    %1255 = vmatpush2.bf16.msra.mxu0 0
    %1256 = vmatprep.subr.bf16.mxu0 0
    %1257 = vmatpush2.bf16.msra.mxu0 0
    %1258 = vmatprep.subr.bf16.mxu0 0
    %1259 = vmatpush2.bf16.msra.mxu0 0
    %1260 = vmatprep.subr.bf16.mxu0 0
    %1261 = vmatpush2.bf16.msra.mxu0 0
    %1262 = vmatprep.mubr.bf16.mxu0 0
    %1263 = vmatmul.mubr.bf16.gmra.mxu0 %v1228
    %v1264 = vpop.f32.mrf.mxu0
    %v1265 = vadd.f32 0.0, %v1264
    %v1266 = vpop.f32.mrf.mxu0
    %v1267 = vpop.f32.mrf.mxu0
    %v1268 = vadd.f32 0.0, %v1267
    %v1269 = vpop.f32.mrf.mxu0
    %1270 = vdwg.mxu0
    %v1271 = vld [vmem:[%s2] sm:$0xff]
    %v1272 = vld [vmem:[%s2 + $0x8] sm:$0xff]
    %vm1273 = vcmp.gt.f32.partialorder %v1271, 0.5
    %vm1274 = vcmp.gt.f32.partialorder %v1272, 0.5
    %v1275 = vsel %vm1273, -inf, %v1265
    %v1276 = vsel %vm1274, -inf, %v1268
    %vm1277 = vcmask 64512
    %v1278 = vsel %vm1277, %v1275, -inf
    %1279 = vmax.xlane.f32.xlu0 %v1278
    %v1280 = vpop.xlane.xlu0 %1279
    %v1281 = vsel %vm1277, %v1276, -inf
    %1282 = vmax.xlane.f32.xlu0 %v1281
    %v1283 = vpop.xlane.xlu0 %1282
    %v1284 = vsub.f32 %v1275, %v1280
    %v1285 = vsub.f32 %v1276, %v1283
    %v1286 = vmul.f32 %v1284, 1.442695
    %v1287 = vpow.pop %v1286
    %v1288 = vmul.f32 %v1285, 1.442695
    %v1289 = vpow.pop %v1288
    %v1290 = vsel %vm1277, %v1287, 0.0
    %1291 = vadd.xlane.f32.xlu0 %v1290
    %v1292 = vpop.xlane.xlu0 %1291
    %v1293 = vsel %vm1277, %v1289, 0.0
    %1294 = vadd.xlane.f32.xlu0 %v1293
    %v1295 = vpop.xlane.xlu0 %1294
    %v1296 = vrcp.pop %v1292
    %v1297 = vrcp.pop %v1295
    %v1298 = vmul.f32 %v1287, %v1296
    %v1299 = vmul.f32 %v1289, %v1297
    %v1300 = vld [vmem:[%s8] sm:$0xf]
    %v1301 = vpack.c.bf16 %v1299, %v1298
    %v1303 = vsel %vm1277, %v1301, 0
    %vm1305 = vcmask 1043456
    %v1307 = vsel %vm1305, %v1300, 0
    %1309 = vmatprep.subr.bf16.mxu0 0
    %1310 = vmatpush1.bf16.msra.mxu0 0
    %1311 = vmatprep.subr.bf16.mxu0 0
    %1312 = vmatpush1.bf16.msra.mxu0 0
    %1313 = vmatprep.subr.bf16.mxu0 0
    %1314 = vmatpush1.bf16.msra.mxu0 0
    %1315 = vmatprep.subr.bf16.mxu0 0
    %1316 = vmatpush1.bf16.msra.mxu0 0
    %1317 = vmatprep.subr.bf16.mxu0 0
    %1318 = vmatpush1.bf16.msra.mxu0 0
    %1319 = vmatprep.subr.bf16.mxu0 0
    %1320 = vmatpush1.bf16.msra.mxu0 0
    %1321 = vmatprep.subr.bf16.mxu0 0
    %1322 = vmatpush1.bf16.msra.mxu0 0
    %1323 = vmatprep.subr.bf16.mxu0 0
    %1324 = vmatpush1.bf16.msra.mxu0 %v1307
    %1325 = vmatprep.subr.bf16.mxu0 0
    %1326 = vmatpush2.bf16.msra.mxu0 0
    %1327 = vmatprep.subr.bf16.mxu0 0
    %1328 = vmatpush2.bf16.msra.mxu0 0
    %1329 = vmatprep.subr.bf16.mxu0 0
    %1330 = vmatpush2.bf16.msra.mxu0 0
    %1331 = vmatprep.subr.bf16.mxu0 0
    %1332 = vmatpush2.bf16.msra.mxu0 0
    %1333 = vmatprep.subr.bf16.mxu0 0
    %1334 = vmatpush2.bf16.msra.mxu0 0
    %1335 = vmatprep.subr.bf16.mxu0 0
    %1336 = vmatpush2.bf16.msra.mxu0 0
    %1337 = vmatprep.subr.bf16.mxu0 0
    %1338 = vmatpush2.bf16.msra.mxu0 0
    %1339 = vmatprep.subr.bf16.mxu0 0
    %1340 = vmatpush2.bf16.msra.mxu0 0
    %1341 = vmatprep.mubr.bf16.mxu0 0
    %1342 = vmatmul.mubr.bf16.gmra.mxu0 %v1303
    %v1343 = vpop.f32.mrf.mxu0
    %v1344 = vadd.f32 0.0, %v1343
    %v1345 = vpop.f32.mrf.mxu0
    %v1346 = vpop.f32.mrf.mxu0
    %v1347 = vadd.f32 0.0, %v1346
    %v1348 = vpop.f32.mrf.mxu0
    %1349 = vdwg.mxu0
    %v1350 = vunpack.c.l.bf16 %v70
    %v1351 = vunpack.c.l.bf16 %v71
    %v1352 = vmul.f32 %v1350, %v1344
    %v1353 = vmul.f32 %v1351, %v1347
    %v1354 = vpack.c.bf16 %v1353, %v1352
    %1355 = vmatprep.subr.bf16.mxu0 0
    %1356 = vmatpush1.bf16.msra.mxu0 %v793
    %1357 = vmatprep.subr.bf16.mxu0 0
    %1358 = vmatpush1.bf16.msra.mxu0 %v792
    %1359 = vmatprep.subr.bf16.mxu0 0
    %1360 = vmatpush1.bf16.msra.mxu0 %v791
    %1361 = vmatprep.subr.bf16.mxu0 0
    %1362 = vmatpush1.bf16.msra.mxu0 %v790
    %1363 = vmatprep.subr.bf16.mxu0 0
    %1364 = vmatpush1.bf16.msra.mxu0 %v789
    %1365 = vmatprep.subr.bf16.mxu0 0
    %1366 = vmatpush1.bf16.msra.mxu0 %v788
    %1367 = vmatprep.subr.bf16.mxu0 0
    %1368 = vmatpush1.bf16.msra.mxu0 %v787
    %1369 = vmatprep.subr.bf16.mxu0 0
    %1370 = vmatpush1.bf16.msra.mxu0 %v786
    %1371 = vmatprep.subr.bf16.mxu0 0
    %1372 = vmatpush2.bf16.msra.mxu0 0
    %1373 = vmatprep.subr.bf16.mxu0 0
    %1374 = vmatpush2.bf16.msra.mxu0 0
    %1375 = vmatprep.subr.bf16.mxu0 0
    %1376 = vmatpush2.bf16.msra.mxu0 0
    %1377 = vmatprep.subr.bf16.mxu0 0
    %1378 = vmatpush2.bf16.msra.mxu0 0
    %1379 = vmatprep.subr.bf16.mxu0 0
    %1380 = vmatpush2.bf16.msra.mxu0 0
    %1381 = vmatprep.subr.bf16.mxu0 0
    %1382 = vmatpush2.bf16.msra.mxu0 0
    %1383 = vmatprep.subr.bf16.mxu0 0
    %1384 = vmatpush2.bf16.msra.mxu0 0
    %1385 = vmatprep.subr.bf16.mxu0 0
    %1386 = vmatpush2.bf16.msra.mxu0 0
    %1387 = vmatprep.mubr.bf16.mxu0 0
    %1388 = vmatmul.mubr.bf16.gmra.mxu0 %v1354
    %v1389 = vpop.f32.mrf.mxu0
    %v1390 = vadd.f32 0.0, %v1389
    %v1391 = vpop.f32.mrf.mxu0
    %v1392 = vpop.f32.mrf.mxu0
    %v1393 = vadd.f32 0.0, %v1392
    %v1394 = vpop.f32.mrf.mxu0
    %1395 = vdwg.mxu0
    %v1396 = vld [vmem:[%s3] sm:$0xf]
    %v1397 = vld [vmem:[%s3 + $0x4] sm:$0xf]
    %v1398 = vld [vmem:[%s3 + $0x8] sm:$0xf]
    %v1399 = vld [vmem:[%s3 + $0xc] sm:$0xf]
    %v1400 = vld [vmem:[%s3 + $0x10] sm:$0xf]
    %v1401 = vld [vmem:[%s3 + $0x14] sm:$0xf]
    %v1402 = vld [vmem:[%s3 + $0x18] sm:$0xf]
    %v1403 = vld [vmem:[%s3 + $0x1c] sm:$0xf]
    %v1404 = vld [vmem:[%s3 + $0x20] sm:$0xf]
    %v1405 = vld [vmem:[%s3 + $0x24] sm:$0xf]
    %v1406 = vld [vmem:[%s3 + $0x28] sm:$0xf]
    %v1407 = vld [vmem:[%s3 + $0x2c] sm:$0xf]
    %v1408 = vld [vmem:[%s16] sm:$0xf]
    %v1409 = vld [vmem:[%s16 + $0x4] sm:$0xf]
    %v1410 = vld [vmem:[%s16 + $0x8] sm:$0xf]
    %v1411 = vld [vmem:[%s16 + $0xc] sm:$0xf]
    %v1412 = vlaneseq
    %v1413 = vshrl.u32 %v1412, 7
    %v1414 = vsub.s32 0, %v1413
    %v1415 = vrot.slane %v67, %v1414
    %v1428 = vunpack.c.l.b16 %v1396
    %v1429 = vunpack.c.l.b16 %v1397
    %v1430 = vunpack.c.l.b16 %v1398
    %v1431 = vunpack.c.l.b16 %v1399
    %v1432 = vunpack.c.l.b16 %v1400
    %v1433 = vunpack.c.l.b16 %v1401
    %v1434 = vunpack.c.l.b16 %v1402
    %v1435 = vunpack.c.l.b16 %v1403
    %v1436 = vunpack.c.l.b16 %v1404
    %v1437 = vunpack.c.l.b16 %v1405
    %v1438 = vunpack.c.l.b16 %v1406
    %v1439 = vunpack.c.l.b16 %v1407
    %v1440 = vpack.c.b16 %v1429, %v1428
    %v1441 = vpack.c.b16 %v1431, %v1430
    %v1442 = vpack.c.b16 %v1433, %v1432
    %v1443 = vpack.c.b16 %v1435, %v1434
    %v1444 = vpack.c.b16 %v1437, %v1436
    %v1445 = vpack.c.b16 %v1439, %v1438
    %v1450 = vunpack.c.l.b16 %v1408
    %v1451 = vunpack.c.l.b16 %v1409
    %v1452 = vunpack.c.l.b16 %v1410
    %v1453 = vunpack.c.l.b16 %v1411
    %v1454 = vpack.c.b16 %v1451, %v1450
    %v1455 = vpack.c.b16 %v1453, %v1452
    %v1459 = vsel %vm150, %v1440, 0
    %v1462 = vsel %vm150, %v1441, 0
    %v1465 = vsel %vm150, %v1442, 0
    %v1468 = vsel %vm150, %v1443, 0
    %v1471 = vsel %vm150, %v1444, 0
    %v1474 = vsel %vm150, %v1445, 0
    %1476 = vmatprep.subr.bf16.mxu0 0
    %1477 = vmatpush1.bf16.msra.mxu0 0
    %1478 = vmatprep.subr.bf16.mxu0 0
    %1479 = vmatpush1.bf16.msra.mxu0 0
    %1480 = vmatprep.subr.bf16.mxu0 0
    %1481 = vmatpush1.bf16.msra.mxu0 0
    %1482 = vmatprep.subr.bf16.mxu0 0
    %1483 = vmatpush1.bf16.msra.mxu0 0
    %1484 = vmatprep.subr.bf16.mxu0 0
    %1485 = vmatpush1.bf16.msra.mxu0 0
    %1486 = vmatprep.subr.bf16.mxu0 0
    %1487 = vmatpush1.bf16.msra.mxu0 0
    %1488 = vmatprep.subr.bf16.mxu0 0
    %1489 = vmatpush1.bf16.msra.mxu0 %v1455
    %1490 = vmatprep.subr.bf16.mxu0 0
    %1491 = vmatpush1.bf16.msra.mxu0 %v1454
    %1492 = vmatprep.subr.bf16.mxu0 0
    %1493 = vmatpush2.bf16.msra.mxu0 0
    %1494 = vmatprep.subr.bf16.mxu0 0
    %1495 = vmatpush2.bf16.msra.mxu0 0
    %1496 = vmatprep.subr.bf16.mxu0 0
    %1497 = vmatpush2.bf16.msra.mxu0 0
    %1498 = vmatprep.subr.bf16.mxu0 0
    %1499 = vmatpush2.bf16.msra.mxu0 0
    %1500 = vmatprep.subr.bf16.mxu0 0
    %1501 = vmatpush2.bf16.msra.mxu0 0
    %1502 = vmatprep.subr.bf16.mxu0 0
    %1503 = vmatpush2.bf16.msra.mxu0 0
    %1504 = vmatprep.subr.bf16.mxu0 0
    %1505 = vmatpush2.bf16.msra.mxu0 0
    %1506 = vmatprep.subr.bf16.mxu0 0
    %1507 = vmatpush2.bf16.msra.mxu0 0
    %1508 = vmatprep.mubr.bf16.mxu0 0
    %1509 = vmatmul.mubr.bf16.gmra.mxu0 %v1459
    %v1510 = vpop.f32.mrf.mxu0
    %v1511 = vadd.f32 %v1415, %v1510
    %v1512 = vpop.f32.mrf.mxu0
    %v1513 = vpop.f32.mrf.mxu0
    %v1514 = vadd.f32 %v1415, %v1513
    %v1515 = vpop.f32.mrf.mxu0
    %1516 = vmatprep.mubr.bf16.mxu0 0
    %1517 = vmatmul.mubr.bf16.gmra.mxu0 %v1462
    %v1518 = vpop.f32.mrf.mxu0
    %v1519 = vadd.f32 %v1415, %v1518
    %v1520 = vpop.f32.mrf.mxu0
    %v1521 = vpop.f32.mrf.mxu0
    %v1522 = vadd.f32 %v1415, %v1521
    %v1523 = vpop.f32.mrf.mxu0
    %1524 = vmatprep.mubr.bf16.mxu0 0
    %1525 = vmatmul.mubr.bf16.gmra.mxu0 %v1465
    %v1526 = vpop.f32.mrf.mxu0
    %v1527 = vadd.f32 %v1415, %v1526
    %v1528 = vpop.f32.mrf.mxu0
    %v1529 = vpop.f32.mrf.mxu0
    %v1530 = vadd.f32 %v1415, %v1529
    %v1531 = vpop.f32.mrf.mxu0
    %1532 = vmatprep.mubr.bf16.mxu0 0
    %1533 = vmatmul.mubr.bf16.gmra.mxu0 %v1468
    %v1534 = vpop.f32.mrf.mxu0
    %v1535 = vadd.f32 %v1415, %v1534
    %v1536 = vpop.f32.mrf.mxu0
    %v1537 = vpop.f32.mrf.mxu0
    %v1538 = vadd.f32 %v1415, %v1537
    %v1539 = vpop.f32.mrf.mxu0
    %1540 = vmatprep.mubr.bf16.mxu0 0
    %1541 = vmatmul.mubr.bf16.gmra.mxu0 %v1471
    %v1542 = vpop.f32.mrf.mxu0
    %v1543 = vadd.f32 %v1415, %v1542
    %v1544 = vpop.f32.mrf.mxu0
    %v1545 = vpop.f32.mrf.mxu0
    %v1546 = vadd.f32 %v1415, %v1545
    %v1547 = vpop.f32.mrf.mxu0
    %1548 = vmatprep.mubr.bf16.mxu0 0
    %1549 = vmatmul.mubr.bf16.gmra.mxu0 %v1474
    %v1550 = vpop.f32.mrf.mxu0
    %v1551 = vadd.f32 %v1415, %v1550
    %v1552 = vpop.f32.mrf.mxu0
    %v1553 = vpop.f32.mrf.mxu0
    %v1554 = vadd.f32 %v1415, %v1553
    %v1555 = vpop.f32.mrf.mxu0
    %1556 = vdwg.mxu0
    %v1557 = vld [vmem:[%s4] sm:$0xf]
    %v1558 = vld [vmem:[%s4 + $0x4] sm:$0xf]
    %v1559 = vld [vmem:[%s4 + $0x8] sm:$0xf]
    %v1560 = vld [vmem:[%s4 + $0xc] sm:$0xf]
    %v1561 = vld [vmem:[%s4 + $0x10] sm:$0xf]
    %v1562 = vld [vmem:[%s4 + $0x14] sm:$0xf]
    %v1563 = vld [vmem:[%s4 + $0x18] sm:$0xf]
    %v1564 = vld [vmem:[%s4 + $0x1c] sm:$0xf]
    %v1565 = vld [vmem:[%s4 + $0x20] sm:$0xf]
    %v1566 = vld [vmem:[%s4 + $0x24] sm:$0xf]
    %v1567 = vld [vmem:[%s4 + $0x28] sm:$0xf]
    %v1568 = vld [vmem:[%s4 + $0x2c] sm:$0xf]
    %v1569 = vld [vmem:[%s17] sm:$0xf]
    %v1570 = vld [vmem:[%s17 + $0x4] sm:$0xf]
    %v1571 = vld [vmem:[%s17 + $0x8] sm:$0xf]
    %v1572 = vld [vmem:[%s17 + $0xc] sm:$0xf]
    %v1573 = vld [vmem:[%s17 + $0x10] sm:$0x1]
    %v1586 = vunpack.c.l.b16 %v1557
    %v1587 = vunpack.c.l.b16 %v1558
    %v1588 = vunpack.c.l.b16 %v1559
    %v1589 = vunpack.c.l.b16 %v1560
    %v1590 = vunpack.c.l.b16 %v1561
    %v1591 = vunpack.c.l.b16 %v1562
    %v1592 = vunpack.c.l.b16 %v1563
    %v1593 = vunpack.c.l.b16 %v1564
    %v1594 = vunpack.c.l.b16 %v1565
    %v1595 = vunpack.c.l.b16 %v1566
    %v1596 = vunpack.c.l.b16 %v1567
    %v1597 = vunpack.c.l.b16 %v1568
    %v1598 = vpack.c.b16 %v1587, %v1586
    %v1599 = vpack.c.b16 %v1589, %v1588
    %v1600 = vpack.c.b16 %v1591, %v1590
    %v1601 = vpack.c.b16 %v1593, %v1592
    %v1602 = vpack.c.b16 %v1595, %v1594
    %v1603 = vpack.c.b16 %v1597, %v1596
    %v1609 = vunpack.c.l.b16 %v1569
    %v1610 = vunpack.c.l.b16 %v1570
    %v1611 = vunpack.c.l.b16 %v1571
    %v1612 = vunpack.c.l.b16 %v1572
    %v1613 = vunpack.c.l.b16 %v1573
    %v1614 = vpack.c.b16 %v1610, %v1609
    %v1615 = vpack.c.b16 %v1612, %v1611
    %v1616 = vpack.c.b16 %v1613, %v1613
    %vm1619 = vcmask 269312
    %v1621 = vsel %vm1619, %v1598, 0
    %v1624 = vsel %vm1619, %v1599, 0
    %v1627 = vsel %vm1619, %v1600, 0
    %v1630 = vsel %vm1619, %v1601, 0
    %v1633 = vsel %vm1619, %v1602, 0
    %v1636 = vsel %vm1619, %v1603, 0
    %vm1638 = vcmask 1040384
    %v1639 = vsel 0, 4294967295, 65535
    %v1640 = vsel %vm1638, %v1639, 0
    %v1642 = vand.u32 %v1616, %v1640
    %1644 = vmatprep.subr.bf16.mxu0 0
    %1645 = vmatpush1.bf16.msra.mxu0 0
    %1646 = vmatprep.subr.bf16.mxu0 0
    %1647 = vmatpush1.bf16.msra.mxu0 0
    %1648 = vmatprep.subr.bf16.mxu0 0
    %1649 = vmatpush1.bf16.msra.mxu0 0
    %1650 = vmatprep.subr.bf16.mxu0 0
    %1651 = vmatpush1.bf16.msra.mxu0 0
    %1652 = vmatprep.subr.bf16.mxu0 0
    %1653 = vmatpush1.bf16.msra.mxu0 0
    %1654 = vmatprep.subr.bf16.mxu0 0
    %1655 = vmatpush1.bf16.msra.mxu0 %v1642
    %1656 = vmatprep.subr.bf16.mxu0 0
    %1657 = vmatpush1.bf16.msra.mxu0 %v1615
    %1658 = vmatprep.subr.bf16.mxu0 0
    %1659 = vmatpush1.bf16.msra.mxu0 %v1614
    %1660 = vmatprep.subr.bf16.mxu0 0
    %1661 = vmatpush2.bf16.msra.mxu0 0
    %1662 = vmatprep.subr.bf16.mxu0 0
    %1663 = vmatpush2.bf16.msra.mxu0 0
    %1664 = vmatprep.subr.bf16.mxu0 0
    %1665 = vmatpush2.bf16.msra.mxu0 0
    %1666 = vmatprep.subr.bf16.mxu0 0
    %1667 = vmatpush2.bf16.msra.mxu0 0
    %1668 = vmatprep.subr.bf16.mxu0 0
    %1669 = vmatpush2.bf16.msra.mxu0 0
    %1670 = vmatprep.subr.bf16.mxu0 0
    %1671 = vmatpush2.bf16.msra.mxu0 0
    %1672 = vmatprep.subr.bf16.mxu0 0
    %1673 = vmatpush2.bf16.msra.mxu0 0
    %1674 = vmatprep.subr.bf16.mxu0 0
    %1675 = vmatpush2.bf16.msra.mxu0 0
    %1676 = vmatprep.mubr.bf16.mxu0 0
    %1677 = vmatmul.mubr.bf16.gmra.mxu0 %v1621
    %v1678 = vpop.f32.mrf.mxu0
    %v1679 = vadd.f32 0.0, %v1678
    %v1680 = vpop.f32.mrf.mxu0
    %v1681 = vpop.f32.mrf.mxu0
    %v1682 = vadd.f32 0.0, %v1681
    %v1683 = vpop.f32.mrf.mxu0
    %1684 = vmatprep.mubr.bf16.mxu0 0
    %1685 = vmatmul.mubr.bf16.gmra.mxu0 %v1624
    %v1686 = vpop.f32.mrf.mxu0
    %v1687 = vadd.f32 0.0, %v1686
    %v1688 = vpop.f32.mrf.mxu0
    %v1689 = vpop.f32.mrf.mxu0
    %v1690 = vadd.f32 0.0, %v1689
    %v1691 = vpop.f32.mrf.mxu0
    %1692 = vmatprep.mubr.bf16.mxu0 0
    %1693 = vmatmul.mubr.bf16.gmra.mxu0 %v1627
    %v1694 = vpop.f32.mrf.mxu0
    %v1695 = vadd.f32 0.0, %v1694
    %v1696 = vpop.f32.mrf.mxu0
    %v1697 = vpop.f32.mrf.mxu0
    %v1698 = vadd.f32 0.0, %v1697
    %v1699 = vpop.f32.mrf.mxu0
    %1700 = vmatprep.mubr.bf16.mxu0 0
    %1701 = vmatmul.mubr.bf16.gmra.mxu0 %v1630
    %v1702 = vpop.f32.mrf.mxu0
    %v1703 = vadd.f32 0.0, %v1702
    %v1704 = vpop.f32.mrf.mxu0
    %v1705 = vpop.f32.mrf.mxu0
    %v1706 = vadd.f32 0.0, %v1705
    %v1707 = vpop.f32.mrf.mxu0
    %1708 = vmatprep.mubr.bf16.mxu0 0
    %1709 = vmatmul.mubr.bf16.gmra.mxu0 %v1633
    %v1710 = vpop.f32.mrf.mxu0
    %v1711 = vadd.f32 0.0, %v1710
    %v1712 = vpop.f32.mrf.mxu0
    %v1713 = vpop.f32.mrf.mxu0
    %v1714 = vadd.f32 0.0, %v1713
    %v1715 = vpop.f32.mrf.mxu0
    %1716 = vmatprep.mubr.bf16.mxu0 0
    %1717 = vmatmul.mubr.bf16.gmra.mxu0 %v1636
    %v1718 = vpop.f32.mrf.mxu0
    %v1719 = vadd.f32 0.0, %v1718
    %v1720 = vpop.f32.mrf.mxu0
    %v1721 = vpop.f32.mrf.mxu0
    %v1722 = vadd.f32 0.0, %v1721
    %v1723 = vpop.f32.mrf.mxu0
    %1724 = vdwg.mxu0
    %v1725 = vmax.f32 %v1679, 0.0
    %v1726 = vmax.f32 %v1682, 0.0
    %v1727 = vmax.f32 %v1687, 0.0
    %v1728 = vmax.f32 %v1690, 0.0
    %v1729 = vmax.f32 %v1695, 0.0
    %v1730 = vmax.f32 %v1698, 0.0
    %v1731 = vmax.f32 %v1703, 0.0
    %v1732 = vmax.f32 %v1706, 0.0
    %v1733 = vmax.f32 %v1711, 0.0
    %v1734 = vmax.f32 %v1714, 0.0
    %v1735 = vmax.f32 %v1719, 0.0
    %v1736 = vmax.f32 %v1722, 0.0
    %v1737 = vadd.f32 %v1511, %v1725
    %v1738 = vadd.f32 %v1514, %v1726
    %v1739 = vadd.f32 %v1519, %v1727
    %v1740 = vadd.f32 %v1522, %v1728
    %v1741 = vadd.f32 %v1527, %v1729
    %v1742 = vadd.f32 %v1530, %v1730
    %v1743 = vadd.f32 %v1535, %v1731
    %v1744 = vadd.f32 %v1538, %v1732
    %v1745 = vadd.f32 %v1543, %v1733
    %v1746 = vadd.f32 %v1546, %v1734
    %v1747 = vadd.f32 %v1551, %v1735
    %v1748 = vadd.f32 %v1554, %v1736
    %v1749 = vmax.f32 %v1737, 0.0
    %v1750 = vmax.f32 %v1738, 0.0
    %v1751 = vmax.f32 %v1739, 0.0
    %v1752 = vmax.f32 %v1740, 0.0
    %v1753 = vmax.f32 %v1741, 0.0
    %v1754 = vmax.f32 %v1742, 0.0
    %v1755 = vmax.f32 %v1743, 0.0
    %v1756 = vmax.f32 %v1744, 0.0
    %v1757 = vmax.f32 %v1745, 0.0
    %v1758 = vmax.f32 %v1746, 0.0
    %v1759 = vmax.f32 %v1747, 0.0
    %v1760 = vmax.f32 %v1748, 0.0
    %v1761 = vmul.f32 %v1749, %v1749
    %v1762 = vmul.f32 %v1750, %v1750
    %v1763 = vmul.f32 %v1751, %v1751
    %v1764 = vmul.f32 %v1752, %v1752
    %v1765 = vmul.f32 %v1753, %v1753
    %v1766 = vmul.f32 %v1754, %v1754
    %v1767 = vmul.f32 %v1755, %v1755
    %v1768 = vmul.f32 %v1756, %v1756
    %v1769 = vmul.f32 %v1757, %v1757
    %v1770 = vmul.f32 %v1758, %v1758
    %v1771 = vmul.f32 %v1759, %v1759
    %v1772 = vmul.f32 %v1760, %v1760
    %v1773 = vsel %vm150, %v1761, 0.0
    %1774 = vadd.xlane.f32.xlu0 %v1773
    %v1775 = vpop.xlane.xlu0 %1774
    %v1776 = vsel %vm150, %v1762, 0.0
    %1777 = vadd.xlane.f32.xlu0 %v1776
    %v1778 = vpop.xlane.xlu0 %1777
    %v1779 = vsel %vm150, %v1763, 0.0
    %1780 = vadd.xlane.f32.xlu0 %v1779
    %v1781 = vpop.xlane.xlu0 %1780
    %v1782 = vsel %vm150, %v1764, 0.0
    %1783 = vadd.xlane.f32.xlu0 %v1782
    %v1784 = vpop.xlane.xlu0 %1783
    %v1785 = vsel %vm150, %v1765, 0.0
    %1786 = vadd.xlane.f32.xlu0 %v1785
    %v1787 = vpop.xlane.xlu0 %1786
    %v1788 = vsel %vm150, %v1766, 0.0
    %1789 = vadd.xlane.f32.xlu0 %v1788
    %v1790 = vpop.xlane.xlu0 %1789
    %v1791 = vsel %vm150, %v1767, 0.0
    %1792 = vadd.xlane.f32.xlu0 %v1791
    %v1793 = vpop.xlane.xlu0 %1792
    %v1794 = vsel %vm150, %v1768, 0.0
    %1795 = vadd.xlane.f32.xlu0 %v1794
    %v1796 = vpop.xlane.xlu0 %1795
    %v1797 = vsel %vm150, %v1769, 0.0
    %1798 = vadd.xlane.f32.xlu0 %v1797
    %v1799 = vpop.xlane.xlu0 %1798
    %v1800 = vsel %vm150, %v1770, 0.0
    %1801 = vadd.xlane.f32.xlu0 %v1800
    %v1802 = vpop.xlane.xlu0 %1801
    %v1803 = vsel %vm150, %v1771, 0.0
    %1804 = vadd.xlane.f32.xlu0 %v1803
    %v1805 = vpop.xlane.xlu0 %1804
    %v1806 = vsel %vm150, %v1772, 0.0
    %1807 = vadd.xlane.f32.xlu0 %v1806
    %v1808 = vpop.xlane.xlu0 %1807
    %v1809 = vmax.f32 %v1775, 1e-24
    %v1810 = vmax.f32 %v1778, 1e-24
    %v1811 = vmax.f32 %v1781, 1e-24
    %v1812 = vmax.f32 %v1784, 1e-24
    %v1813 = vmax.f32 %v1787, 1e-24
    %v1814 = vmax.f32 %v1790, 1e-24
    %v1815 = vmax.f32 %v1793, 1e-24
    %v1816 = vmax.f32 %v1796, 1e-24
    %v1817 = vmax.f32 %v1799, 1e-24
    %v1818 = vmax.f32 %v1802, 1e-24
    %v1819 = vmax.f32 %v1805, 1e-24
    %v1820 = vmax.f32 %v1808, 1e-24
    %v1821 = vrsqrt.pop %v1809
    %v1822 = vrsqrt.pop %v1810
    %v1823 = vrsqrt.pop %v1811
    %v1824 = vrsqrt.pop %v1812
    %v1825 = vrsqrt.pop %v1813
    %v1826 = vrsqrt.pop %v1814
    %v1827 = vrsqrt.pop %v1815
    %v1828 = vrsqrt.pop %v1816
    %v1829 = vrsqrt.pop %v1817
    %v1830 = vrsqrt.pop %v1818
    %v1831 = vrsqrt.pop %v1819
    %v1832 = vrsqrt.pop %v1820
    %v1833 = vmul.f32 %v1749, %v1821
    %v1834 = vmul.f32 %v1750, %v1822
    %v1835 = vmul.f32 %v1751, %v1823
    %v1836 = vmul.f32 %v1752, %v1824
    %v1837 = vmul.f32 %v1753, %v1825
    %v1838 = vmul.f32 %v1754, %v1826
    %v1839 = vmul.f32 %v1755, %v1827
    %v1840 = vmul.f32 %v1756, %v1828
    %v1841 = vmul.f32 %v1757, %v1829
    %v1842 = vmul.f32 %v1758, %v1830
    %v1843 = vmul.f32 %v1759, %v1831
    %v1844 = vmul.f32 %v1760, %v1832
    %v1845 = vpack.c.bf16 %v1834, %v1833
    %v1846 = vpack.c.bf16 %v1836, %v1835
    %v1847 = vpack.c.bf16 %v1838, %v1837
    %v1848 = vpack.c.bf16 %v1840, %v1839
    %v1849 = vpack.c.bf16 %v1842, %v1841
    %v1850 = vpack.c.bf16 %v1844, %v1843
    %v1853 = vunpack.c.l.b16 %v72
    %v1854 = vunpack.c.l.b16 %v73
    %v1855 = vpack.c.b16 %v1854, %v1853
    %vm1856 = vcmask 785408
    %v1858 = vsel %vm1856, %v1855, 0
    %1860 = vmatprep.subr.bf16.mxu0 0
    %1861 = vmatpush1.bf16.msra.mxu0 0
    %1862 = vmatprep.subr.bf16.mxu0 0
    %1863 = vmatpush1.bf16.msra.mxu0 0
    %1864 = vmatprep.subr.bf16.mxu0 0
    %1865 = vmatpush1.bf16.msra.mxu0 %v1850
    %1866 = vmatprep.subr.bf16.mxu0 0
    %1867 = vmatpush1.bf16.msra.mxu0 %v1849
    %1868 = vmatprep.subr.bf16.mxu0 0
    %1869 = vmatpush1.bf16.msra.mxu0 %v1848
    %1870 = vmatprep.subr.bf16.mxu0 0
    %1871 = vmatpush1.bf16.msra.mxu0 %v1847
    %1872 = vmatprep.subr.bf16.mxu0 0
    %1873 = vmatpush1.bf16.msra.mxu0 %v1846
    %1874 = vmatprep.subr.bf16.mxu0 0
    %1875 = vmatpush1.bf16.msra.mxu0 %v1845
    %1876 = vmatprep.subr.bf16.mxu0 0
    %1877 = vmatpush2.bf16.msra.mxu0 0
    %1878 = vmatprep.subr.bf16.mxu0 0
    %1879 = vmatpush2.bf16.msra.mxu0 0
    %1880 = vmatprep.subr.bf16.mxu0 0
    %1881 = vmatpush2.bf16.msra.mxu0 0
    %1882 = vmatprep.subr.bf16.mxu0 0
    %1883 = vmatpush2.bf16.msra.mxu0 0
    %1884 = vmatprep.subr.bf16.mxu0 0
    %1885 = vmatpush2.bf16.msra.mxu0 0
    %1886 = vmatprep.subr.bf16.mxu0 0
    %1887 = vmatpush2.bf16.msra.mxu0 0
    %1888 = vmatprep.subr.bf16.mxu0 0
    %1889 = vmatpush2.bf16.msra.mxu0 0
    %1890 = vmatprep.subr.bf16.mxu0 0
    %1891 = vmatpush2.bf16.msra.mxu0 0
    %1892 = vmatprep.mubr.bf16.mxu0 0
    %1893 = vmatmul.mubr.bf16.gmra.mxu0 %v1858
    %v1894 = vpop.f32.mrf.mxu0
    %v1895 = vadd.f32 0.0, %v1894
    %v1896 = vpop.f32.mrf.mxu0
    %v1897 = vpop.f32.mrf.mxu0
    %v1898 = vadd.f32 0.0, %v1897
    %v1899 = vpop.f32.mrf.mxu0
    %1900 = vdwg.mxu0
    %v1901 = vmul.f32 %v1895, 0.16666667
    %v1902 = vmul.f32 %v1898, 0.16666667
    %1903 = vst.msk [vmem:[#allocation2] sm:$0xff] %vm150, %v1901
    %1904 = vst.msk [vmem:[#allocation2 + $0x8] sm:$0xff] %vm150, %v1902
    %1907 = vrot.lane.b32.xlu0 %v1390, 32
    %v1908 = vpop.permute.xlu0 %1907
    %1909 = vrot.lane.b32.xlu0 %v1393, 32
    %v1910 = vpop.permute.xlu0 %1909
    %vm1913 = vcmask 523520
    %1914 = vst.msk [vmem:[#allocation2] sm:$0xff] %vm1913, %v1908
    %1915 = vst.msk [vmem:[#allocation2 + $0x8] sm:$0xff] %vm1913, %v1910
    // Predicated region
    $region78: #{tpu_custom_call.1} parent=1 // pred_check
      _
    $region79: #{tpu_custom_call.1} parent=1 // pred_check_branch
      %1917 = sbr.rel (0) target = $region81
    $region80: #{tpu_custom_call.1} parent=1 // pred_region
      %s1919 = ssub.s32 256, 256
      %1920 = vsyncadd [#allocation3], %s1919
      %s1921 = sshll.u32 [#allocation2], 4
      %s1922 = int_to_ptr.vmem [resolvable:$true] %s1921
      %1927 = dma.vmem_to_hbm [thread:$0]  %s1922, 256, %s19, [#allocation3], 128, 128, 8
    $region81: #{tpu_custom_call.1} parent=1 // pred_fallthru
      _
    // Predicated region
    $region82: #{tpu_custom_call.1} parent=1 // pred_check
      _
    $region83: #{tpu_custom_call.1} parent=1 // pred_check_branch
      %1929 = sbr.rel (0) target = $region85
    $region84: #{tpu_custom_call.1} parent=1 // pred_region
      %1930 = dma.done [#allocation3], 256
    $region85: #{tpu_custom_call.1} parent=1 // pred_fallthru
      _
    %1931 = vsyncpa [#allocation3], 1

// kernel: tpu_custom_call.1
$region0: #{tpu_custom_call.1}
  #allocation0 [shape = 'u32[]', space=smem, size = 0x4, offset = 0x4, fixed_abs, tag = 'smem constant byte address 0x4 - core index']
  #allocation1 [shape = 'u32[144,128]{1,0:T(1,128)}', space=vmem, size = 0x12000, scoped, tag = 'internal scratch']
  %s0 = inlined_call_operand.vmem [shape: bf16[128,32], index: 0, kind: input, shape index: {}]
  %s1 = inlined_call_operand.vmem [shape: bf16[16,32], index: 1, kind: input, shape index: {}]
  %s2 = inlined_call_operand.vmem [shape: f32[16,8], index: 2, kind: input, shape index: {}]
  %s3 = inlined_call_operand.vmem [shape: bf16[96,32], index: 3, kind: input, shape index: {}]
  %s4 = inlined_call_operand.vmem [shape: bf16[96,33], index: 4, kind: input, shape index: {}]
  %s5 = inlined_call_operand.vmem [shape: bf16[16,128], index: 5, kind: input, shape index: {}]
  %s6 = inlined_call_operand.vmem [shape: bf16[128,16], index: 6, kind: input, shape index: {}]
  %s7 = inlined_call_operand.vmem [shape: bf16[128,8], index: 7, kind: input, shape index: {}]
  %s8 = inlined_call_operand.vmem [shape: bf16[8,128], index: 8, kind: input, shape index: {}]
  %s9 = inlined_call_operand.vmem [shape: bf16[16,96], index: 9, kind: input, shape index: {}]
  %s10 = inlined_call_operand.vmem [shape: bf16[32,32], index: 10, kind: input, shape index: {}]
  %s11 = inlined_call_operand.vmem [shape: bf16[32,32], index: 11, kind: input, shape index: {}]
  %s12 = inlined_call_operand.vmem [shape: bf16[32,32], index: 12, kind: input, shape index: {}]
  %s13 = inlined_call_operand.vmem [shape: bf16[32,32], index: 13, kind: input, shape index: {}]
  %s14 = inlined_call_operand.vmem [shape: bf16[32,16], index: 14, kind: input, shape index: {}]
  %s15 = inlined_call_operand.vmem [shape: bf16[16,1], index: 15, kind: input, shape index: {}]
  %s16 = inlined_call_operand.vmem [shape: bf16[32,32], index: 16, kind: input, shape index: {}]
  %s17 = inlined_call_operand.vmem [shape: bf16[33,32], index: 17, kind: input, shape index: {}]
  %s18 = inlined_call_operand.vmem [shape: f32[6,32], index: 18, kind: input, shape index: {}]
  %s19 = inlined_call_operand.hbm [shape: f32[16,64], index: 19, kind: output, shape index: {}]
  %s20 = sld [smem:[#allocation0]]
  $region86: #{tpu_custom_call.1} parent=0
    _
  %s22 = ssub.s32 1, %s20
  %s23 = scalar_select 0, %s22, %s20
  $region1: #{tpu_custom_call.1} parent=0
    #allocation2 [shape = 'u8[8192]{0}', space=vmem, size = 0x2000, scoped, tag = 'output window, operand 0, single buffered']
    #allocation3 [shape = 's32[1]{0}', space=sflag, size = 0x4, scoped, tag = 'scoped memory for tpu_custom_call.1']
    %24 = vsyncpa [#allocation3], 0
    // Predicated region
    $region2: #{tpu_custom_call.1} parent=1 // pred_check
      _
    $region3: #{tpu_custom_call.1} parent=1 // pred_check_branch
      %26 = sbr.rel (0) target = $region5
    $region4: #{tpu_custom_call.1} parent=1 // pred_region
      _
    $region5: #{tpu_custom_call.1} parent=1 // pred_fallthru
      _
    // Predicated region
    $region6: #{tpu_custom_call.1} parent=1 // pred_check
      _
    $region7: #{tpu_custom_call.1} parent=1 // pred_check_branch
      %28 = sbr.rel (0) target = $region9
    $region8: #{tpu_custom_call.1} parent=1 // pred_region
      _
    $region9: #{tpu_custom_call.1} parent=1 // pred_fallthru
      _
    // Predicated region
    $region10: #{tpu_custom_call.1} parent=1 // pred_check
      _
    $region11: #{tpu_custom_call.1} parent=1 // pred_check_branch
      %30 = sbr.rel (0) target = $region13
    $region12: #{tpu_custom_call.1} parent=1 // pred_region
      _
    $region13: #{tpu_custom_call.1} parent=1 // pred_fallthru
      _
    // Predicated region
    $region14: #{tpu_custom_call.1} parent=1 // pred_check
      _
    $region15: #{tpu_custom_call.1} parent=1 // pred_check_branch
      %32 = sbr.rel (0) target = $region17
    $region16: #{tpu_custom_call.1} parent=1 // pred_region
      _
    $region17: #{tpu_custom_call.1} parent=1 // pred_fallthru
      _
    // Predicated region
    $region18: #{tpu_custom_call.1} parent=1 // pred_check
      _
    $region19: #{tpu_custom_call.1} parent=1 // pred_check_branch
      %34 = sbr.rel (0) target = $region21
    $region20: #{tpu_custom_call.1} parent=1 // pred_region
      _
    $region21: #{tpu_custom_call.1} parent=1 // pred_fallthru
      _
    // Predicated region
    $region22: #{tpu_custom_call.1} parent=1 // pred_check
      _
    $region23: #{tpu_custom_call.1} parent=1 // pred_check_branch
      %36 = sbr.rel (0) target = $region25
    $region24: #{tpu_custom_call.1} parent=1 // pred_region
      _
    $region25: #{tpu_custom_call.1} parent=1 // pred_fallthru
      _
    // Predicated region
    $region26: #{tpu_custom_call.1} parent=1 // pred_check
      _
    $region27: #{tpu_custom_call.1} parent=1 // pred_check_branch
      %38 = sbr.rel (0) target = $region29
    $region28: #{tpu_custom_call.1} parent=1 // pred_region
      _
    $region29: #{tpu_custom_call.1} parent=1 // pred_fallthru
      _
    // Predicated region
    $region30: #{tpu_custom_call.1} parent=1 // pred_check
      _
    $region31: #{tpu_custom_call.1} parent=1 // pred_check_branch
      %40 = sbr.rel (0) target = $region33
    $region32: #{tpu_custom_call.1} parent=1 // pred_region
      _
    $region33: #{tpu_custom_call.1} parent=1 // pred_fallthru
      _
    // Predicated region
    $region34: #{tpu_custom_call.1} parent=1 // pred_check
      _
    $region35: #{tpu_custom_call.1} parent=1 // pred_check_branch
      %42 = sbr.rel (0) target = $region37
    $region36: #{tpu_custom_call.1} parent=1 // pred_region
      _
    $region37: #{tpu_custom_call.1} parent=1 // pred_fallthru
      _
    // Predicated region
    $region38: #{tpu_custom_call.1} parent=1 // pred_check
      _
    $region39: #{tpu_custom_call.1} parent=1 // pred_check_branch
      %44 = sbr.rel (0) target = $region41
    $region40: #{tpu_custom_call.1} parent=1 // pred_region
      _
    $region41: #{tpu_custom_call.1} parent=1 // pred_fallthru
      _
    // Predicated region
    $region42: #{tpu_custom_call.1} parent=1 // pred_check
      _
    $region43: #{tpu_custom_call.1} parent=1 // pred_check_branch
      %46 = sbr.rel (0) target = $region45
    $region44: #{tpu_custom_call.1} parent=1 // pred_region
      _
    $region45: #{tpu_custom_call.1} parent=1 // pred_fallthru
      _
    // Predicated region
    $region46: #{tpu_custom_call.1} parent=1 // pred_check
      _
    $region47: #{tpu_custom_call.1} parent=1 // pred_check_branch
      %48 = sbr.rel (0) target = $region49
    $region48: #{tpu_custom_call.1} parent=1 // pred_region
      _
    $region49: #{tpu_custom_call.1} parent=1 // pred_fallthru
      _
    // Predicated region
    $region50: #{tpu_custom_call.1} parent=1 // pred_check
      _
    $region51: #{tpu_custom_call.1} parent=1 // pred_check_branch
      %50 = sbr.rel (0) target = $region53
    $region52: #{tpu_custom_call.1} parent=1 // pred_region
      _
    $region53: #{tpu_custom_call.1} parent=1 // pred_fallthru
      _
    // Predicated region
    $region54: #{tpu_custom_call.1} parent=1 // pred_check
      _
    $region55: #{tpu_custom_call.1} parent=1 // pred_check_branch
      %52 = sbr.rel (0) target = $region57
    $region56: #{tpu_custom_call.1} parent=1 // pred_region
      _
    $region57: #{tpu_custom_call.1} parent=1 // pred_fallthru
      _
    // Predicated region
    $region58: #{tpu_custom_call.1} parent=1 // pred_check
      _
    $region59: #{tpu_custom_call.1} parent=1 // pred_check_branch
      %54 = sbr.rel (0) target = $region61
    $region60: #{tpu_custom_call.1} parent=1 // pred_region
      _
    $region61: #{tpu_custom_call.1} parent=1 // pred_fallthru
      _
    // Predicated region
    $region62: #{tpu_custom_call.1} parent=1 // pred_check
      _
    $region63: #{tpu_custom_call.1} parent=1 // pred_check_branch
      %56 = sbr.rel (0) target = $region65
    $region64: #{tpu_custom_call.1} parent=1 // pred_region
      _
    $region65: #{tpu_custom_call.1} parent=1 // pred_fallthru
      _
    // Predicated region
    $region66: #{tpu_custom_call.1} parent=1 // pred_check
      _
    $region67: #{tpu_custom_call.1} parent=1 // pred_check_branch
      %58 = sbr.rel (0) target = $region69
    $region68: #{tpu_custom_call.1} parent=1 // pred_region
      _
    $region69: #{tpu_custom_call.1} parent=1 // pred_fallthru
      _
    // Predicated region
    $region70: #{tpu_custom_call.1} parent=1 // pred_check
      _
    $region71: #{tpu_custom_call.1} parent=1 // pred_check_branch
      %60 = sbr.rel (0) target = $region73
    $region72: #{tpu_custom_call.1} parent=1 // pred_region
      _
    $region73: #{tpu_custom_call.1} parent=1 // pred_fallthru
      _
    // Predicated region
    $region74: #{tpu_custom_call.1} parent=1 // pred_check
      _
    $region75: #{tpu_custom_call.1} parent=1 // pred_check_branch
      %62 = sbr.rel (0) target = $region77
    $region76: #{tpu_custom_call.1} parent=1 // pred_region
      _
    $region77: #{tpu_custom_call.1} parent=1 // pred_fallthru
      _
    %v64 = vld [vmem:[%s18] sm:$0x1]
    %v65 = vld [vmem:[%s18 + $0x1] sm:$0x1]
    %v66 = vld [vmem:[%s18 + $0x2] sm:$0x1]
    %v67 = vld [vmem:[%s18 + $0x3] sm:$0x1]
    %v68 = vld [vmem:[%s18 + $0x4] sm:$0x1]
    %v69 = vld [vmem:[%s18 + $0x5] sm:$0x1]
    %v70 = vld [vmem:[%s5] sm:$0xf]
    %v71 = vld [vmem:[%s5 + $0x4] sm:$0xf]
    %v72 = vld [vmem:[%s9] sm:$0xf]
    %v73 = vld [vmem:[%s9 + $0x4] sm:$0xf]
    %v74 = vld [vmem:[%s0] sm:$0xf]
    %v75 = vld [vmem:[%s0 + $0x4] sm:$0xf]
    %v76 = vld [vmem:[%s0 + $0x8] sm:$0xf]
    %v77 = vld [vmem:[%s0 + $0xc] sm:$0xf]
    %v78 = vld [vmem:[%s0 + $0x10] sm:$0xf]
    %v79 = vld [vmem:[%s0 + $0x14] sm:$0xf]
    %v80 = vld [vmem:[%s0 + $0x18] sm:$0xf]
    %v81 = vld [vmem:[%s0 + $0x1c] sm:$0xf]
    %v82 = vld [vmem:[%s0 + $0x20] sm:$0xf]
    %v83 = vld [vmem:[%s0 + $0x24] sm:$0xf]
    %v84 = vld [vmem:[%s0 + $0x28] sm:$0xf]
    %v85 = vld [vmem:[%s0 + $0x2c] sm:$0xf]
    %v86 = vld [vmem:[%s0 + $0x30] sm:$0xf]
    %v87 = vld [vmem:[%s0 + $0x34] sm:$0xf]
    %v88 = vld [vmem:[%s0 + $0x38] sm:$0xf]
    %v89 = vld [vmem:[%s0 + $0x3c] sm:$0xf]
    %v90 = vld [vmem:[%s10] sm:$0xf]
    %v91 = vld [vmem:[%s10 + $0x4] sm:$0xf]
    %v92 = vld [vmem:[%s10 + $0x8] sm:$0xf]
    %v93 = vld [vmem:[%s10 + $0xc] sm:$0xf]
    %v94 = vlaneseq
    %v95 = vshrl.u32 %v94, 7
    %v96 = vsub.s32 0, %v95
    %v97 = vrot.slane %v64, %v96
    %v114 = vunpack.c.l.b16 %v74
    %v115 = vunpack.c.l.b16 %v75
    %v116 = vunpack.c.l.b16 %v76
    %v117 = vunpack.c.l.b16 %v77
    %v118 = vunpack.c.l.b16 %v78
    %v119 = vunpack.c.l.b16 %v79
    %v120 = vunpack.c.l.b16 %v80
    %v121 = vunpack.c.l.b16 %v81
    %v122 = vunpack.c.l.b16 %v82
    %v123 = vunpack.c.l.b16 %v83
    %v124 = vunpack.c.l.b16 %v84
    %v125 = vunpack.c.l.b16 %v85
    %v126 = vunpack.c.l.b16 %v86
    %v127 = vunpack.c.l.b16 %v87
    %v128 = vunpack.c.l.b16 %v88
    %v129 = vunpack.c.l.b16 %v89
    %v130 = vpack.c.b16 %v115, %v114
    %v131 = vpack.c.b16 %v117, %v116
    %v132 = vpack.c.b16 %v119, %v118
    %v133 = vpack.c.b16 %v121, %v120
    %v134 = vpack.c.b16 %v123, %v122
    %v135 = vpack.c.b16 %v125, %v124
    %v136 = vpack.c.b16 %v127, %v126
    %v137 = vpack.c.b16 %v129, %v128
    %v142 = vunpack.c.l.b16 %v90
    %v143 = vunpack.c.l.b16 %v91
    %v144 = vunpack.c.l.b16 %v92
    %v145 = vunpack.c.l.b16 %v93
    %v146 = vpack.c.b16 %v143, %v142
    %v147 = vpack.c.b16 %v145, %v144
    %vm150 = vcmask 261120
    %v152 = vsel %vm150, %v130, 0
    %v155 = vsel %vm150, %v131, 0
    %v158 = vsel %vm150, %v132, 0
    %v161 = vsel %vm150, %v133, 0
    %v164 = vsel %vm150, %v134, 0
    %v167 = vsel %vm150, %v135, 0
    %v170 = vsel %vm150, %v136, 0
    %v173 = vsel %vm150, %v137, 0
    %175 = vmatprep.subr.bf16.mxu0 0
    %176 = vmatpush1.bf16.msra.mxu0 0
    %177 = vmatprep.subr.bf16.mxu0 0
    %178 = vmatpush1.bf16.msra.mxu0 0
    %179 = vmatprep.subr.bf16.mxu0 0
    %180 = vmatpush1.bf16.msra.mxu0 0
    %181 = vmatprep.subr.bf16.mxu0 0
    %182 = vmatpush1.bf16.msra.mxu0 0
    %183 = vmatprep.subr.bf16.mxu0 0
    %184 = vmatpush1.bf16.msra.mxu0 0
    %185 = vmatprep.subr.bf16.mxu0 0
    %186 = vmatpush1.bf16.msra.mxu0 0
    %187 = vmatprep.subr.bf16.mxu0 0
    %188 = vmatpush1.bf16.msra.mxu0 %v147
    %189 = vmatprep.subr.bf16.mxu0 0
    %190 = vmatpush1.bf16.msra.mxu0 %v146
    %191 = vmatprep.subr.bf16.mxu0 0
    %192 = vmatpush2.bf16.msra.mxu0 0
    %193 = vmatprep.subr.bf16.mxu0 0
    %194 = vmatpush2.bf16.msra.mxu0 0
    %195 = vmatprep.subr.bf16.mxu0 0
    %196 = vmatpush2.bf16.msra.mxu0 0
    %197 = vmatprep.subr.bf16.mxu0 0
    %198 = vmatpush2.bf16.msra.mxu0 0
    %199 = vmatprep.subr.bf16.mxu0 0
    %200 = vmatpush2.bf16.msra.mxu0 0
    %201 = vmatprep.subr.bf16.mxu0 0
    %202 = vmatpush2.bf16.msra.mxu0 0
    %203 = vmatprep.subr.bf16.mxu0 0
    %204 = vmatpush2.bf16.msra.mxu0 0
    %205 = vmatprep.subr.bf16.mxu0 0
    %206 = vmatpush2.bf16.msra.mxu0 0
    %207 = vmatprep.mubr.bf16.mxu0 0
    %208 = vmatmul.mubr.bf16.gmra.mxu0 %v152
    %v209 = vpop.f32.mrf.mxu0
    %v210 = vadd.f32 %v97, %v209
    %v211 = vpop.f32.mrf.mxu0
    %v212 = vpop.f32.mrf.mxu0
    %v213 = vadd.f32 %v97, %v212
    %v214 = vpop.f32.mrf.mxu0
    %215 = vmatprep.mubr.bf16.mxu0 0
    %216 = vmatmul.mubr.bf16.gmra.mxu0 %v155
    %v217 = vpop.f32.mrf.mxu0
    %v218 = vadd.f32 %v97, %v217
    %v219 = vpop.f32.mrf.mxu0
    %v220 = vpop.f32.mrf.mxu0
    %v221 = vadd.f32 %v97, %v220
    %v222 = vpop.f32.mrf.mxu0
    %223 = vmatprep.mubr.bf16.mxu0 0
    %224 = vmatmul.mubr.bf16.gmra.mxu0 %v158
    %v225 = vpop.f32.mrf.mxu0
    %v226 = vadd.f32 %v97, %v225
    %v227 = vpop.f32.mrf.mxu0
    %v228 = vpop.f32.mrf.mxu0
    %v229 = vadd.f32 %v97, %v228
    %v230 = vpop.f32.mrf.mxu0
    %231 = vmatprep.mubr.bf16.mxu0 0
    %232 = vmatmul.mubr.bf16.gmra.mxu0 %v161
    %v233 = vpop.f32.mrf.mxu0
    %v234 = vadd.f32 %v97, %v233
    %v235 = vpop.f32.mrf.mxu0
    %v236 = vpop.f32.mrf.mxu0
    %v237 = vadd.f32 %v97, %v236
    %v238 = vpop.f32.mrf.mxu0
    %239 = vmatprep.mubr.bf16.mxu0 0
    %240 = vmatmul.mubr.bf16.gmra.mxu0 %v164
    %v241 = vpop.f32.mrf.mxu0
    %v242 = vadd.f32 %v97, %v241
    %v243 = vpop.f32.mrf.mxu0
    %v244 = vpop.f32.mrf.mxu0
    %v245 = vadd.f32 %v97, %v244
    %v246 = vpop.f32.mrf.mxu0
    %247 = vmatprep.mubr.bf16.mxu0 0
    %248 = vmatmul.mubr.bf16.gmra.mxu0 %v167
    %v249 = vpop.f32.mrf.mxu0
    %v250 = vadd.f32 %v97, %v249
    %v251 = vpop.f32.mrf.mxu0
    %v252 = vpop.f32.mrf.mxu0
    %v253 = vadd.f32 %v97, %v252
    %v254 = vpop.f32.mrf.mxu0
    %255 = vmatprep.mubr.bf16.mxu0 0
    %256 = vmatmul.mubr.bf16.gmra.mxu0 %v170
    %v257 = vpop.f32.mrf.mxu0
    %v258 = vadd.f32 %v97, %v257
    %v259 = vpop.f32.mrf.mxu0
    %v260 = vpop.f32.mrf.mxu0
    %v261 = vadd.f32 %v97, %v260
    %v262 = vpop.f32.mrf.mxu0
    %263 = vmatprep.mubr.bf16.mxu0 0
    %264 = vmatmul.mubr.bf16.gmra.mxu0 %v173
    %v265 = vpop.f32.mrf.mxu0
    %v266 = vadd.f32 %v97, %v265
    %v267 = vpop.f32.mrf.mxu0
    %v268 = vpop.f32.mrf.mxu0
    %v269 = vadd.f32 %v97, %v268
    %v270 = vpop.f32.mrf.mxu0
    %271 = vdwg.mxu0
    %v272 = vmax.f32 %v210, 0.0
    %v273 = vmax.f32 %v213, 0.0
    %v274 = vmax.f32 %v218, 0.0
    %v275 = vmax.f32 %v221, 0.0
    %v276 = vmax.f32 %v226, 0.0
    %v277 = vmax.f32 %v229, 0.0
    %v278 = vmax.f32 %v234, 0.0
    %v279 = vmax.f32 %v237, 0.0
    %v280 = vmax.f32 %v242, 0.0
    %v281 = vmax.f32 %v245, 0.0
    %v282 = vmax.f32 %v250, 0.0
    %v283 = vmax.f32 %v253, 0.0
    %v284 = vmax.f32 %v258, 0.0
    %v285 = vmax.f32 %v261, 0.0
    %v286 = vmax.f32 %v266, 0.0
    %v287 = vmax.f32 %v269, 0.0
    %v288 = vld [vmem:[%s1] sm:$0xf]
    %v289 = vld [vmem:[%s1 + $0x4] sm:$0xf]
    %v290 = vld [vmem:[%s11] sm:$0xf]
    %v291 = vld [vmem:[%s11 + $0x4] sm:$0xf]
    %v292 = vld [vmem:[%s11 + $0x8] sm:$0xf]
    %v293 = vld [vmem:[%s11 + $0xc] sm:$0xf]
    %v294 = vlaneseq
    %v295 = vshrl.u32 %v294, 7
    %v296 = vsub.s32 0, %v295
    %v297 = vrot.slane %v65, %v296
    %v300 = vunpack.c.l.b16 %v288
    %v301 = vunpack.c.l.b16 %v289
    %v302 = vpack.c.b16 %v301, %v300
    %v307 = vunpack.c.l.b16 %v290
    %v308 = vunpack.c.l.b16 %v291
    %v309 = vunpack.c.l.b16 %v292
    %v310 = vunpack.c.l.b16 %v293
    %v311 = vpack.c.b16 %v308, %v307
    %v312 = vpack.c.b16 %v310, %v309
    %v316 = vsel %vm150, %v302, 0
    %318 = vmatprep.subr.bf16.mxu0 0
    %319 = vmatpush1.bf16.msra.mxu0 0
    %320 = vmatprep.subr.bf16.mxu0 0
    %321 = vmatpush1.bf16.msra.mxu0 0
    %322 = vmatprep.subr.bf16.mxu0 0
    %323 = vmatpush1.bf16.msra.mxu0 0
    %324 = vmatprep.subr.bf16.mxu0 0
    %325 = vmatpush1.bf16.msra.mxu0 0
    %326 = vmatprep.subr.bf16.mxu0 0
    %327 = vmatpush1.bf16.msra.mxu0 0
    %328 = vmatprep.subr.bf16.mxu0 0
    %329 = vmatpush1.bf16.msra.mxu0 0
    %330 = vmatprep.subr.bf16.mxu0 0
    %331 = vmatpush1.bf16.msra.mxu0 %v312
    %332 = vmatprep.subr.bf16.mxu0 0
    %333 = vmatpush1.bf16.msra.mxu0 %v311
    %334 = vmatprep.subr.bf16.mxu0 0
    %335 = vmatpush2.bf16.msra.mxu0 0
    %336 = vmatprep.subr.bf16.mxu0 0
    %337 = vmatpush2.bf16.msra.mxu0 0
    %338 = vmatprep.subr.bf16.mxu0 0
    %339 = vmatpush2.bf16.msra.mxu0 0
    %340 = vmatprep.subr.bf16.mxu0 0
    %341 = vmatpush2.bf16.msra.mxu0 0
    %342 = vmatprep.subr.bf16.mxu0 0
    %343 = vmatpush2.bf16.msra.mxu0 0
    %344 = vmatprep.subr.bf16.mxu0 0
    %345 = vmatpush2.bf16.msra.mxu0 0
    %346 = vmatprep.subr.bf16.mxu0 0
    %347 = vmatpush2.bf16.msra.mxu0 0
    %348 = vmatprep.subr.bf16.mxu0 0
    %349 = vmatpush2.bf16.msra.mxu0 0
    %350 = vmatprep.mubr.bf16.mxu0 0
    %351 = vmatmul.mubr.bf16.gmra.mxu0 %v316
    %v352 = vpop.f32.mrf.mxu0
    %v353 = vadd.f32 %v297, %v352
    %v354 = vpop.f32.mrf.mxu0
    %v355 = vpop.f32.mrf.mxu0
    %v356 = vadd.f32 %v297, %v355
    %v357 = vpop.f32.mrf.mxu0
    %358 = vdwg.mxu0
    %v359 = vmax.f32 %v353, 0.0
    %v360 = vmax.f32 %v356, 0.0
    %v361 = vld [vmem:[%s12] sm:$0xf]
    %v362 = vld [vmem:[%s12 + $0x4] sm:$0xf]
    %v363 = vld [vmem:[%s12 + $0x8] sm:$0xf]
    %v364 = vld [vmem:[%s12 + $0xc] sm:$0xf]
    %v365 = vpack.c.bf16 %v273, %v272
    %v366 = vpack.c.bf16 %v275, %v274
    %v367 = vpack.c.bf16 %v277, %v276
    %v368 = vpack.c.bf16 %v279, %v278
    %v369 = vpack.c.bf16 %v281, %v280
    %v370 = vpack.c.bf16 %v283, %v282
    %v371 = vpack.c.bf16 %v285, %v284
    %v372 = vpack.c.bf16 %v287, %v286
    %v373 = vld [vmem:[%s6] sm:$0xf]
    %v374 = vld [vmem:[%s6 + $0x4] sm:$0xf]
    %v375 = vld [vmem:[%s6 + $0x8] sm:$0xf]
    %v376 = vld [vmem:[%s6 + $0xc] sm:$0xf]
    %v377 = vld [vmem:[%s6 + $0x10] sm:$0xf]
    %v378 = vld [vmem:[%s6 + $0x14] sm:$0xf]
    %v379 = vld [vmem:[%s6 + $0x18] sm:$0xf]
    %v380 = vld [vmem:[%s6 + $0x1c] sm:$0xf]
    %v381 = vld [vmem:[%s6 + $0x20] sm:$0xf]
    %v382 = vld [vmem:[%s6 + $0x24] sm:$0xf]
    %v383 = vld [vmem:[%s6 + $0x28] sm:$0xf]
    %v384 = vld [vmem:[%s6 + $0x2c] sm:$0xf]
    %v385 = vld [vmem:[%s6 + $0x30] sm:$0xf]
    %v386 = vld [vmem:[%s6 + $0x34] sm:$0xf]
    %v387 = vld [vmem:[%s6 + $0x38] sm:$0xf]
    %v388 = vld [vmem:[%s6 + $0x3c] sm:$0xf]
    %v389 = vld [vmem:[%s13] sm:$0xf]
    %v390 = vld [vmem:[%s13 + $0x4] sm:$0xf]
    %v391 = vld [vmem:[%s13 + $0x8] sm:$0xf]
    %v392 = vld [vmem:[%s13 + $0xc] sm:$0xf]
    %v393 = vpack.c.bf16 %v360, %v359
    %v398 = vunpack.c.l.b16 %v389
    %v399 = vunpack.c.l.b16 %v390
    %v400 = vunpack.c.l.b16 %v391
    %v401 = vunpack.c.l.b16 %v392
    %v402 = vpack.c.b16 %v399, %v398
    %v403 = vpack.c.b16 %v401, %v400
    %v407 = vsel %vm150, %v393, 0
    %409 = vmatprep.subr.bf16.mxu0 0
    %410 = vmatpush1.bf16.msra.mxu0 0
    %411 = vmatprep.subr.bf16.mxu0 0
    %412 = vmatpush1.bf16.msra.mxu0 0
    %413 = vmatprep.subr.bf16.mxu0 0
    %414 = vmatpush1.bf16.msra.mxu0 0
    %415 = vmatprep.subr.bf16.mxu0 0
    %416 = vmatpush1.bf16.msra.mxu0 0
    %417 = vmatprep.subr.bf16.mxu0 0
    %418 = vmatpush1.bf16.msra.mxu0 0
    %419 = vmatprep.subr.bf16.mxu0 0
    %420 = vmatpush1.bf16.msra.mxu0 0
    %421 = vmatprep.subr.bf16.mxu0 0
    %422 = vmatpush1.bf16.msra.mxu0 %v403
    %423 = vmatprep.subr.bf16.mxu0 0
    %424 = vmatpush1.bf16.msra.mxu0 %v402
    %425 = vmatprep.subr.bf16.mxu0 0
    %426 = vmatpush2.bf16.msra.mxu0 0
    %427 = vmatprep.subr.bf16.mxu0 0
    %428 = vmatpush2.bf16.msra.mxu0 0
    %429 = vmatprep.subr.bf16.mxu0 0
    %430 = vmatpush2.bf16.msra.mxu0 0
    %431 = vmatprep.subr.bf16.mxu0 0
    %432 = vmatpush2.bf16.msra.mxu0 0
    %433 = vmatprep.subr.bf16.mxu0 0
    %434 = vmatpush2.bf16.msra.mxu0 0
    %435 = vmatprep.subr.bf16.mxu0 0
    %436 = vmatpush2.bf16.msra.mxu0 0
    %437 = vmatprep.subr.bf16.mxu0 0
    %438 = vmatpush2.bf16.msra.mxu0 0
    %439 = vmatprep.subr.bf16.mxu0 0
    %440 = vmatpush2.bf16.msra.mxu0 0
    %441 = vmatprep.mubr.bf16.mxu0 0
    %442 = vmatmul.mubr.bf16.gmra.mxu0 %v407
    %v443 = vpop.f32.mrf.mxu0
    %v444 = vadd.f32 0.0, %v443
    %v445 = vpop.f32.mrf.mxu0
    %v446 = vpop.f32.mrf.mxu0
    %v447 = vadd.f32 0.0, %v446
    %v448 = vpop.f32.mrf.mxu0
    %449 = vdwg.mxu0
    %v450 = vpack.c.bf16 %v447, %v444
    %v467 = vunpack.c.l.b16 %v373
    %v468 = vunpack.c.l.b16 %v374
    %v469 = vunpack.c.l.b16 %v375
    %v470 = vunpack.c.l.b16 %v376
    %v471 = vunpack.c.l.b16 %v377
    %v472 = vunpack.c.l.b16 %v378
    %v473 = vunpack.c.l.b16 %v379
    %v474 = vunpack.c.l.b16 %v380
    %v475 = vunpack.c.l.b16 %v381
    %v476 = vunpack.c.l.b16 %v382
    %v477 = vunpack.c.l.b16 %v383
    %v478 = vunpack.c.l.b16 %v384
    %v479 = vunpack.c.l.b16 %v385
    %v480 = vunpack.c.l.b16 %v386
    %v481 = vunpack.c.l.b16 %v387
    %v482 = vunpack.c.l.b16 %v388
    %v483 = vpack.c.b16 %v468, %v467
    %v484 = vpack.c.b16 %v470, %v469
    %v485 = vpack.c.b16 %v472, %v471
    %v486 = vpack.c.b16 %v474, %v473
    %v487 = vpack.c.b16 %v476, %v475
    %v488 = vpack.c.b16 %v478, %v477
    %v489 = vpack.c.b16 %v480, %v479
    %v490 = vpack.c.b16 %v482, %v481
    %vm491 = vcmask 130048
    %v493 = vsel %vm491, %v483, 0
    %v496 = vsel %vm491, %v484, 0
    %v499 = vsel %vm491, %v485, 0
    %v502 = vsel %vm491, %v486, 0
    %v505 = vsel %vm491, %v487, 0
    %v508 = vsel %vm491, %v488, 0
    %v511 = vsel %vm491, %v489, 0
    %v514 = vsel %vm491, %v490, 0
    %516 = vmatprep.subr.bf16.mxu0 0
    %517 = vmatpush1.bf16.msra.mxu0 0
    %518 = vmatprep.subr.bf16.mxu0 0
    %519 = vmatpush1.bf16.msra.mxu0 0
    %520 = vmatprep.subr.bf16.mxu0 0
    %521 = vmatpush1.bf16.msra.mxu0 0
    %522 = vmatprep.subr.bf16.mxu0 0
    %523 = vmatpush1.bf16.msra.mxu0 0
    %524 = vmatprep.subr.bf16.mxu0 0
    %525 = vmatpush1.bf16.msra.mxu0 0
    %526 = vmatprep.subr.bf16.mxu0 0
    %527 = vmatpush1.bf16.msra.mxu0 0
    %528 = vmatprep.subr.bf16.mxu0 0
    %529 = vmatpush1.bf16.msra.mxu0 0
    %530 = vmatprep.subr.bf16.mxu0 0
    %531 = vmatpush1.bf16.msra.mxu0 %v450
    %532 = vmatprep.subr.bf16.mxu0 0
    %533 = vmatpush2.bf16.msra.mxu0 0
    %534 = vmatprep.subr.bf16.mxu0 0
    %535 = vmatpush2.bf16.msra.mxu0 0
    %536 = vmatprep.subr.bf16.mxu0 0
    %537 = vmatpush2.bf16.msra.mxu0 0
    %538 = vmatprep.subr.bf16.mxu0 0
    %539 = vmatpush2.bf16.msra.mxu0 0
    %540 = vmatprep.subr.bf16.mxu0 0
    %541 = vmatpush2.bf16.msra.mxu0 0
    %542 = vmatprep.subr.bf16.mxu0 0
    %543 = vmatpush2.bf16.msra.mxu0 0
    %544 = vmatprep.subr.bf16.mxu0 0
    %545 = vmatpush2.bf16.msra.mxu0 0
    %546 = vmatprep.subr.bf16.mxu0 0
    %547 = vmatpush2.bf16.msra.mxu0 0
    %548 = vmatprep.mubr.bf16.mxu0 0
    %549 = vmatmul.mubr.bf16.gmra.mxu0 %v493
    %v550 = vpop.f32.mrf.mxu0
    %v551 = vadd.f32 0.0, %v550
    %v552 = vpop.f32.mrf.mxu0
    %v553 = vpop.f32.mrf.mxu0
    %v554 = vadd.f32 0.0, %v553
    %v555 = vpop.f32.mrf.mxu0
    %556 = vmatprep.mubr.bf16.mxu0 0
    %557 = vmatmul.mubr.bf16.gmra.mxu0 %v496
    %v558 = vpop.f32.mrf.mxu0
    %v559 = vadd.f32 0.0, %v558
    %v560 = vpop.f32.mrf.mxu0
    %v561 = vpop.f32.mrf.mxu0
    %v562 = vadd.f32 0.0, %v561
    %v563 = vpop.f32.mrf.mxu0
    %564 = vmatprep.mubr.bf16.mxu0 0
    %565 = vmatmul.mubr.bf16.gmra.mxu0 %v499
    %v566 = vpop.f32.mrf.mxu0
    %v567 = vadd.f32 0.0, %v566
    %v568 = vpop.f32.mrf.mxu0
    %v569 = vpop.f32.mrf.mxu0
    %v570 = vadd.f32 0.0, %v569
    %v571 = vpop.f32.mrf.mxu0
    %572 = vmatprep.mubr.bf16.mxu0 0
    %573 = vmatmul.mubr.bf16.gmra.mxu0 %v502
    %v574 = vpop.f32.mrf.mxu0
    %v575 = vadd.f32 0.0, %v574
    %v576 = vpop.f32.mrf.mxu0
    %v577 = vpop.f32.mrf.mxu0
    %v578 = vadd.f32 0.0, %v577
    %v579 = vpop.f32.mrf.mxu0
    %580 = vmatprep.mubr.bf16.mxu0 0
    %581 = vmatmul.mubr.bf16.gmra.mxu0 %v505
    %v582 = vpop.f32.mrf.mxu0
    %v583 = vadd.f32 0.0, %v582
    %v584 = vpop.f32.mrf.mxu0
    %v585 = vpop.f32.mrf.mxu0
    %v586 = vadd.f32 0.0, %v585
    %v587 = vpop.f32.mrf.mxu0
    %588 = vmatprep.mubr.bf16.mxu0 0
    %589 = vmatmul.mubr.bf16.gmra.mxu0 %v508
    %v590 = vpop.f32.mrf.mxu0
    %v591 = vadd.f32 0.0, %v590
    %v592 = vpop.f32.mrf.mxu0
    %v593 = vpop.f32.mrf.mxu0
    %v594 = vadd.f32 0.0, %v593
    %v595 = vpop.f32.mrf.mxu0
    %596 = vmatprep.mubr.bf16.mxu0 0
    %597 = vmatmul.mubr.bf16.gmra.mxu0 %v511
    %v598 = vpop.f32.mrf.mxu0
    %v599 = vadd.f32 0.0, %v598
    %v600 = vpop.f32.mrf.mxu0
    %v601 = vpop.f32.mrf.mxu0
    %v602 = vadd.f32 0.0, %v601
    %v603 = vpop.f32.mrf.mxu0
    %604 = vmatprep.mubr.bf16.mxu0 0
    %605 = vmatmul.mubr.bf16.gmra.mxu0 %v514
    %v606 = vpop.f32.mrf.mxu0
    %v607 = vadd.f32 0.0, %v606
    %v608 = vpop.f32.mrf.mxu0
    %v609 = vpop.f32.mrf.mxu0
    %v610 = vadd.f32 0.0, %v609
    %v611 = vpop.f32.mrf.mxu0
    %612 = vdwg.mxu0
    %v617 = vunpack.c.l.b16 %v361
    %v618 = vunpack.c.l.b16 %v362
    %v619 = vunpack.c.l.b16 %v363
    %v620 = vunpack.c.l.b16 %v364
    %v621 = vpack.c.b16 %v618, %v617
    %v622 = vpack.c.b16 %v620, %v619
    %v626 = vsel %vm150, %v365, 0
    %v629 = vsel %vm150, %v366, 0
    %v632 = vsel %vm150, %v367, 0
    %v635 = vsel %vm150, %v368, 0
    %v638 = vsel %vm150, %v369, 0
    %v641 = vsel %vm150, %v370, 0
    %v644 = vsel %vm150, %v371, 0
    %v647 = vsel %vm150, %v372, 0
    %649 = vmatprep.subr.bf16.mxu0 0
    %650 = vmatpush1.bf16.msra.mxu0 0
    %651 = vmatprep.subr.bf16.mxu0 0
    %652 = vmatpush1.bf16.msra.mxu0 0
    %653 = vmatprep.subr.bf16.mxu0 0
    %654 = vmatpush1.bf16.msra.mxu0 0
    %655 = vmatprep.subr.bf16.mxu0 0
    %656 = vmatpush1.bf16.msra.mxu0 0
    %657 = vmatprep.subr.bf16.mxu0 0
    %658 = vmatpush1.bf16.msra.mxu0 0
    %659 = vmatprep.subr.bf16.mxu0 0
    %660 = vmatpush1.bf16.msra.mxu0 0
    %661 = vmatprep.subr.bf16.mxu0 0
    %662 = vmatpush1.bf16.msra.mxu0 %v622
    %663 = vmatprep.subr.bf16.mxu0 0
    %664 = vmatpush1.bf16.msra.mxu0 %v621
    %665 = vmatprep.subr.bf16.mxu0 0
    %666 = vmatpush2.bf16.msra.mxu0 0
    %667 = vmatprep.subr.bf16.mxu0 0
    %668 = vmatpush2.bf16.msra.mxu0 0
    %669 = vmatprep.subr.bf16.mxu0 0
    %670 = vmatpush2.bf16.msra.mxu0 0
    %671 = vmatprep.subr.bf16.mxu0 0
    %672 = vmatpush2.bf16.msra.mxu0 0
    %673 = vmatprep.subr.bf16.mxu0 0
    %674 = vmatpush2.bf16.msra.mxu0 0
    %675 = vmatprep.subr.bf16.mxu0 0
    %676 = vmatpush2.bf16.msra.mxu0 0
    %677 = vmatprep.subr.bf16.mxu0 0
    %678 = vmatpush2.bf16.msra.mxu0 0
    %679 = vmatprep.subr.bf16.mxu0 0
    %680 = vmatpush2.bf16.msra.mxu0 0
    %681 = vmatprep.mubr.bf16.mxu0 0
    %682 = vmatmul.mubr.bf16.gmra.mxu0 %v626
    %v683 = vpop.f32.mrf.mxu0
    %v684 = vadd.f32 %v551, %v683
    %v685 = vpop.f32.mrf.mxu0
    %v686 = vpop.f32.mrf.mxu0
    %v687 = vadd.f32 %v554, %v686
    %v688 = vpop.f32.mrf.mxu0
    %689 = vmatprep.mubr.bf16.mxu0 0
    %690 = vmatmul.mubr.bf16.gmra.mxu0 %v629
    %v691 = vpop.f32.mrf.mxu0
    %v692 = vadd.f32 %v559, %v691
    %v693 = vpop.f32.mrf.mxu0
    %v694 = vpop.f32.mrf.mxu0
    %v695 = vadd.f32 %v562, %v694
    %v696 = vpop.f32.mrf.mxu0
    %697 = vmatprep.mubr.bf16.mxu0 0
    %698 = vmatmul.mubr.bf16.gmra.mxu0 %v632
    %v699 = vpop.f32.mrf.mxu0
    %v700 = vadd.f32 %v567, %v699
    %v701 = vpop.f32.mrf.mxu0
    %v702 = vpop.f32.mrf.mxu0
    %v703 = vadd.f32 %v570, %v702
    %v704 = vpop.f32.mrf.mxu0
    %705 = vmatprep.mubr.bf16.mxu0 0
    %706 = vmatmul.mubr.bf16.gmra.mxu0 %v635
    %v707 = vpop.f32.mrf.mxu0
    %v708 = vadd.f32 %v575, %v707
    %v709 = vpop.f32.mrf.mxu0
    %v710 = vpop.f32.mrf.mxu0
    %v711 = vadd.f32 %v578, %v710
    %v712 = vpop.f32.mrf.mxu0
    %713 = vmatprep.mubr.bf16.mxu0 0
    %714 = vmatmul.mubr.bf16.gmra.mxu0 %v638
    %v715 = vpop.f32.mrf.mxu0
    %v716 = vadd.f32 %v583, %v715
    %v717 = vpop.f32.mrf.mxu0
    %v718 = vpop.f32.mrf.mxu0
    %v719 = vadd.f32 %v586, %v718
    %v720 = vpop.f32.mrf.mxu0
    %721 = vmatprep.mubr.bf16.mxu0 0
    %722 = vmatmul.mubr.bf16.gmra.mxu0 %v641
    %v723 = vpop.f32.mrf.mxu0
    %v724 = vadd.f32 %v591, %v723
    %v725 = vpop.f32.mrf.mxu0
    %v726 = vpop.f32.mrf.mxu0
    %v727 = vadd.f32 %v594, %v726
    %v728 = vpop.f32.mrf.mxu0
    %729 = vmatprep.mubr.bf16.mxu0 0
    %730 = vmatmul.mubr.bf16.gmra.mxu0 %v644
    %v731 = vpop.f32.mrf.mxu0
    %v732 = vadd.f32 %v599, %v731
    %v733 = vpop.f32.mrf.mxu0
    %v734 = vpop.f32.mrf.mxu0
    %v735 = vadd.f32 %v602, %v734
    %v736 = vpop.f32.mrf.mxu0
    %737 = vmatprep.mubr.bf16.mxu0 0
    %738 = vmatmul.mubr.bf16.gmra.mxu0 %v647
    %v739 = vpop.f32.mrf.mxu0
    %v740 = vadd.f32 %v607, %v739
    %v741 = vpop.f32.mrf.mxu0
    %v742 = vpop.f32.mrf.mxu0
    %v743 = vadd.f32 %v610, %v742
    %v744 = vpop.f32.mrf.mxu0
    %745 = vdwg.mxu0
    %v746 = vlaneseq
    %v747 = vshrl.u32 %v746, 7
    %v748 = vsub.s32 0, %v747
    %v749 = vrot.slane %v66, %v748
    %v750 = vadd.f32 %v684, %v749
    %v751 = vadd.f32 %v687, %v749
    %v752 = vadd.f32 %v692, %v749
    %v753 = vadd.f32 %v695, %v749
    %v754 = vadd.f32 %v700, %v749
    %v755 = vadd.f32 %v703, %v749
    %v756 = vadd.f32 %v708, %v749
    %v757 = vadd.f32 %v711, %v749
    %v758 = vadd.f32 %v716, %v749
    %v759 = vadd.f32 %v719, %v749
    %v760 = vadd.f32 %v724, %v749
    %v761 = vadd.f32 %v727, %v749
    %v762 = vadd.f32 %v732, %v749
    %v763 = vadd.f32 %v735, %v749
    %v764 = vadd.f32 %v740, %v749
    %v765 = vadd.f32 %v743, %v749
    %v766 = vmax.f32 %v750, 0.0
    %v767 = vmax.f32 %v751, 0.0
    %v768 = vmax.f32 %v752, 0.0
    %v769 = vmax.f32 %v753, 0.0
    %v770 = vmax.f32 %v754, 0.0
    %v771 = vmax.f32 %v755, 0.0
    %v772 = vmax.f32 %v756, 0.0
    %v773 = vmax.f32 %v757, 0.0
    %v774 = vmax.f32 %v758, 0.0
    %v775 = vmax.f32 %v759, 0.0
    %v776 = vmax.f32 %v760, 0.0
    %v777 = vmax.f32 %v761, 0.0
    %v778 = vmax.f32 %v762, 0.0
    %v779 = vmax.f32 %v763, 0.0
    %v780 = vmax.f32 %v764, 0.0
    %v781 = vmax.f32 %v765, 0.0
    %v782 = vld [vmem:[%s14] sm:$0xf]
    %v783 = vld [vmem:[%s14 + $0x4] sm:$0xf]
    %v784 = vld [vmem:[%s14 + $0x8] sm:$0xf]
    %v785 = vld [vmem:[%s14 + $0xc] sm:$0xf]
    %v786 = vpack.c.bf16 %v767, %v766
    %v787 = vpack.c.bf16 %v769, %v768
    %v788 = vpack.c.bf16 %v771, %v770
    %v789 = vpack.c.bf16 %v773, %v772
    %v790 = vpack.c.bf16 %v775, %v774
    %v791 = vpack.c.bf16 %v777, %v776
    %v792 = vpack.c.bf16 %v779, %v778
    %v793 = vpack.c.bf16 %v781, %v780
    %v794 = vlaneseq
    %v795 = vshrl.u32 %v794, 7
    %v796 = vsub.s32 0, %v795
    %v797 = vrot.slane %v68, %v796
    %v802 = vunpack.c.l.b16 %v782
    %v803 = vunpack.c.l.b16 %v783
    %v804 = vunpack.c.l.b16 %v784
    %v805 = vunpack.c.l.b16 %v785
    %v806 = vpack.c.b16 %v803, %v802
    %v807 = vpack.c.b16 %v805, %v804
    %v811 = vsel %vm150, %v786, 0
    %v814 = vsel %vm150, %v787, 0
    %v817 = vsel %vm150, %v788, 0
    %v820 = vsel %vm150, %v789, 0
    %v823 = vsel %vm150, %v790, 0
    %v826 = vsel %vm150, %v791, 0
    %v829 = vsel %vm150, %v792, 0
    %v832 = vsel %vm150, %v793, 0
    %834 = vmatprep.subr.bf16.mxu0 0
    %835 = vmatpush1.bf16.msra.mxu0 0
    %836 = vmatprep.subr.bf16.mxu0 0
    %837 = vmatpush1.bf16.msra.mxu0 0
    %838 = vmatprep.subr.bf16.mxu0 0
    %839 = vmatpush1.bf16.msra.mxu0 0
    %840 = vmatprep.subr.bf16.mxu0 0
    %841 = vmatpush1.bf16.msra.mxu0 0
    %842 = vmatprep.subr.bf16.mxu0 0
    %843 = vmatpush1.bf16.msra.mxu0 0
    %844 = vmatprep.subr.bf16.mxu0 0
    %845 = vmatpush1.bf16.msra.mxu0 0
    %846 = vmatprep.subr.bf16.mxu0 0
    %847 = vmatpush1.bf16.msra.mxu0 %v807
    %848 = vmatprep.subr.bf16.mxu0 0
    %849 = vmatpush1.bf16.msra.mxu0 %v806
    %850 = vmatprep.subr.bf16.mxu0 0
    %851 = vmatpush2.bf16.msra.mxu0 0
    %852 = vmatprep.subr.bf16.mxu0 0
    %853 = vmatpush2.bf16.msra.mxu0 0
    %854 = vmatprep.subr.bf16.mxu0 0
    %855 = vmatpush2.bf16.msra.mxu0 0
    %856 = vmatprep.subr.bf16.mxu0 0
    %857 = vmatpush2.bf16.msra.mxu0 0
    %858 = vmatprep.subr.bf16.mxu0 0
    %859 = vmatpush2.bf16.msra.mxu0 0
    %860 = vmatprep.subr.bf16.mxu0 0
    %861 = vmatpush2.bf16.msra.mxu0 0
    %862 = vmatprep.subr.bf16.mxu0 0
    %863 = vmatpush2.bf16.msra.mxu0 0
    %864 = vmatprep.subr.bf16.mxu0 0
    %865 = vmatpush2.bf16.msra.mxu0 0
    %866 = vmatprep.mubr.bf16.mxu0 0
    %867 = vmatmul.mubr.bf16.gmra.mxu0 %v811
    %v868 = vpop.f32.mrf.mxu0
    %v869 = vadd.f32 %v797, %v868
    %v870 = vpop.f32.mrf.mxu0
    %v871 = vpop.f32.mrf.mxu0
    %v872 = vadd.f32 %v797, %v871
    %v873 = vpop.f32.mrf.mxu0
    %874 = vmatprep.mubr.bf16.mxu0 0
    %875 = vmatmul.mubr.bf16.gmra.mxu0 %v814
    %v876 = vpop.f32.mrf.mxu0
    %v877 = vadd.f32 %v797, %v876
    %v878 = vpop.f32.mrf.mxu0
    %v879 = vpop.f32.mrf.mxu0
    %v880 = vadd.f32 %v797, %v879
    %v881 = vpop.f32.mrf.mxu0
    %882 = vmatprep.mubr.bf16.mxu0 0
    %883 = vmatmul.mubr.bf16.gmra.mxu0 %v817
    %v884 = vpop.f32.mrf.mxu0
    %v885 = vadd.f32 %v797, %v884
    %v886 = vpop.f32.mrf.mxu0
    %v887 = vpop.f32.mrf.mxu0
    %v888 = vadd.f32 %v797, %v887
    %v889 = vpop.f32.mrf.mxu0
    %890 = vmatprep.mubr.bf16.mxu0 0
    %891 = vmatmul.mubr.bf16.gmra.mxu0 %v820
    %v892 = vpop.f32.mrf.mxu0
    %v893 = vadd.f32 %v797, %v892
    %v894 = vpop.f32.mrf.mxu0
    %v895 = vpop.f32.mrf.mxu0
    %v896 = vadd.f32 %v797, %v895
    %v897 = vpop.f32.mrf.mxu0
    %898 = vmatprep.mubr.bf16.mxu0 0
    %899 = vmatmul.mubr.bf16.gmra.mxu0 %v823
    %v900 = vpop.f32.mrf.mxu0
    %v901 = vadd.f32 %v797, %v900
    %v902 = vpop.f32.mrf.mxu0
    %v903 = vpop.f32.mrf.mxu0
    %v904 = vadd.f32 %v797, %v903
    %v905 = vpop.f32.mrf.mxu0
    %906 = vmatprep.mubr.bf16.mxu0 0
    %907 = vmatmul.mubr.bf16.gmra.mxu0 %v826
    %v908 = vpop.f32.mrf.mxu0
    %v909 = vadd.f32 %v797, %v908
    %v910 = vpop.f32.mrf.mxu0
    %v911 = vpop.f32.mrf.mxu0
    %v912 = vadd.f32 %v797, %v911
    %v913 = vpop.f32.mrf.mxu0
    %914 = vmatprep.mubr.bf16.mxu0 0
    %915 = vmatmul.mubr.bf16.gmra.mxu0 %v829
    %v916 = vpop.f32.mrf.mxu0
    %v917 = vadd.f32 %v797, %v916
    %v918 = vpop.f32.mrf.mxu0
    %v919 = vpop.f32.mrf.mxu0
    %v920 = vadd.f32 %v797, %v919
    %v921 = vpop.f32.mrf.mxu0
    %922 = vmatprep.mubr.bf16.mxu0 0
    %923 = vmatmul.mubr.bf16.gmra.mxu0 %v832
    %v924 = vpop.f32.mrf.mxu0
    %v925 = vadd.f32 %v797, %v924
    %v926 = vpop.f32.mrf.mxu0
    %v927 = vpop.f32.mrf.mxu0
    %v928 = vadd.f32 %v797, %v927
    %v929 = vpop.f32.mrf.mxu0
    %930 = vdwg.mxu0
    %v931 = vtanh.pop %v869
    %v932 = vtanh.pop %v872
    %v933 = vtanh.pop %v877
    %v934 = vtanh.pop %v880
    %v935 = vtanh.pop %v885
    %v936 = vtanh.pop %v888
    %v937 = vtanh.pop %v893
    %v938 = vtanh.pop %v896
    %v939 = vtanh.pop %v901
    %v940 = vtanh.pop %v904
    %v941 = vtanh.pop %v909
    %v942 = vtanh.pop %v912
    %v943 = vtanh.pop %v917
    %v944 = vtanh.pop %v920
    %v945 = vtanh.pop %v925
    %v946 = vtanh.pop %v928
    %v947 = vld [vmem:[%s15] sm:$0xf]
    %v948 = vld [vmem:[%s15 + $0x4] sm:$0xf]
    %v949 = vpack.c.bf16 %v932, %v931
    %v950 = vpack.c.bf16 %v934, %v933
    %v951 = vpack.c.bf16 %v936, %v935
    %v952 = vpack.c.bf16 %v938, %v937
    %v953 = vpack.c.bf16 %v940, %v939
    %v954 = vpack.c.bf16 %v942, %v941
    %v955 = vpack.c.bf16 %v944, %v943
    %v956 = vpack.c.bf16 %v946, %v945
    %v957 = vlaneseq
    %v958 = vshrl.u32 %v957, 7
    %v959 = vsub.s32 0, %v958
    %v960 = vrot.slane %v69, %v959
    %v963 = vunpack.c.l.b16 %v947
    %v964 = vunpack.c.l.b16 %v948
    %v965 = vpack.c.b16 %v964, %v963
    %v968 = vsel %vm491, %v949, 0
    %v971 = vsel %vm491, %v950, 0
    %v974 = vsel %vm491, %v951, 0
    %v977 = vsel %vm491, %v952, 0
    %v980 = vsel %vm491, %v953, 0
    %v983 = vsel %vm491, %v954, 0
    %v986 = vsel %vm491, %v955, 0
    %v989 = vsel %vm491, %v956, 0
    %991 = vmatprep.subr.bf16.mxu0 0
    %992 = vmatpush1.bf16.msra.mxu0 0
    %993 = vmatprep.subr.bf16.mxu0 0
    %994 = vmatpush1.bf16.msra.mxu0 0
    %995 = vmatprep.subr.bf16.mxu0 0
    %996 = vmatpush1.bf16.msra.mxu0 0
    %997 = vmatprep.subr.bf16.mxu0 0
    %998 = vmatpush1.bf16.msra.mxu0 0
    %999 = vmatprep.subr.bf16.mxu0 0
    %1000 = vmatpush1.bf16.msra.mxu0 0
    %1001 = vmatprep.subr.bf16.mxu0 0
    %1002 = vmatpush1.bf16.msra.mxu0 0
    %1003 = vmatprep.subr.bf16.mxu0 0
    %1004 = vmatpush1.bf16.msra.mxu0 0
    %1005 = vmatprep.subr.bf16.mxu0 0
    %1006 = vmatpush1.bf16.msra.mxu0 %v965
    %1007 = vmatprep.subr.bf16.mxu0 0
    %1008 = vmatpush2.bf16.msra.mxu0 0
    %1009 = vmatprep.subr.bf16.mxu0 0
    %1010 = vmatpush2.bf16.msra.mxu0 0
    %1011 = vmatprep.subr.bf16.mxu0 0
    %1012 = vmatpush2.bf16.msra.mxu0 0
    %1013 = vmatprep.subr.bf16.mxu0 0
    %1014 = vmatpush2.bf16.msra.mxu0 0
    %1015 = vmatprep.subr.bf16.mxu0 0
    %1016 = vmatpush2.bf16.msra.mxu0 0
    %1017 = vmatprep.subr.bf16.mxu0 0
    %1018 = vmatpush2.bf16.msra.mxu0 0
    %1019 = vmatprep.subr.bf16.mxu0 0
    %1020 = vmatpush2.bf16.msra.mxu0 0
    %1021 = vmatprep.subr.bf16.mxu0 0
    %1022 = vmatpush2.bf16.msra.mxu0 0
    %1023 = vmatprep.mubr.bf16.mxu0 0
    %1024 = vmatmul.mubr.bf16.gmra.mxu0 %v968
    %v1025 = vpop.f32.mrf.mxu0
    %v1026 = vadd.f32 %v960, %v1025
    %v1027 = vpop.f32.mrf.mxu0
    %v1028 = vpop.f32.mrf.mxu0
    %v1029 = vadd.f32 %v960, %v1028
    %v1030 = vpop.f32.mrf.mxu0
    %1031 = vmatprep.mubr.bf16.mxu0 0
    %1032 = vmatmul.mubr.bf16.gmra.mxu0 %v971
    %v1033 = vpop.f32.mrf.mxu0
    %v1034 = vadd.f32 %v960, %v1033
    %v1035 = vpop.f32.mrf.mxu0
    %v1036 = vpop.f32.mrf.mxu0
    %v1037 = vadd.f32 %v960, %v1036
    %v1038 = vpop.f32.mrf.mxu0
    %1039 = vmatprep.mubr.bf16.mxu0 0
    %1040 = vmatmul.mubr.bf16.gmra.mxu0 %v974
    %v1041 = vpop.f32.mrf.mxu0
    %v1042 = vadd.f32 %v960, %v1041
    %v1043 = vpop.f32.mrf.mxu0
    %v1044 = vpop.f32.mrf.mxu0
    %v1045 = vadd.f32 %v960, %v1044
    %v1046 = vpop.f32.mrf.mxu0
    %1047 = vmatprep.mubr.bf16.mxu0 0
    %1048 = vmatmul.mubr.bf16.gmra.mxu0 %v977
    %v1049 = vpop.f32.mrf.mxu0
    %v1050 = vadd.f32 %v960, %v1049
    %v1051 = vpop.f32.mrf.mxu0
    %v1052 = vpop.f32.mrf.mxu0
    %v1053 = vadd.f32 %v960, %v1052
    %v1054 = vpop.f32.mrf.mxu0
    %1055 = vmatprep.mubr.bf16.mxu0 0
    %1056 = vmatmul.mubr.bf16.gmra.mxu0 %v980
    %v1057 = vpop.f32.mrf.mxu0
    %v1058 = vadd.f32 %v960, %v1057
    %v1059 = vpop.f32.mrf.mxu0
    %v1060 = vpop.f32.mrf.mxu0
    %v1061 = vadd.f32 %v960, %v1060
    %v1062 = vpop.f32.mrf.mxu0
    %1063 = vmatprep.mubr.bf16.mxu0 0
    %1064 = vmatmul.mubr.bf16.gmra.mxu0 %v983
    %v1065 = vpop.f32.mrf.mxu0
    %v1066 = vadd.f32 %v960, %v1065
    %v1067 = vpop.f32.mrf.mxu0
    %v1068 = vpop.f32.mrf.mxu0
    %v1069 = vadd.f32 %v960, %v1068
    %v1070 = vpop.f32.mrf.mxu0
    %1071 = vmatprep.mubr.bf16.mxu0 0
    %1072 = vmatmul.mubr.bf16.gmra.mxu0 %v986
    %v1073 = vpop.f32.mrf.mxu0
    %v1074 = vadd.f32 %v960, %v1073
    %v1075 = vpop.f32.mrf.mxu0
    %v1076 = vpop.f32.mrf.mxu0
    %v1077 = vadd.f32 %v960, %v1076
    %v1078 = vpop.f32.mrf.mxu0
    %1079 = vmatprep.mubr.bf16.mxu0 0
    %1080 = vmatmul.mubr.bf16.gmra.mxu0 %v989
    %v1081 = vpop.f32.mrf.mxu0
    %v1082 = vadd.f32 %v960, %v1081
    %v1083 = vpop.f32.mrf.mxu0
    %v1084 = vpop.f32.mrf.mxu0
    %v1085 = vadd.f32 %v960, %v1084
    %v1086 = vpop.f32.mrf.mxu0
    %1087 = vdwg.mxu0
    %v1088 = vld [vmem:[%s7] sm:$0xf]
    %v1089 = vld [vmem:[%s7 + $0x4] sm:$0xf]
    %v1090 = vld [vmem:[%s7 + $0x8] sm:$0xf]
    %v1091 = vld [vmem:[%s7 + $0xc] sm:$0xf]
    %v1092 = vld [vmem:[%s7 + $0x10] sm:$0xf]
    %v1093 = vld [vmem:[%s7 + $0x14] sm:$0xf]
    %v1094 = vld [vmem:[%s7 + $0x18] sm:$0xf]
    %v1095 = vld [vmem:[%s7 + $0x1c] sm:$0xf]
    %v1096 = vld [vmem:[%s7 + $0x20] sm:$0xf]
    %v1097 = vld [vmem:[%s7 + $0x24] sm:$0xf]
    %v1098 = vld [vmem:[%s7 + $0x28] sm:$0xf]
    %v1099 = vld [vmem:[%s7 + $0x2c] sm:$0xf]
    %v1100 = vld [vmem:[%s7 + $0x30] sm:$0xf]
    %v1101 = vld [vmem:[%s7 + $0x34] sm:$0xf]
    %v1102 = vld [vmem:[%s7 + $0x38] sm:$0xf]
    %v1103 = vld [vmem:[%s7 + $0x3c] sm:$0xf]
    %v1104 = vunpack.c.l.bf16 %v1088
    %v1105 = vunpack.c.l.bf16 %v1089
    %v1106 = vunpack.c.l.bf16 %v1090
    %v1107 = vunpack.c.l.bf16 %v1091
    %v1108 = vunpack.c.l.bf16 %v1092
    %v1109 = vunpack.c.l.bf16 %v1093
    %v1110 = vunpack.c.l.bf16 %v1094
    %v1111 = vunpack.c.l.bf16 %v1095
    %v1112 = vunpack.c.l.bf16 %v1096
    %v1113 = vunpack.c.l.bf16 %v1097
    %v1114 = vunpack.c.l.bf16 %v1098
    %v1115 = vunpack.c.l.bf16 %v1099
    %v1116 = vunpack.c.l.bf16 %v1100
    %v1117 = vunpack.c.l.bf16 %v1101
    %v1118 = vunpack.c.l.bf16 %v1102
    %v1119 = vunpack.c.l.bf16 %v1103
    %1121 = vset.pattern.permute.xlu0 0
    %1122 = vperm.xlu0 %1121, %v1026
    %v1123 = vpop.permute.xlu0 %1122
    %1126 = vset.pattern.permute.xlu0 0
    %1127 = vperm.xlu0 %1126, %v1029
    %v1128 = vpop.permute.xlu0 %1127
    %1131 = vset.pattern.permute.xlu0 0
    %1132 = vperm.xlu0 %1131, %v1034
    %v1133 = vpop.permute.xlu0 %1132
    %1136 = vset.pattern.permute.xlu0 0
    %1137 = vperm.xlu0 %1136, %v1037
    %v1138 = vpop.permute.xlu0 %1137
    %1141 = vset.pattern.permute.xlu0 0
    %1142 = vperm.xlu0 %1141, %v1042
    %v1143 = vpop.permute.xlu0 %1142
    %1146 = vset.pattern.permute.xlu0 0
    %1147 = vperm.xlu0 %1146, %v1045
    %v1148 = vpop.permute.xlu0 %1147
    %1151 = vset.pattern.permute.xlu0 0
    %1152 = vperm.xlu0 %1151, %v1050
    %v1153 = vpop.permute.xlu0 %1152
    %1156 = vset.pattern.permute.xlu0 0
    %1157 = vperm.xlu0 %1156, %v1053
    %v1158 = vpop.permute.xlu0 %1157
    %1161 = vset.pattern.permute.xlu0 0
    %1162 = vperm.xlu0 %1161, %v1058
    %v1163 = vpop.permute.xlu0 %1162
    %1166 = vset.pattern.permute.xlu0 0
    %1167 = vperm.xlu0 %1166, %v1061
    %v1168 = vpop.permute.xlu0 %1167
    %1171 = vset.pattern.permute.xlu0 0
    %1172 = vperm.xlu0 %1171, %v1066
    %v1173 = vpop.permute.xlu0 %1172
    %1176 = vset.pattern.permute.xlu0 0
    %1177 = vperm.xlu0 %1176, %v1069
    %v1178 = vpop.permute.xlu0 %1177
    %1181 = vset.pattern.permute.xlu0 0
    %1182 = vperm.xlu0 %1181, %v1074
    %v1183 = vpop.permute.xlu0 %1182
    %1186 = vset.pattern.permute.xlu0 0
    %1187 = vperm.xlu0 %1186, %v1077
    %v1188 = vpop.permute.xlu0 %1187
    %1191 = vset.pattern.permute.xlu0 0
    %1192 = vperm.xlu0 %1191, %v1082
    %v1193 = vpop.permute.xlu0 %1192
    %1196 = vset.pattern.permute.xlu0 0
    %1197 = vperm.xlu0 %1196, %v1085
    %v1198 = vpop.permute.xlu0 %1197
    %v1200 = vmul.f32 %v1104, %v1123
    %v1201 = vmul.f32 %v1105, %v1128
    %v1202 = vmul.f32 %v1106, %v1133
    %v1203 = vmul.f32 %v1107, %v1138
    %v1204 = vmul.f32 %v1108, %v1143
    %v1205 = vmul.f32 %v1109, %v1148
    %v1206 = vmul.f32 %v1110, %v1153
    %v1207 = vmul.f32 %v1111, %v1158
    %v1208 = vmul.f32 %v1112, %v1163
    %v1209 = vmul.f32 %v1113, %v1168
    %v1210 = vmul.f32 %v1114, %v1173
    %v1211 = vmul.f32 %v1115, %v1178
    %v1212 = vmul.f32 %v1116, %v1183
    %v1213 = vmul.f32 %v1117, %v1188
    %v1214 = vmul.f32 %v1118, %v1193
    %v1215 = vmul.f32 %v1119, %v1198
    %v1216 = vpack.c.bf16 %v1201, %v1200
    %v1217 = vpack.c.bf16 %v1203, %v1202
    %v1218 = vpack.c.bf16 %v1205, %v1204
    %v1219 = vpack.c.bf16 %v1207, %v1206
    %v1220 = vpack.c.bf16 %v1209, %v1208
    %v1221 = vpack.c.bf16 %v1211, %v1210
    %v1222 = vpack.c.bf16 %v1213, %v1212
    %v1223 = vpack.c.bf16 %v1215, %v1214
    %v1226 = vunpack.c.l.b16 %v70
    %v1227 = vunpack.c.l.b16 %v71
    %v1228 = vpack.c.b16 %v1227, %v1226
    %1230 = vmatprep.subr.bf16.mxu0 0
    %1231 = vmatpush1.bf16.msra.mxu0 %v1223
    %1232 = vmatprep.subr.bf16.mxu0 0
    %1233 = vmatpush1.bf16.msra.mxu0 %v1222
    %1234 = vmatprep.subr.bf16.mxu0 0
    %1235 = vmatpush1.bf16.msra.mxu0 %v1221
    %1236 = vmatprep.subr.bf16.mxu0 0
    %1237 = vmatpush1.bf16.msra.mxu0 %v1220
    %1238 = vmatprep.subr.bf16.mxu0 0
    %1239 = vmatpush1.bf16.msra.mxu0 %v1219
    %1240 = vmatprep.subr.bf16.mxu0 0
    %1241 = vmatpush1.bf16.msra.mxu0 %v1218
    %1242 = vmatprep.subr.bf16.mxu0 0
    %1243 = vmatpush1.bf16.msra.mxu0 %v1217
    %1244 = vmatprep.subr.bf16.mxu0 0
    %1245 = vmatpush1.bf16.msra.mxu0 %v1216
    %1246 = vmatprep.subr.bf16.mxu0 0
    %1247 = vmatpush2.bf16.msra.mxu0 0
    %1248 = vmatprep.subr.bf16.mxu0 0
    %1249 = vmatpush2.bf16.msra.mxu0 0
    %1250 = vmatprep.subr.bf16.mxu0 0
    %1251 = vmatpush2.bf16.msra.mxu0 0
    %1252 = vmatprep.subr.bf16.mxu0 0
    %1253 = vmatpush2.bf16.msra.mxu0 0
    %1254 = vmatprep.subr.bf16.mxu0 0
    %1255 = vmatpush2.bf16.msra.mxu0 0
    %1256 = vmatprep.subr.bf16.mxu0 0
    %1257 = vmatpush2.bf16.msra.mxu0 0
    %1258 = vmatprep.subr.bf16.mxu0 0
    %1259 = vmatpush2.bf16.msra.mxu0 0
    %1260 = vmatprep.subr.bf16.mxu0 0
    %1261 = vmatpush2.bf16.msra.mxu0 0
    %1262 = vmatprep.mubr.bf16.mxu0 0
    %1263 = vmatmul.mubr.bf16.gmra.mxu0 %v1228
    %v1264 = vpop.f32.mrf.mxu0
    %v1265 = vadd.f32 0.0, %v1264
    %v1266 = vpop.f32.mrf.mxu0
    %v1267 = vpop.f32.mrf.mxu0
    %v1268 = vadd.f32 0.0, %v1267
    %v1269 = vpop.f32.mrf.mxu0
    %1270 = vdwg.mxu0
    %v1271 = vld [vmem:[%s2] sm:$0xff]
    %v1272 = vld [vmem:[%s2 + $0x8] sm:$0xff]
    %vm1273 = vcmp.gt.f32.partialorder %v1271, 0.5
    %vm1274 = vcmp.gt.f32.partialorder %v1272, 0.5
    %v1275 = vsel %vm1273, -inf, %v1265
    %v1276 = vsel %vm1274, -inf, %v1268
    %vm1277 = vcmask 64512
    %v1278 = vsel %vm1277, %v1275, -inf
    %1279 = vmax.xlane.f32.xlu0 %v1278
    %v1280 = vpop.xlane.xlu0 %1279
    %v1281 = vsel %vm1277, %v1276, -inf
    %1282 = vmax.xlane.f32.xlu0 %v1281
    %v1283 = vpop.xlane.xlu0 %1282
    %v1284 = vsub.f32 %v1275, %v1280
    %v1285 = vsub.f32 %v1276, %v1283
    %v1286 = vmul.f32 %v1284, 1.442695
    %v1287 = vpow.pop %v1286
    %v1288 = vmul.f32 %v1285, 1.442695
    %v1289 = vpow.pop %v1288
    %v1290 = vsel %vm1277, %v1287, 0.0
    %1291 = vadd.xlane.f32.xlu0 %v1290
    %v1292 = vpop.xlane.xlu0 %1291
    %v1293 = vsel %vm1277, %v1289, 0.0
    %1294 = vadd.xlane.f32.xlu0 %v1293
    %v1295 = vpop.xlane.xlu0 %1294
    %v1296 = vrcp.pop %v1292
    %v1297 = vrcp.pop %v1295
    %v1298 = vmul.f32 %v1287, %v1296
    %v1299 = vmul.f32 %v1289, %v1297
    %v1300 = vld [vmem:[%s8] sm:$0xf]
    %v1301 = vpack.c.bf16 %v1299, %v1298
    %v1303 = vsel %vm1277, %v1301, 0
    %vm1305 = vcmask 1043456
    %v1307 = vsel %vm1305, %v1300, 0
    %1309 = vmatprep.subr.bf16.mxu0 0
    %1310 = vmatpush1.bf16.msra.mxu0 0
    %1311 = vmatprep.subr.bf16.mxu0 0
    %1312 = vmatpush1.bf16.msra.mxu0 0
    %1313 = vmatprep.subr.bf16.mxu0 0
    %1314 = vmatpush1.bf16.msra.mxu0 0
    %1315 = vmatprep.subr.bf16.mxu0 0
    %1316 = vmatpush1.bf16.msra.mxu0 0
    %1317 = vmatprep.subr.bf16.mxu0 0
    %1318 = vmatpush1.bf16.msra.mxu0 0
    %1319 = vmatprep.subr.bf16.mxu0 0
    %1320 = vmatpush1.bf16.msra.mxu0 0
    %1321 = vmatprep.subr.bf16.mxu0 0
    %1322 = vmatpush1.bf16.msra.mxu0 0
    %1323 = vmatprep.subr.bf16.mxu0 0
    %1324 = vmatpush1.bf16.msra.mxu0 %v1307
    %1325 = vmatprep.subr.bf16.mxu0 0
    %1326 = vmatpush2.bf16.msra.mxu0 0
    %1327 = vmatprep.subr.bf16.mxu0 0
    %1328 = vmatpush2.bf16.msra.mxu0 0
    %1329 = vmatprep.subr.bf16.mxu0 0
    %1330 = vmatpush2.bf16.msra.mxu0 0
    %1331 = vmatprep.subr.bf16.mxu0 0
    %1332 = vmatpush2.bf16.msra.mxu0 0
    %1333 = vmatprep.subr.bf16.mxu0 0
    %1334 = vmatpush2.bf16.msra.mxu0 0
    %1335 = vmatprep.subr.bf16.mxu0 0
    %1336 = vmatpush2.bf16.msra.mxu0 0
    %1337 = vmatprep.subr.bf16.mxu0 0
    %1338 = vmatpush2.bf16.msra.mxu0 0
    %1339 = vmatprep.subr.bf16.mxu0 0
    %1340 = vmatpush2.bf16.msra.mxu0 0
    %1341 = vmatprep.mubr.bf16.mxu0 0
    %1342 = vmatmul.mubr.bf16.gmra.mxu0 %v1303
    %v1343 = vpop.f32.mrf.mxu0
    %v1344 = vadd.f32 0.0, %v1343
    %v1345 = vpop.f32.mrf.mxu0
    %v1346 = vpop.f32.mrf.mxu0
    %v1347 = vadd.f32 0.0, %v1346
    %v1348 = vpop.f32.mrf.mxu0
    %1349 = vdwg.mxu0
    %v1350 = vunpack.c.l.bf16 %v70
    %v1351 = vunpack.c.l.bf16 %v71
    %v1352 = vmul.f32 %v1350, %v1344
    %v1353 = vmul.f32 %v1351, %v1347
    %v1354 = vpack.c.bf16 %v1353, %v1352
    %1355 = vmatprep.subr.bf16.mxu0 0
    %1356 = vmatpush1.bf16.msra.mxu0 %v793
    %1357 = vmatprep.subr.bf16.mxu0 0
    %1358 = vmatpush1.bf16.msra.mxu0 %v792
    %1359 = vmatprep.subr.bf16.mxu0 0
    %1360 = vmatpush1.bf16.msra.mxu0 %v791
    %1361 = vmatprep.subr.bf16.mxu0 0
    %1362 = vmatpush1.bf16.msra.mxu0 %v790
    %1363 = vmatprep.subr.bf16.mxu0 0
    %1364 = vmatpush1.bf16.msra.mxu0 %v789
    %1365 = vmatprep.subr.bf16.mxu0 0
    %1366 = vmatpush1.bf16.msra.mxu0 %v788
    %1367 = vmatprep.subr.bf16.mxu0 0
    %1368 = vmatpush1.bf16.msra.mxu0 %v787
    %1369 = vmatprep.subr.bf16.mxu0 0
    %1370 = vmatpush1.bf16.msra.mxu0 %v786
    %1371 = vmatprep.subr.bf16.mxu0 0
    %1372 = vmatpush2.bf16.msra.mxu0 0
    %1373 = vmatprep.subr.bf16.mxu0 0
    %1374 = vmatpush2.bf16.msra.mxu0 0
    %1375 = vmatprep.subr.bf16.mxu0 0
    %1376 = vmatpush2.bf16.msra.mxu0 0
    %1377 = vmatprep.subr.bf16.mxu0 0
    %1378 = vmatpush2.bf16.msra.mxu0 0
    %1379 = vmatprep.subr.bf16.mxu0 0
    %1380 = vmatpush2.bf16.msra.mxu0 0
    %1381 = vmatprep.subr.bf16.mxu0 0
    %1382 = vmatpush2.bf16.msra.mxu0 0
    %1383 = vmatprep.subr.bf16.mxu0 0
    %1384 = vmatpush2.bf16.msra.mxu0 0
    %1385 = vmatprep.subr.bf16.mxu0 0
    %1386 = vmatpush2.bf16.msra.mxu0 0
    %1387 = vmatprep.mubr.bf16.mxu0 0
    %1388 = vmatmul.mubr.bf16.gmra.mxu0 %v1354
    %v1389 = vpop.f32.mrf.mxu0
    %v1390 = vadd.f32 0.0, %v1389
    %v1391 = vpop.f32.mrf.mxu0
    %v1392 = vpop.f32.mrf.mxu0
    %v1393 = vadd.f32 0.0, %v1392
    %v1394 = vpop.f32.mrf.mxu0
    %1395 = vdwg.mxu0
    %v1396 = vld [vmem:[%s3] sm:$0xf]
    %v1397 = vld [vmem:[%s3 + $0x4] sm:$0xf]
    %v1398 = vld [vmem:[%s3 + $0x8] sm:$0xf]
    %v1399 = vld [vmem:[%s3 + $0xc] sm:$0xf]
    %v1400 = vld [vmem:[%s3 + $0x10] sm:$0xf]
    %v1401 = vld [vmem:[%s3 + $0x14] sm:$0xf]
    %v1402 = vld [vmem:[%s3 + $0x18] sm:$0xf]
    %v1403 = vld [vmem:[%s3 + $0x1c] sm:$0xf]
    %v1404 = vld [vmem:[%s3 + $0x20] sm:$0xf]
    %v1405 = vld [vmem:[%s3 + $0x24] sm:$0xf]
    %v1406 = vld [vmem:[%s3 + $0x28] sm:$0xf]
    %v1407 = vld [vmem:[%s3 + $0x2c] sm:$0xf]
    %v1408 = vld [vmem:[%s16] sm:$0xf]
    %v1409 = vld [vmem:[%s16 + $0x4] sm:$0xf]
    %v1410 = vld [vmem:[%s16 + $0x8] sm:$0xf]
    %v1411 = vld [vmem:[%s16 + $0xc] sm:$0xf]
    %v1412 = vlaneseq
    %v1413 = vshrl.u32 %v1412, 7
    %v1414 = vsub.s32 0, %v1413
    %v1415 = vrot.slane %v67, %v1414
    %v1428 = vunpack.c.l.b16 %v1396
    %v1429 = vunpack.c.l.b16 %v1397
    %v1430 = vunpack.c.l.b16 %v1398
    %v1431 = vunpack.c.l.b16 %v1399
    %v1432 = vunpack.c.l.b16 %v1400
    %v1433 = vunpack.c.l.b16 %v1401
    %v1434 = vunpack.c.l.b16 %v1402
    %v1435 = vunpack.c.l.b16 %v1403
    %v1436 = vunpack.c.l.b16 %v1404
    %v1437 = vunpack.c.l.b16 %v1405
    %v1438 = vunpack.c.l.b16 %v1406
    %v1439 = vunpack.c.l.b16 %v1407
    %v1440 = vpack.c.b16 %v1429, %v1428
    %v1441 = vpack.c.b16 %v1431, %v1430
    %v1442 = vpack.c.b16 %v1433, %v1432
    %v1443 = vpack.c.b16 %v1435, %v1434
    %v1444 = vpack.c.b16 %v1437, %v1436
    %v1445 = vpack.c.b16 %v1439, %v1438
    %v1450 = vunpack.c.l.b16 %v1408
    %v1451 = vunpack.c.l.b16 %v1409
    %v1452 = vunpack.c.l.b16 %v1410
    %v1453 = vunpack.c.l.b16 %v1411
    %v1454 = vpack.c.b16 %v1451, %v1450
    %v1455 = vpack.c.b16 %v1453, %v1452
    %v1459 = vsel %vm150, %v1440, 0
    %v1462 = vsel %vm150, %v1441, 0
    %v1465 = vsel %vm150, %v1442, 0
    %v1468 = vsel %vm150, %v1443, 0
    %v1471 = vsel %vm150, %v1444, 0
    %v1474 = vsel %vm150, %v1445, 0
    %1476 = vmatprep.subr.bf16.mxu0 0
    %1477 = vmatpush1.bf16.msra.mxu0 0
    %1478 = vmatprep.subr.bf16.mxu0 0
    %1479 = vmatpush1.bf16.msra.mxu0 0
    %1480 = vmatprep.subr.bf16.mxu0 0
    %1481 = vmatpush1.bf16.msra.mxu0 0
    %1482 = vmatprep.subr.bf16.mxu0 0
    %1483 = vmatpush1.bf16.msra.mxu0 0
    %1484 = vmatprep.subr.bf16.mxu0 0
    %1485 = vmatpush1.bf16.msra.mxu0 0
    %1486 = vmatprep.subr.bf16.mxu0 0
    %1487 = vmatpush1.bf16.msra.mxu0 0
    %1488 = vmatprep.subr.bf16.mxu0 0
    %1489 = vmatpush1.bf16.msra.mxu0 %v1455
    %1490 = vmatprep.subr.bf16.mxu0 0
    %1491 = vmatpush1.bf16.msra.mxu0 %v1454
    %1492 = vmatprep.subr.bf16.mxu0 0
    %1493 = vmatpush2.bf16.msra.mxu0 0
    %1494 = vmatprep.subr.bf16.mxu0 0
    %1495 = vmatpush2.bf16.msra.mxu0 0
    %1496 = vmatprep.subr.bf16.mxu0 0
    %1497 = vmatpush2.bf16.msra.mxu0 0
    %1498 = vmatprep.subr.bf16.mxu0 0
    %1499 = vmatpush2.bf16.msra.mxu0 0
    %1500 = vmatprep.subr.bf16.mxu0 0
    %1501 = vmatpush2.bf16.msra.mxu0 0
    %1502 = vmatprep.subr.bf16.mxu0 0
    %1503 = vmatpush2.bf16.msra.mxu0 0
    %1504 = vmatprep.subr.bf16.mxu0 0
    %1505 = vmatpush2.bf16.msra.mxu0 0
    %1506 = vmatprep.subr.bf16.mxu0 0
    %1507 = vmatpush2.bf16.msra.mxu0 0
    %1508 = vmatprep.mubr.bf16.mxu0 0
    %1509 = vmatmul.mubr.bf16.gmra.mxu0 %v1459
    %v1510 = vpop.f32.mrf.mxu0
    %v1511 = vadd.f32 %v1415, %v1510
    %v1512 = vpop.f32.mrf.mxu0
    %v1513 = vpop.f32.mrf.mxu0
    %v1514 = vadd.f32 %v1415, %v1513
    %v1515 = vpop.f32.mrf.mxu0
    %1516 = vmatprep.mubr.bf16.mxu0 0
    %1517 = vmatmul.mubr.bf16.gmra.mxu0 %v1462
    %v1518 = vpop.f32.mrf.mxu0
    %v1519 = vadd.f32 %v1415, %v1518
    %v1520 = vpop.f32.mrf.mxu0
    %v1521 = vpop.f32.mrf.mxu0
    %v1522 = vadd.f32 %v1415, %v1521
    %v1523 = vpop.f32.mrf.mxu0
    %1524 = vmatprep.mubr.bf16.mxu0 0
    %1525 = vmatmul.mubr.bf16.gmra.mxu0 %v1465
    %v1526 = vpop.f32.mrf.mxu0
    %v1527 = vadd.f32 %v1415, %v1526
    %v1528 = vpop.f32.mrf.mxu0
    %v1529 = vpop.f32.mrf.mxu0
    %v1530 = vadd.f32 %v1415, %v1529
    %v1531 = vpop.f32.mrf.mxu0
    %1532 = vmatprep.mubr.bf16.mxu0 0
    %1533 = vmatmul.mubr.bf16.gmra.mxu0 %v1468
    %v1534 = vpop.f32.mrf.mxu0
    %v1535 = vadd.f32 %v1415, %v1534
    %v1536 = vpop.f32.mrf.mxu0
    %v1537 = vpop.f32.mrf.mxu0
    %v1538 = vadd.f32 %v1415, %v1537
    %v1539 = vpop.f32.mrf.mxu0
    %1540 = vmatprep.mubr.bf16.mxu0 0
    %1541 = vmatmul.mubr.bf16.gmra.mxu0 %v1471
    %v1542 = vpop.f32.mrf.mxu0
    %v1543 = vadd.f32 %v1415, %v1542
    %v1544 = vpop.f32.mrf.mxu0
    %v1545 = vpop.f32.mrf.mxu0
    %v1546 = vadd.f32 %v1415, %v1545
    %v1547 = vpop.f32.mrf.mxu0
    %1548 = vmatprep.mubr.bf16.mxu0 0
    %1549 = vmatmul.mubr.bf16.gmra.mxu0 %v1474
    %v1550 = vpop.f32.mrf.mxu0
    %v1551 = vadd.f32 %v1415, %v1550
    %v1552 = vpop.f32.mrf.mxu0
    %v1553 = vpop.f32.mrf.mxu0
    %v1554 = vadd.f32 %v1415, %v1553
    %v1555 = vpop.f32.mrf.mxu0
    %1556 = vdwg.mxu0
    %v1557 = vld [vmem:[%s4] sm:$0xf]
    %v1558 = vld [vmem:[%s4 + $0x4] sm:$0xf]
    %v1559 = vld [vmem:[%s4 + $0x8] sm:$0xf]
    %v1560 = vld [vmem:[%s4 + $0xc] sm:$0xf]
    %v1561 = vld [vmem:[%s4 + $0x10] sm:$0xf]
    %v1562 = vld [vmem:[%s4 + $0x14] sm:$0xf]
    %v1563 = vld [vmem:[%s4 + $0x18] sm:$0xf]
    %v1564 = vld [vmem:[%s4 + $0x1c] sm:$0xf]
    %v1565 = vld [vmem:[%s4 + $0x20] sm:$0xf]
    %v1566 = vld [vmem:[%s4 + $0x24] sm:$0xf]
    %v1567 = vld [vmem:[%s4 + $0x28] sm:$0xf]
    %v1568 = vld [vmem:[%s4 + $0x2c] sm:$0xf]
    %v1569 = vld [vmem:[%s17] sm:$0xf]
    %v1570 = vld [vmem:[%s17 + $0x4] sm:$0xf]
    %v1571 = vld [vmem:[%s17 + $0x8] sm:$0xf]
    %v1572 = vld [vmem:[%s17 + $0xc] sm:$0xf]
    %v1573 = vld [vmem:[%s17 + $0x10] sm:$0x1]
    %v1586 = vunpack.c.l.b16 %v1557
    %v1587 = vunpack.c.l.b16 %v1558
    %v1588 = vunpack.c.l.b16 %v1559
    %v1589 = vunpack.c.l.b16 %v1560
    %v1590 = vunpack.c.l.b16 %v1561
    %v1591 = vunpack.c.l.b16 %v1562
    %v1592 = vunpack.c.l.b16 %v1563
    %v1593 = vunpack.c.l.b16 %v1564
    %v1594 = vunpack.c.l.b16 %v1565
    %v1595 = vunpack.c.l.b16 %v1566
    %v1596 = vunpack.c.l.b16 %v1567
    %v1597 = vunpack.c.l.b16 %v1568
    %v1598 = vpack.c.b16 %v1587, %v1586
    %v1599 = vpack.c.b16 %v1589, %v1588
    %v1600 = vpack.c.b16 %v1591, %v1590
    %v1601 = vpack.c.b16 %v1593, %v1592
    %v1602 = vpack.c.b16 %v1595, %v1594
    %v1603 = vpack.c.b16 %v1597, %v1596
    %v1609 = vunpack.c.l.b16 %v1569
    %v1610 = vunpack.c.l.b16 %v1570
    %v1611 = vunpack.c.l.b16 %v1571
    %v1612 = vunpack.c.l.b16 %v1572
    %v1613 = vunpack.c.l.b16 %v1573
    %v1614 = vpack.c.b16 %v1610, %v1609
    %v1615 = vpack.c.b16 %v1612, %v1611
    %v1616 = vpack.c.b16 %v1613, %v1613
    %vm1619 = vcmask 269312
    %v1621 = vsel %vm1619, %v1598, 0
    %v1624 = vsel %vm1619, %v1599, 0
    %v1627 = vsel %vm1619, %v1600, 0
    %v1630 = vsel %vm1619, %v1601, 0
    %v1633 = vsel %vm1619, %v1602, 0
    %v1636 = vsel %vm1619, %v1603, 0
    %vm1638 = vcmask 1040384
    %v1639 = vsel 0, 4294967295, 65535
    %v1640 = vsel %vm1638, %v1639, 0
    %v1642 = vand.u32 %v1616, %v1640
    %1644 = vmatprep.subr.bf16.mxu0 0
    %1645 = vmatpush1.bf16.msra.mxu0 0
    %1646 = vmatprep.subr.bf16.mxu0 0
    %1647 = vmatpush1.bf16.msra.mxu0 0
    %1648 = vmatprep.subr.bf16.mxu0 0
    %1649 = vmatpush1.bf16.msra.mxu0 0
    %1650 = vmatprep.subr.bf16.mxu0 0
    %1651 = vmatpush1.bf16.msra.mxu0 0
    %1652 = vmatprep.subr.bf16.mxu0 0
    %1653 = vmatpush1.bf16.msra.mxu0 0
    %1654 = vmatprep.subr.bf16.mxu0 0
    %1655 = vmatpush1.bf16.msra.mxu0 %v1642
    %1656 = vmatprep.subr.bf16.mxu0 0
    %1657 = vmatpush1.bf16.msra.mxu0 %v1615
    %1658 = vmatprep.subr.bf16.mxu0 0
    %1659 = vmatpush1.bf16.msra.mxu0 %v1614
    %1660 = vmatprep.subr.bf16.mxu0 0
    %1661 = vmatpush2.bf16.msra.mxu0 0
    %1662 = vmatprep.subr.bf16.mxu0 0
    %1663 = vmatpush2.bf16.msra.mxu0 0
    %1664 = vmatprep.subr.bf16.mxu0 0
    %1665 = vmatpush2.bf16.msra.mxu0 0
    %1666 = vmatprep.subr.bf16.mxu0 0
    %1667 = vmatpush2.bf16.msra.mxu0 0
    %1668 = vmatprep.subr.bf16.mxu0 0
    %1669 = vmatpush2.bf16.msra.mxu0 0
    %1670 = vmatprep.subr.bf16.mxu0 0
    %1671 = vmatpush2.bf16.msra.mxu0 0
    %1672 = vmatprep.subr.bf16.mxu0 0
    %1673 = vmatpush2.bf16.msra.mxu0 0
    %1674 = vmatprep.subr.bf16.mxu0 0
    %1675 = vmatpush2.bf16.msra.mxu0 0
    %1676 = vmatprep.mubr.bf16.mxu0 0
    %1677 = vmatmul.mubr.bf16.gmra.mxu0 %v1621
    %v1678 = vpop.f32.mrf.mxu0
    %v1679 = vadd.f32 0.0, %v1678
    %v1680 = vpop.f32.mrf.mxu0
    %v1681 = vpop.f32.mrf.mxu0
    %v1682 = vadd.f32 0.0, %v1681
    %v1683 = vpop.f32.mrf.mxu0
    %1684 = vmatprep.mubr.bf16.mxu0 0
    %1685 = vmatmul.mubr.bf16.gmra.mxu0 %v1624
    %v1686 = vpop.f32.mrf.mxu0
    %v1687 = vadd.f32 0.0, %v1686
    %v1688 = vpop.f32.mrf.mxu0
    %v1689 = vpop.f32.mrf.mxu0
    %v1690 = vadd.f32 0.0, %v1689
    %v1691 = vpop.f32.mrf.mxu0
    %1692 = vmatprep.mubr.bf16.mxu0 0
    %1693 = vmatmul.mubr.bf16.gmra.mxu0 %v1627
    %v1694 = vpop.f32.mrf.mxu0
    %v1695 = vadd.f32 0.0, %v1694
    %v1696 = vpop.f32.mrf.mxu0
    %v1697 = vpop.f32.mrf.mxu0
    %v1698 = vadd.f32 0.0, %v1697
    %v1699 = vpop.f32.mrf.mxu0
    %1700 = vmatprep.mubr.bf16.mxu0 0
    %1701 = vmatmul.mubr.bf16.gmra.mxu0 %v1630
    %v1702 = vpop.f32.mrf.mxu0
    %v1703 = vadd.f32 0.0, %v1702
    %v1704 = vpop.f32.mrf.mxu0
    %v1705 = vpop.f32.mrf.mxu0
    %v1706 = vadd.f32 0.0, %v1705
    %v1707 = vpop.f32.mrf.mxu0
    %1708 = vmatprep.mubr.bf16.mxu0 0
    %1709 = vmatmul.mubr.bf16.gmra.mxu0 %v1633
    %v1710 = vpop.f32.mrf.mxu0
    %v1711 = vadd.f32 0.0, %v1710
    %v1712 = vpop.f32.mrf.mxu0
    %v1713 = vpop.f32.mrf.mxu0
    %v1714 = vadd.f32 0.0, %v1713
    %v1715 = vpop.f32.mrf.mxu0
    %1716 = vmatprep.mubr.bf16.mxu0 0
    %1717 = vmatmul.mubr.bf16.gmra.mxu0 %v1636
    %v1718 = vpop.f32.mrf.mxu0
    %v1719 = vadd.f32 0.0, %v1718
    %v1720 = vpop.f32.mrf.mxu0
    %v1721 = vpop.f32.mrf.mxu0
    %v1722 = vadd.f32 0.0, %v1721
    %v1723 = vpop.f32.mrf.mxu0
    %1724 = vdwg.mxu0
    %v1725 = vmax.f32 %v1679, 0.0
    %v1726 = vmax.f32 %v1682, 0.0
    %v1727 = vmax.f32 %v1687, 0.0
    %v1728 = vmax.f32 %v1690, 0.0
    %v1729 = vmax.f32 %v1695, 0.0
    %v1730 = vmax.f32 %v1698, 0.0
    %v1731 = vmax.f32 %v1703, 0.0
    %v1732 = vmax.f32 %v1706, 0.0
    %v1733 = vmax.f32 %v1711, 0.0
    %v1734 = vmax.f32 %v1714, 0.0
    %v1735 = vmax.f32 %v1719, 0.0
    %v1736 = vmax.f32 %v1722, 0.0
    %v1737 = vadd.f32 %v1511, %v1725
    %v1738 = vadd.f32 %v1514, %v1726
    %v1739 = vadd.f32 %v1519, %v1727
    %v1740 = vadd.f32 %v1522, %v1728
    %v1741 = vadd.f32 %v1527, %v1729
    %v1742 = vadd.f32 %v1530, %v1730
    %v1743 = vadd.f32 %v1535, %v1731
    %v1744 = vadd.f32 %v1538, %v1732
    %v1745 = vadd.f32 %v1543, %v1733
    %v1746 = vadd.f32 %v1546, %v1734
    %v1747 = vadd.f32 %v1551, %v1735
    %v1748 = vadd.f32 %v1554, %v1736
    %v1749 = vmax.f32 %v1737, 0.0
    %v1750 = vmax.f32 %v1738, 0.0
    %v1751 = vmax.f32 %v1739, 0.0
    %v1752 = vmax.f32 %v1740, 0.0
    %v1753 = vmax.f32 %v1741, 0.0
    %v1754 = vmax.f32 %v1742, 0.0
    %v1755 = vmax.f32 %v1743, 0.0
    %v1756 = vmax.f32 %v1744, 0.0
    %v1757 = vmax.f32 %v1745, 0.0
    %v1758 = vmax.f32 %v1746, 0.0
    %v1759 = vmax.f32 %v1747, 0.0
    %v1760 = vmax.f32 %v1748, 0.0
    %v1761 = vmul.f32 %v1749, %v1749
    %v1762 = vmul.f32 %v1750, %v1750
    %v1763 = vmul.f32 %v1751, %v1751
    %v1764 = vmul.f32 %v1752, %v1752
    %v1765 = vmul.f32 %v1753, %v1753
    %v1766 = vmul.f32 %v1754, %v1754
    %v1767 = vmul.f32 %v1755, %v1755
    %v1768 = vmul.f32 %v1756, %v1756
    %v1769 = vmul.f32 %v1757, %v1757
    %v1770 = vmul.f32 %v1758, %v1758
    %v1771 = vmul.f32 %v1759, %v1759
    %v1772 = vmul.f32 %v1760, %v1760
    %v1773 = vsel %vm150, %v1761, 0.0
    %1774 = vadd.xlane.f32.xlu0 %v1773
    %v1775 = vpop.xlane.xlu0 %1774
    %v1776 = vsel %vm150, %v1762, 0.0
    %1777 = vadd.xlane.f32.xlu0 %v1776
    %v1778 = vpop.xlane.xlu0 %1777
    %v1779 = vsel %vm150, %v1763, 0.0
    %1780 = vadd.xlane.f32.xlu0 %v1779
    %v1781 = vpop.xlane.xlu0 %1780
    %v1782 = vsel %vm150, %v1764, 0.0
    %1783 = vadd.xlane.f32.xlu0 %v1782
    %v1784 = vpop.xlane.xlu0 %1783
    %v1785 = vsel %vm150, %v1765, 0.0
    %1786 = vadd.xlane.f32.xlu0 %v1785
    %v1787 = vpop.xlane.xlu0 %1786
    %v1788 = vsel %vm150, %v1766, 0.0
    %1789 = vadd.xlane.f32.xlu0 %v1788
    %v1790 = vpop.xlane.xlu0 %1789
    %v1791 = vsel %vm150, %v1767, 0.0
    %1792 = vadd.xlane.f32.xlu0 %v1791
    %v1793 = vpop.xlane.xlu0 %1792
    %v1794 = vsel %vm150, %v1768, 0.0
    %1795 = vadd.xlane.f32.xlu0 %v1794
    %v1796 = vpop.xlane.xlu0 %1795
    %v1797 = vsel %vm150, %v1769, 0.0
    %1798 = vadd.xlane.f32.xlu0 %v1797
    %v1799 = vpop.xlane.xlu0 %1798
    %v1800 = vsel %vm150, %v1770, 0.0
    %1801 = vadd.xlane.f32.xlu0 %v1800
    %v1802 = vpop.xlane.xlu0 %1801
    %v1803 = vsel %vm150, %v1771, 0.0
    %1804 = vadd.xlane.f32.xlu0 %v1803
    %v1805 = vpop.xlane.xlu0 %1804
    %v1806 = vsel %vm150, %v1772, 0.0
    %1807 = vadd.xlane.f32.xlu0 %v1806
    %v1808 = vpop.xlane.xlu0 %1807
    %v1809 = vmax.f32 %v1775, 1e-24
    %v1810 = vmax.f32 %v1778, 1e-24
    %v1811 = vmax.f32 %v1781, 1e-24
    %v1812 = vmax.f32 %v1784, 1e-24
    %v1813 = vmax.f32 %v1787, 1e-24
    %v1814 = vmax.f32 %v1790, 1e-24
    %v1815 = vmax.f32 %v1793, 1e-24
    %v1816 = vmax.f32 %v1796, 1e-24
    %v1817 = vmax.f32 %v1799, 1e-24
    %v1818 = vmax.f32 %v1802, 1e-24
    %v1819 = vmax.f32 %v1805, 1e-24
    %v1820 = vmax.f32 %v1808, 1e-24
    %v1821 = vrsqrt.pop %v1809
    %v1822 = vrsqrt.pop %v1810
    %v1823 = vrsqrt.pop %v1811
    %v1824 = vrsqrt.pop %v1812
    %v1825 = vrsqrt.pop %v1813
    %v1826 = vrsqrt.pop %v1814
    %v1827 = vrsqrt.pop %v1815
    %v1828 = vrsqrt.pop %v1816
    %v1829 = vrsqrt.pop %v1817
    %v1830 = vrsqrt.pop %v1818
    %v1831 = vrsqrt.pop %v1819
    %v1832 = vrsqrt.pop %v1820
    %v1833 = vmul.f32 %v1749, %v1821
    %v1834 = vmul.f32 %v1750, %v1822
    %v1835 = vmul.f32 %v1751, %v1823
    %v1836 = vmul.f32 %v1752, %v1824
    %v1837 = vmul.f32 %v1753, %v1825
    %v1838 = vmul.f32 %v1754, %v1826
    %v1839 = vmul.f32 %v1755, %v1827
    %v1840 = vmul.f32 %v1756, %v1828
    %v1841 = vmul.f32 %v1757, %v1829
    %v1842 = vmul.f32 %v1758, %v1830
    %v1843 = vmul.f32 %v1759, %v1831
    %v1844 = vmul.f32 %v1760, %v1832
    %v1845 = vpack.c.bf16 %v1834, %v1833
    %v1846 = vpack.c.bf16 %v1836, %v1835
    %v1847 = vpack.c.bf16 %v1838, %v1837
    %v1848 = vpack.c.bf16 %v1840, %v1839
    %v1849 = vpack.c.bf16 %v1842, %v1841
    %v1850 = vpack.c.bf16 %v1844, %v1843
    %v1853 = vunpack.c.l.b16 %v72
    %v1854 = vunpack.c.l.b16 %v73
    %v1855 = vpack.c.b16 %v1854, %v1853
    %vm1856 = vcmask 785408
    %v1858 = vsel %vm1856, %v1855, 0
    %1860 = vmatprep.subr.bf16.mxu0 0
    %1861 = vmatpush1.bf16.msra.mxu0 0
    %1862 = vmatprep.subr.bf16.mxu0 0
    %1863 = vmatpush1.bf16.msra.mxu0 0
    %1864 = vmatprep.subr.bf16.mxu0 0
    %1865 = vmatpush1.bf16.msra.mxu0 %v1850
    %1866 = vmatprep.subr.bf16.mxu0 0
    %1867 = vmatpush1.bf16.msra.mxu0 %v1849
    %1868 = vmatprep.subr.bf16.mxu0 0
    %1869 = vmatpush1.bf16.msra.mxu0 %v1848
    %1870 = vmatprep.subr.bf16.mxu0 0
    %1871 = vmatpush1.bf16.msra.mxu0 %v1847
    %1872 = vmatprep.subr.bf16.mxu0 0
    %1873 = vmatpush1.bf16.msra.mxu0 %v1846
    %1874 = vmatprep.subr.bf16.mxu0 0
    %1875 = vmatpush1.bf16.msra.mxu0 %v1845
    %1876 = vmatprep.subr.bf16.mxu0 0
    %1877 = vmatpush2.bf16.msra.mxu0 0
    %1878 = vmatprep.subr.bf16.mxu0 0
    %1879 = vmatpush2.bf16.msra.mxu0 0
    %1880 = vmatprep.subr.bf16.mxu0 0
    %1881 = vmatpush2.bf16.msra.mxu0 0
    %1882 = vmatprep.subr.bf16.mxu0 0
    %1883 = vmatpush2.bf16.msra.mxu0 0
    %1884 = vmatprep.subr.bf16.mxu0 0
    %1885 = vmatpush2.bf16.msra.mxu0 0
    %1886 = vmatprep.subr.bf16.mxu0 0
    %1887 = vmatpush2.bf16.msra.mxu0 0
    %1888 = vmatprep.subr.bf16.mxu0 0
    %1889 = vmatpush2.bf16.msra.mxu0 0
    %1890 = vmatprep.subr.bf16.mxu0 0
    %1891 = vmatpush2.bf16.msra.mxu0 0
    %1892 = vmatprep.mubr.bf16.mxu0 0
    %1893 = vmatmul.mubr.bf16.gmra.mxu0 %v1858
    %v1894 = vpop.f32.mrf.mxu0
    %v1895 = vadd.f32 0.0, %v1894
    %v1896 = vpop.f32.mrf.mxu0
    %v1897 = vpop.f32.mrf.mxu0
    %v1898 = vadd.f32 0.0, %v1897
    %v1899 = vpop.f32.mrf.mxu0
    %1900 = vdwg.mxu0
    %v1901 = vmul.f32 %v1895, 0.16666667
    %v1902 = vmul.f32 %v1898, 0.16666667
    %1903 = vst.msk [vmem:[#allocation2] sm:$0xff] %vm150, %v1901
    %1904 = vst.msk [vmem:[#allocation2 + $0x8] sm:$0xff] %vm150, %v1902
    %1907 = vrot.lane.b32.xlu0 %v1390, 32
    %v1908 = vpop.permute.xlu0 %1907
    %1909 = vrot.lane.b32.xlu0 %v1393, 32
    %v1910 = vpop.permute.xlu0 %1909
    %vm1913 = vcmask 523520
    %1914 = vst.msk [vmem:[#allocation2] sm:$0xff] %vm1913, %v1908
    %1915 = vst.msk [vmem:[#allocation2 + $0x8] sm:$0xff] %vm1913, %v1910
    // Predicated region
    $region78: #{tpu_custom_call.1} parent=1 // pred_check
      _
    $region79: #{tpu_custom_call.1} parent=1 // pred_check_branch
      %1917 = sbr.rel (0) target = $region81
    $region80: #{tpu_custom_call.1} parent=1 // pred_region
      %s1919 = ssub.s32 256, 256
      %1920 = vsyncadd [#allocation3], %s1919
      %s1921 = sshll.u32 [#allocation2], 4
      %s1922 = int_to_ptr.vmem [resolvable:$true] %s1921
      %1927 = dma.vmem_to_hbm [thread:$0]  %s1922, 256, %s19, [#allocation3], 128, 128, 8
    $region81: #{tpu_custom_call.1} parent=1 // pred_fallthru
      _
    // Predicated region
    $region82: #{tpu_custom_call.1} parent=1 // pred_check
      _
    $region83: #{tpu_custom_call.1} parent=1 // pred_check_branch
      %1929 = sbr.rel (0) target = $region85
    $region84: #{tpu_custom_call.1} parent=1 // pred_region
      %1930 = dma.done [#allocation3], 256
    $region85: #{tpu_custom_call.1} parent=1 // pred_fallthru
      _
    %1931 = vsyncpa [#allocation3], 1

</llo_original>
